<compile_context>
chip_gen: v7x
topology: tpu7x:2x2x1
jax: 0.10.0
libtpu: 0.0.40
codegen_flags: <defaults>
</compile_context>

<pallas_src>
import functools
import math

import jax
import jax.numpy as jnp
from jax.experimental import pallas as pl
from jax.experimental.pallas import tpu as pltpu


# ----------------------------------------------------------------------------- helpers
def _elu(x):
    # NaN-safe ELU (exp only sees the clipped non-positive branch).
    return jnp.where(x > 0, x, jnp.exp(jnp.minimum(x, 0.0)) - 1.0)


def _mlp_block(x, w1_ref, b1_ref, w2_ref, b2_ref):
    # Fused 2-layer MLP (no_bn=True): ELU(ELU(x@W1+b1)@W2+b2); dropout = identity (eval).
    h = _elu(jnp.dot(x, w1_ref[...], preferred_element_type=jnp.float32) + b1_ref[...])
    return _elu(jnp.dot(h, w2_ref[...], preferred_element_type=jnp.float32) + b2_ref[...])


# ----------------------------------------------------------------------------- fused kernel
def _encoder_kernel(x_ref, rsk_ref, rrk_ref, rr_ref, rs_ref, rrt_ref,
                    w1_ref, b1_ref, s1_ref, t1_ref,
                    w2_ref, b2_ref, s2_ref, t2_ref,
                    wp_ref, bp_ref, wa_ref, ba_ref,
                    m1w1_ref, m1b1_ref, m1w2_ref, m1b2_ref,
                    m2w1_ref, m2b1_ref, m2w2_ref, m2b2_ref,
                    m3w1_ref, m3b1_ref, m3w2_ref, m3b2_ref,
                    fcw_ref, fcb_ref,
                    o_ref, *, T, D, K, E, N, H):
    """One batch element per grid step: the whole encoder forward, fused."""
    Cin = 2 * D
    L1 = T - K + 1          # conv1 output length
    Lp = L1 // 2            # after MaxPool1d(2)  (floor, like PyTorch)
    L2 = Lp - K + 1         # conv2 output length

    x = x_ref[0]                                                          # [N*T, D]

    # ---- node2edge_temporal: (rel ⊗ I_T) one-hot matmul gathers; channels = [send, recv]
    send = jnp.dot(rsk_ref[...], x, preferred_element_type=jnp.float32)   # [E*T, D]
    recv = jnp.dot(rrk_ref[...], x, preferred_element_type=jnp.float32)   # [E*T, D]
    edges = jnp.concatenate([send, recv], axis=1)                         # [E*T, Cin]
    edges = edges.reshape(E, T, Cin)                                      # leading-dim split

    # ---- conv1 (k=K): single im2col matmul over all E edges
    p1 = jnp.concatenate([edges[:, k:k + L1, :] for k in range(K)], axis=2)   # [E, L1, K*Cin]
    h = jnp.dot(p1.reshape(E * L1, K * Cin), w1_ref[...],
                preferred_element_type=jnp.float32) + b1_ref[...]
    h = jnp.maximum(h, 0.0) * s1_ref[...] + t1_ref[...]                   # ReLU + folded BN

    # ---- max-pool(kernel=2, stride=2) over time: leading-dim reshape + elementwise max
    h4 = h.reshape(E, L1, H)[:, :2 * Lp, :].reshape(E * Lp, 2, H)
    h = jnp.maximum(h4[:, 0, :], h4[:, 1, :])                             # [E*Lp, H]

    # ---- conv2 (k=K): single im2col matmul
    hp = h.reshape(E, Lp, H)
    p2 = jnp.concatenate([hp[:, k:k + L2, :] for k in range(K)], axis=2)  # [E, L2, K*H]
    g = jnp.dot(p2.reshape(E * L2, K * H), w2_ref[...],
                preferred_element_type=jnp.float32) + b2_ref[...]
    g = jnp.maximum(g, 0.0) * s2_ref[...] + t2_ref[...]                   # [E*L2, H]

    # ---- 1x1 predict / attention, softmax over time, attention-weighted mean
    pred = (jnp.dot(g, wp_ref[...], preferred_element_type=jnp.float32)
            + bp_ref[...]).reshape(E, L2, H)                              # [E, L2, H]
    logit = (jnp.dot(g, wa_ref[...], preferred_element_type=jnp.float32)
             + ba_ref[...]).reshape(E, L2, 1)                             # [E, L2, 1]
    # static unroll over the (tiny, static) L2 time positions -> only 2-D vector ops
    logits = [logit[:, l, :] for l in range(L2)]                          # each [E, 1]
    m = logits[0]
    for l in range(1, L2):
        m = jnp.maximum(m, logits[l])
    ews = [jnp.exp(lg - m) for lg in logits]                              # each [E, 1]
    denom = ews[0]
    for l in range(1, L2):
        denom = denom + ews[l]
    inv = pl.reciprocal(denom, approx=True)                               # [E, 1]  (EUP)
    acc = pred[:, 0, :] * (ews[0] * inv)
    for l in range(1, L2):
        acc = acc + pred[:, l, :] * (ews[l] * inv)
    edge_feat = acc * (1.0 / L2)                                          # [E, H]

    # ---- mlp1
    x1 = _mlp_block(edge_feat, m1w1_ref, m1b1_ref, m1w2_ref, m1b2_ref)    # [E, H]
    x_skip = x1

    # ---- edge2node -> mlp2
    node = jnp.dot(rrt_ref[...], x1, preferred_element_type=jnp.float32) * (1.0 / N)   # [N, H]
    node = _mlp_block(node, m2w1_ref, m2b1_ref, m2w2_ref, m2b2_ref)

    # ---- node2edge -> cat(skip) -> mlp3 -> fc_out (lane-dense padded store)
    send_e = jnp.dot(rs_ref[...], node, preferred_element_type=jnp.float32)
    recv_e = jnp.dot(rr_ref[...], node, preferred_element_type=jnp.float32)
    xcat = jnp.concatenate([send_e, recv_e, x_skip], axis=1)              # [E, 3H]
    x3 = _mlp_block(xcat, m3w1_ref, m3b1_ref, m3w2_ref, m3b2_ref)         # [E, H]
    o_ref[0] = (jnp.dot(x3, fcw_ref[...], preferred_element_type=jnp.float32)
                + fcb_ref[...])                                           # [E, 128]


# ----------------------------------------------------------------------------- wrapper
def cnn_encoder_forward(params, inputs, rel_rec, rel_send):
    B, N, T, D = inputs.shape
    E = rel_rec.shape[0]
    K, Cin, H = params['cnn_w1'].shape
    n_out = params['fc_w'].shape[1]
    P = 128                                           # lane-dense padded output width

    # im2col-layout conv weights; fc_out padded to a full 128-lane store.
    w1f = params['cnn_w1'].reshape(K * Cin, H)
    w2f = params['cnn_w2'].reshape(K * H, H)
    fcw = jnp.zeros((H, P), jnp.float32).at[:, :n_out].set(params['fc_w'])
    fcb = jnp.zeros((1, P), jnp.float32).at[:, :n_out].set(params['fc_b'])

    # Temporal relation-gather matrices (rel ⊗ I_T); exactly equivalent to the
    # node2edge_temporal matmul, but lets the kernel use only layout-safe reshapes.
    eye_t = jnp.eye(T, dtype=jnp.float32)
    rs_k = jnp.kron(rel_send, eye_t)                  # [E*T, N*T]
    rr_k = jnp.kron(rel_rec, eye_t)                   # [E*T, N*T]
    rr_t = jnp.transpose(rel_rec)                     # [N, E]

    x_ntd = inputs.reshape(B, N * T, D)

    args = (x_ntd, rs_k, rr_k, rel_rec, rel_send, rr_t,
            w1f, params['cnn_b1'], params['cnn_s1'], params['cnn_t1'],
            w2f, params['cnn_b2'], params['cnn_s2'], params['cnn_t2'],
            params['cnn_wp'], params['cnn_bp'], params['cnn_wa'], params['cnn_ba'],
            params['mlp1_w1'], params['mlp1_b1'], params['mlp1_w2'], params['mlp1_b2'],
            params['mlp2_w1'], params['mlp2_b1'], params['mlp2_w2'], params['mlp2_b2'],
            params['mlp3_w1'], params['mlp3_b1'], params['mlp3_w2'], params['mlp3_b2'],
            fcw, fcb)

    in_specs = [pl.BlockSpec((1, N * T, D), lambda b: (b, 0, 0))]
    for a in args[1:]:
        in_specs.append(pl.BlockSpec(a.shape, lambda b, _nd=a.ndim: (0,) * _nd))

    kernel = functools.partial(_encoder_kernel, T=T, D=D, K=K, E=E, N=N, H=H)

    out = pl.pallas_call(
        kernel,
        out_shape=jax.ShapeDtypeStruct((B, E, P), jnp.float32),
        grid=(B,),
        in_specs=in_specs,
        out_specs=pl.BlockSpec((1, E, P), lambda b: (b, 0, 0)),
        compiler_params=pltpu.CompilerParams(dimension_semantics=("parallel",)),
    )(*args)
    return out[:, :, :n_out]


# ----------------------------------------------------------------------------- params
def init_params(key, n_in, n_hid, n_out):
    ks = jax.random.split(key, 12)
    cin = 2 * n_in

    def nrm(k, shape, std):
        return std * jax.random.normal(k, shape, jnp.float32)

    def xavier(k, fan_in, fan_out):
        std = math.sqrt(2.0 / (fan_in + fan_out))
        return std * jax.random.normal(k, (fan_in, fan_out), jnp.float32)

    b_fill = lambda n: jnp.full((1, n), 0.1, jnp.float32)
    # BatchNorm1d eval with default running stats (mean=0, var=1, gamma=1, beta=0), folded:
    bn_scale = jnp.full((1, n_hid), 1.0 / math.sqrt(1.0 + 1e-5), jnp.float32)
    bn_shift = jnp.zeros((1, n_hid), jnp.float32)

    return {
        # CNN — conv weights stored [K, Cin, Cout] (torch is [Cout, Cin, K])
        'cnn_w1': nrm(ks[0], (5, cin, n_hid), math.sqrt(2.0 / (5 * n_hid))),
        'cnn_b1': b_fill(n_hid), 'cnn_s1': bn_scale, 'cnn_t1': bn_shift,
        'cnn_w2': nrm(ks[1], (5, n_hid, n_hid), math.sqrt(2.0 / (5 * n_hid))),
        'cnn_b2': b_fill(n_hid), 'cnn_s2': bn_scale, 'cnn_t2': bn_shift,
        'cnn_wp': nrm(ks[2], (n_hid, n_hid), math.sqrt(2.0 / n_hid)), 'cnn_bp': b_fill(n_hid),
        'cnn_wa': nrm(ks[3], (n_hid, 1), math.sqrt(2.0)), 'cnn_ba': jnp.full((1, 1), 0.1, jnp.float32),
        # MLPs — weights stored [in, out] so kernels compute x @ W
        'mlp1_w1': xavier(ks[4], n_hid, n_hid), 'mlp1_b1': b_fill(n_hid),
        'mlp1_w2': xavier(ks[5], n_hid, n_hid), 'mlp1_b2': b_fill(n_hid),
        'mlp2_w1': xavier(ks[6], n_hid, n_hid), 'mlp2_b1': b_fill(n_hid),
        'mlp2_w2': xavier(ks[7], n_hid, n_hid), 'mlp2_b2': b_fill(n_hid),
        'mlp3_w1': xavier(ks[8], 3 * n_hid, n_hid), 'mlp3_b1': b_fill(n_hid),
        'mlp3_w2': xavier(ks[9], n_hid, n_hid), 'mlp3_b2': b_fill(n_hid),
        'fc_w': xavier(ks[10], n_hid, n_out), 'fc_b': jnp.full((1, n_out), 0.1, jnp.float32),
    }


# ----------------------------------------------------------------------------- plain-JAX reference
def reference_forward(params, inputs, rel_rec, rel_send):
    B, N, T, D = inputs.shape
    E = rel_rec.shape[0]
    H = params['cnn_w1'].shape[2]
    x = inputs.reshape(B, N, T * D)
    recv = jnp.einsum('en,bnf->bef', rel_rec, x).reshape(B * E, T, D)
    send = jnp.einsum('en,bnf->bef', rel_send, x).reshape(B * E, T, D)
    e = jnp.concatenate([send, recv], axis=2)

    def conv_nwc(x_nwc, w, b):
        K = w.shape[0]
        L = x_nwc.shape[1] - K + 1
        acc = jnp.zeros((x_nwc.shape[0], L, w.shape[2]), jnp.float32)
        for k in range(K):
            acc = acc + jnp.einsum('btc,ch->bth', x_nwc[:, k:k + L, :], w[k])
        return acc + b

    h = jax.nn.relu(conv_nwc(e, params['cnn_w1'], params['cnn_b1']))
    h = h * params['cnn_s1'] + params['cnn_t1']
    Lp = h.shape[1] // 2
    h = jnp.max(h[:, :2 * Lp, :].reshape(h.shape[0], Lp, 2, H), axis=2)
    g = jax.nn.relu(conv_nwc(h, params['cnn_w2'], params['cnn_b2']))
    g = g * params['cnn_s2'] + params['cnn_t2']
    pred = jnp.einsum('bth,ho->bto', g, params['cnn_wp']) + params['cnn_bp']
    att = jax.nn.softmax(jnp.einsum('bth,ho->bto', g, params['cnn_wa']) + params['cnn_ba'], axis=1)
    ef = jnp.mean(pred * att, axis=1)

    def mlp_ref(x2d, name):
        h1 = _elu(x2d @ params[name + '_w1'] + params[name + '_b1'])
        return _elu(h1 @ params[name + '_w2'] + params[name + '_b2'])

    x1 = mlp_ref(ef, 'mlp1').reshape(B, E, H)
    x_skip = x1
    node = jnp.einsum('ne,beh->bnh', rel_rec.T, x1) / N
    node = mlp_ref(node.reshape(B * N, H), 'mlp2').reshape(B, N, H)
    recv_e = jnp.einsum('en,bnh->beh', rel_rec, node)
    send_e = jnp.einsum('en,bnh->beh', rel_send, node)
    xcat = jnp.concatenate([send_e, recv_e, x_skip], axis=2)
    x3 = mlp_ref(xcat.reshape(B * E, 3 * H), 'mlp3')
    out = x3 @ params['fc_w'] + params['fc_b']
    return out.reshape(B, E, params['fc_w'].shape[1])


# ----------------------------------------------------------------------------- main
if __name__ == "__main__":
    B, N, T, D = 2, 4, 16, 4          # batch, atoms, timesteps, feature dim (n_in)
    n_hid, n_out = 32, 4
    E = N * (N - 1)

    key = jax.random.PRNGKey(0)
    k_inp, k_par = jax.random.split(key)
    inputs = jax.random.normal(k_inp, (B, N, T, D), jnp.float32)

    pairs = [(i, j) for i in range(N) for j in range(N) if i != j]
    rel_rec = jax.nn.one_hot(jnp.array([i for i, j in pairs], jnp.int32), N, dtype=jnp.float32)
    rel_send = jax.nn.one_hot(jnp.array([j for i, j in pairs], jnp.int32), N, dtype=jnp.float32)

    params = init_params(k_par, n_in=D, n_hid=n_hid, n_out=n_out)

    fwd = jax.jit(cnn_encoder_forward)
    out = fwd(params, inputs, rel_rec, rel_send)
    out = jax.block_until_ready(out)

    ref = reference_forward(params, inputs, rel_rec, rel_send)
    assert out.shape == (B, E, n_out), out.shape
    assert bool(jnp.all(jnp.isfinite(out)))
    max_err = float(jnp.max(jnp.abs(out - ref)))
    assert max_err < 5e-2, f"mismatch vs reference: {max_err}"
    print("KERNEL_OK")
</pallas_src>

<mosaic_0001>
module attributes {stable_mosaic.version = 11 : i64} {
  func.func @_encoder_kernel(%arg0: i32, %arg1: memref<1x64x4xf32, #tpu.memory_space<vmem>>, %arg2: memref<192x64xf32, #tpu.memory_space<vmem>>, %arg3: memref<192x64xf32, #tpu.memory_space<vmem>>, %arg4: memref<12x4xf32, #tpu.memory_space<vmem>>, %arg5: memref<12x4xf32, #tpu.memory_space<vmem>>, %arg6: memref<4x12xf32, #tpu.memory_space<vmem>>, %arg7: memref<40x32xf32, #tpu.memory_space<vmem>>, %arg8: memref<1x32xf32, #tpu.memory_space<vmem>>, %arg9: memref<1x32xf32, #tpu.memory_space<vmem>>, %arg10: memref<1x32xf32, #tpu.memory_space<vmem>>, %arg11: memref<160x32xf32, #tpu.memory_space<vmem>>, %arg12: memref<1x32xf32, #tpu.memory_space<vmem>>, %arg13: memref<1x32xf32, #tpu.memory_space<vmem>>, %arg14: memref<1x32xf32, #tpu.memory_space<vmem>>, %arg15: memref<32x32xf32, #tpu.memory_space<vmem>>, %arg16: memref<1x32xf32, #tpu.memory_space<vmem>>, %arg17: memref<32x1xf32, #tpu.memory_space<vmem>>, %arg18: memref<1x1xf32, #tpu.memory_space<vmem>>, %arg19: memref<32x32xf32, #tpu.memory_space<vmem>>, %arg20: memref<1x32xf32, #tpu.memory_space<vmem>>, %arg21: memref<32x32xf32, #tpu.memory_space<vmem>>, %arg22: memref<1x32xf32, #tpu.memory_space<vmem>>, %arg23: memref<32x32xf32, #tpu.memory_space<vmem>>, %arg24: memref<1x32xf32, #tpu.memory_space<vmem>>, %arg25: memref<32x32xf32, #tpu.memory_space<vmem>>, %arg26: memref<1x32xf32, #tpu.memory_space<vmem>>, %arg27: memref<96x32xf32, #tpu.memory_space<vmem>>, %arg28: memref<1x32xf32, #tpu.memory_space<vmem>>, %arg29: memref<32x32xf32, #tpu.memory_space<vmem>>, %arg30: memref<1x32xf32, #tpu.memory_space<vmem>>, %arg31: memref<32x128xf32, #tpu.memory_space<vmem>>, %arg32: memref<1x128xf32, #tpu.memory_space<vmem>>, %arg33: memref<1x12x128xf32, #tpu.memory_space<vmem>>) attributes {dimension_semantics = [#tpu.dimension_semantics<parallel>], iteration_bounds = array<i64: 2>, scalar_prefetch = 0 : i64, scratch_operands = 0 : i64, tpu.core_type = #tpu.core_type<tc>, window_params = [{transform_indices = @transform_0, window_bounds = array<i64: 1, 64, 4>}, {pipeline_mode = #tpu.pipeline_mode<synchronous>, transform_indices = @transform_1, window_bounds = array<i64: 192, 64>}, {pipeline_mode = #tpu.pipeline_mode<synchronous>, transform_indices = @transform_2, window_bounds = array<i64: 192, 64>}, {pipeline_mode = #tpu.pipeline_mode<synchronous>, transform_indices = @transform_3, window_bounds = array<i64: 12, 4>}, {pipeline_mode = #tpu.pipeline_mode<synchronous>, transform_indices = @transform_4, window_bounds = array<i64: 12, 4>}, {pipeline_mode = #tpu.pipeline_mode<synchronous>, transform_indices = @transform_5, window_bounds = array<i64: 4, 12>}, {pipeline_mode = #tpu.pipeline_mode<synchronous>, transform_indices = @transform_6, window_bounds = array<i64: 40, 32>}, {pipeline_mode = #tpu.pipeline_mode<synchronous>, transform_indices = @transform_7, window_bounds = array<i64: 1, 32>}, {pipeline_mode = #tpu.pipeline_mode<synchronous>, transform_indices = @transform_8, window_bounds = array<i64: 1, 32>}, {pipeline_mode = #tpu.pipeline_mode<synchronous>, transform_indices = @transform_9, window_bounds = array<i64: 1, 32>}, {pipeline_mode = #tpu.pipeline_mode<synchronous>, transform_indices = @transform_10, window_bounds = array<i64: 160, 32>}, {pipeline_mode = #tpu.pipeline_mode<synchronous>, transform_indices = @transform_11, window_bounds = array<i64: 1, 32>}, {pipeline_mode = #tpu.pipeline_mode<synchronous>, transform_indices = @transform_12, window_bounds = array<i64: 1, 32>}, {pipeline_mode = #tpu.pipeline_mode<synchronous>, transform_indices = @transform_13, window_bounds = array<i64: 1, 32>}, {pipeline_mode = #tpu.pipeline_mode<synchronous>, transform_indices = @transform_14, window_bounds = array<i64: 32, 32>}, {pipeline_mode = #tpu.pipeline_mode<synchronous>, transform_indices = @transform_15, window_bounds = array<i64: 1, 32>}, {pipeline_mode = #tpu.pipeline_mode<synchronous>, transform_indices = @transform_16, window_bounds = array<i64: 32, 1>}, {pipeline_mode = #tpu.pipeline_mode<synchronous>, transform_indices = @transform_17, window_bounds = array<i64: 1, 1>}, {pipeline_mode = #tpu.pipeline_mode<synchronous>, transform_indices = @transform_18, window_bounds = array<i64: 32, 32>}, {pipeline_mode = #tpu.pipeline_mode<synchronous>, transform_indices = @transform_19, window_bounds = array<i64: 1, 32>}, {pipeline_mode = #tpu.pipeline_mode<synchronous>, transform_indices = @transform_20, window_bounds = array<i64: 32, 32>}, {pipeline_mode = #tpu.pipeline_mode<synchronous>, transform_indices = @transform_21, window_bounds = array<i64: 1, 32>}, {pipeline_mode = #tpu.pipeline_mode<synchronous>, transform_indices = @transform_22, window_bounds = array<i64: 32, 32>}, {pipeline_mode = #tpu.pipeline_mode<synchronous>, transform_indices = @transform_23, window_bounds = array<i64: 1, 32>}, {pipeline_mode = #tpu.pipeline_mode<synchronous>, transform_indices = @transform_24, window_bounds = array<i64: 32, 32>}, {pipeline_mode = #tpu.pipeline_mode<synchronous>, transform_indices = @transform_25, window_bounds = array<i64: 1, 32>}, {pipeline_mode = #tpu.pipeline_mode<synchronous>, transform_indices = @transform_26, window_bounds = array<i64: 96, 32>}, {pipeline_mode = #tpu.pipeline_mode<synchronous>, transform_indices = @transform_27, window_bounds = array<i64: 1, 32>}, {pipeline_mode = #tpu.pipeline_mode<synchronous>, transform_indices = @transform_28, window_bounds = array<i64: 32, 32>}, {pipeline_mode = #tpu.pipeline_mode<synchronous>, transform_indices = @transform_29, window_bounds = array<i64: 1, 32>}, {pipeline_mode = #tpu.pipeline_mode<synchronous>, transform_indices = @transform_30, window_bounds = array<i64: 32, 128>}, {pipeline_mode = #tpu.pipeline_mode<synchronous>, transform_indices = @transform_31, window_bounds = array<i64: 1, 128>}, {transform_indices = @transform_32, window_bounds = array<i64: 1, 12, 128>}]} {
    %c0 = arith.constant 0 : index
    %c0_0 = arith.constant 0 : index
    %c0_1 = arith.constant 0 : index
    %0 = vector.load %arg1[%c0, %c0_0, %c0_1] : memref<1x64x4xf32, #tpu.memory_space<vmem>>, vector<1x64x4xf32>
    %1 = vector.shape_cast %0 : vector<1x64x4xf32> to vector<64x4xf32>
    %c0_2 = arith.constant 0 : index
    %c0_3 = arith.constant 0 : index
    %2 = vector.load %arg2[%c0_2, %c0_3] : memref<192x64xf32, #tpu.memory_space<vmem>>, vector<192x64xf32>
    %cst = arith.constant dense<0.000000e+00> : vector<192x4xf32>
    %3 = tpu.matmul %2, %1, %cst {dimension_numbers = #tpu.dot_dimension_numbers<[1], [0], [0], [1], [0, 0, 1, 1], [], []>} : vector<192x64xf32>, vector<64x4xf32>, vector<192x4xf32> -> vector<192x4xf32>
    %c0_4 = arith.constant 0 : index
    %c0_5 = arith.constant 0 : index
    %4 = vector.load %arg3[%c0_4, %c0_5] : memref<192x64xf32, #tpu.memory_space<vmem>>, vector<192x64xf32>
    %cst_6 = arith.constant dense<0.000000e+00> : vector<192x4xf32>
    %5 = tpu.matmul %4, %1, %cst_6 {dimension_numbers = #tpu.dot_dimension_numbers<[1], [0], [0], [1], [0, 0, 1, 1], [], []>} : vector<192x64xf32>, vector<64x4xf32>, vector<192x4xf32> -> vector<192x4xf32>
    %6 = tpu.concatenate %3, %5 in 1 : vector<192x4xf32>, vector<192x4xf32> -> vector<192x8xf32>
    %7 = vector.shape_cast %6 : vector<192x8xf32> to vector<12x16x8xf32>
    %8 = vector.extract_strided_slice %7 {offsets = [0, 0, 0], sizes = [12, 12, 8], strides = [1, 1, 1]} : vector<12x16x8xf32> to vector<12x12x8xf32>
    %9 = vector.extract_strided_slice %7 {offsets = [0, 1, 0], sizes = [12, 12, 8], strides = [1, 1, 1]} : vector<12x16x8xf32> to vector<12x12x8xf32>
    %10 = vector.extract_strided_slice %7 {offsets = [0, 2, 0], sizes = [12, 12, 8], strides = [1, 1, 1]} : vector<12x16x8xf32> to vector<12x12x8xf32>
    %11 = vector.extract_strided_slice %7 {offsets = [0, 3, 0], sizes = [12, 12, 8], strides = [1, 1, 1]} : vector<12x16x8xf32> to vector<12x12x8xf32>
    %12 = vector.extract_strided_slice %7 {offsets = [0, 4, 0], sizes = [12, 12, 8], strides = [1, 1, 1]} : vector<12x16x8xf32> to vector<12x12x8xf32>
    %13 = tpu.concatenate %8, %9, %10, %11, %12 in 2 : vector<12x12x8xf32>, vector<12x12x8xf32>, vector<12x12x8xf32>, vector<12x12x8xf32>, vector<12x12x8xf32> -> vector<12x12x40xf32>
    %14 = vector.shape_cast %13 : vector<12x12x40xf32> to vector<144x40xf32>
    %c0_7 = arith.constant 0 : index
    %c0_8 = arith.constant 0 : index
    %15 = vector.load %arg7[%c0_7, %c0_8] : memref<40x32xf32, #tpu.memory_space<vmem>>, vector<40x32xf32>
    %cst_9 = arith.constant dense<0.000000e+00> : vector<144x32xf32>
    %16 = tpu.matmul %14, %15, %cst_9 {dimension_numbers = #tpu.dot_dimension_numbers<[1], [0], [0], [1], [0, 0, 1, 1], [], []>} : vector<144x40xf32>, vector<40x32xf32>, vector<144x32xf32> -> vector<144x32xf32>
    %c0_10 = arith.constant 0 : index
    %c0_11 = arith.constant 0 : index
    %17 = vector.load %arg8[%c0_10, %c0_11] : memref<1x32xf32, #tpu.memory_space<vmem>>, vector<1x32xf32>
    %18 = vector.broadcast %17 : vector<1x32xf32> to vector<144x32xf32>
    %19 = arith.addf %16, %18 : vector<144x32xf32>
    %cst_12 = arith.constant 0.000000e+00 : f32
    %20 = vector.broadcast %cst_12 : f32 to vector<144x32xf32>
    %21 = arith.maximumf %19, %20 : vector<144x32xf32>
    %c0_13 = arith.constant 0 : index
    %c0_14 = arith.constant 0 : index
    %22 = vector.load %arg9[%c0_13, %c0_14] : memref<1x32xf32, #tpu.memory_space<vmem>>, vector<1x32xf32>
    %23 = vector.broadcast %22 : vector<1x32xf32> to vector<144x32xf32>
    %24 = arith.mulf %21, %23 : vector<144x32xf32>
    %c0_15 = arith.constant 0 : index
    %c0_16 = arith.constant 0 : index
    %25 = vector.load %arg10[%c0_15, %c0_16] : memref<1x32xf32, #tpu.memory_space<vmem>>, vector<1x32xf32>
    %26 = vector.broadcast %25 : vector<1x32xf32> to vector<144x32xf32>
    %27 = arith.addf %24, %26 : vector<144x32xf32>
    %28 = vector.shape_cast %27 : vector<144x32xf32> to vector<12x12x32xf32>
    %29 = vector.shape_cast %28 : vector<12x12x32xf32> to vector<72x2x32xf32>
    %30 = vector.extract_strided_slice %29 {offsets = [0, 0, 0], sizes = [72, 1, 32], strides = [1, 1, 1]} : vector<72x2x32xf32> to vector<72x1x32xf32>
    %31 = vector.shape_cast %30 : vector<72x1x32xf32> to vector<72x32xf32>
    %32 = vector.extract_strided_slice %29 {offsets = [0, 1, 0], sizes = [72, 1, 32], strides = [1, 1, 1]} : vector<72x2x32xf32> to vector<72x1x32xf32>
    %33 = vector.shape_cast %32 : vector<72x1x32xf32> to vector<72x32xf32>
    %34 = arith.maximumf %31, %33 : vector<72x32xf32>
    %35 = vector.shape_cast %34 : vector<72x32xf32> to vector<12x6x32xf32>
    %36 = vector.extract_strided_slice %35 {offsets = [0, 0, 0], sizes = [12, 2, 32], strides = [1, 1, 1]} : vector<12x6x32xf32> to vector<12x2x32xf32>
    %37 = vector.extract_strided_slice %35 {offsets = [0, 1, 0], sizes = [12, 2, 32], strides = [1, 1, 1]} : vector<12x6x32xf32> to vector<12x2x32xf32>
    %38 = vector.extract_strided_slice %35 {offsets = [0, 2, 0], sizes = [12, 2, 32], strides = [1, 1, 1]} : vector<12x6x32xf32> to vector<12x2x32xf32>
    %39 = vector.extract_strided_slice %35 {offsets = [0, 3, 0], sizes = [12, 2, 32], strides = [1, 1, 1]} : vector<12x6x32xf32> to vector<12x2x32xf32>
    %40 = vector.extract_strided_slice %35 {offsets = [0, 4, 0], sizes = [12, 2, 32], strides = [1, 1, 1]} : vector<12x6x32xf32> to vector<12x2x32xf32>
    %41 = tpu.concatenate %36, %37, %38, %39, %40 in 2 : vector<12x2x32xf32>, vector<12x2x32xf32>, vector<12x2x32xf32>, vector<12x2x32xf32>, vector<12x2x32xf32> -> vector<12x2x160xf32>
    %42 = vector.shape_cast %41 : vector<12x2x160xf32> to vector<24x160xf32>
    %c0_17 = arith.constant 0 : index
    %c0_18 = arith.constant 0 : index
    %43 = vector.load %arg11[%c0_17, %c0_18] : memref<160x32xf32, #tpu.memory_space<vmem>>, vector<160x32xf32>
    %cst_19 = arith.constant dense<0.000000e+00> : vector<24x32xf32>
    %44 = tpu.matmul %42, %43, %cst_19 {dimension_numbers = #tpu.dot_dimension_numbers<[1], [0], [0], [1], [0, 0, 1, 1], [], []>} : vector<24x160xf32>, vector<160x32xf32>, vector<24x32xf32> -> vector<24x32xf32>
    %c0_20 = arith.constant 0 : index
    %c0_21 = arith.constant 0 : index
    %45 = vector.load %arg12[%c0_20, %c0_21] : memref<1x32xf32, #tpu.memory_space<vmem>>, vector<1x32xf32>
    %46 = vector.broadcast %45 : vector<1x32xf32> to vector<24x32xf32>
    %47 = arith.addf %44, %46 : vector<24x32xf32>
    %cst_22 = arith.constant 0.000000e+00 : f32
    %48 = vector.broadcast %cst_22 : f32 to vector<24x32xf32>
    %49 = arith.maximumf %47, %48 : vector<24x32xf32>
    %c0_23 = arith.constant 0 : index
    %c0_24 = arith.constant 0 : index
    %50 = vector.load %arg13[%c0_23, %c0_24] : memref<1x32xf32, #tpu.memory_space<vmem>>, vector<1x32xf32>
    %51 = vector.broadcast %50 : vector<1x32xf32> to vector<24x32xf32>
    %52 = arith.mulf %49, %51 : vector<24x32xf32>
    %c0_25 = arith.constant 0 : index
    %c0_26 = arith.constant 0 : index
    %53 = vector.load %arg14[%c0_25, %c0_26] : memref<1x32xf32, #tpu.memory_space<vmem>>, vector<1x32xf32>
    %54 = vector.broadcast %53 : vector<1x32xf32> to vector<24x32xf32>
    %55 = arith.addf %52, %54 : vector<24x32xf32>
    %c0_27 = arith.constant 0 : index
    %c0_28 = arith.constant 0 : index
    %56 = vector.load %arg15[%c0_27, %c0_28] : memref<32x32xf32, #tpu.memory_space<vmem>>, vector<32x32xf32>
    %cst_29 = arith.constant dense<0.000000e+00> : vector<24x32xf32>
    %57 = tpu.matmul %55, %56, %cst_29 {dimension_numbers = #tpu.dot_dimension_numbers<[1], [0], [0], [1], [0, 0, 1, 1], [], []>} : vector<24x32xf32>, vector<32x32xf32>, vector<24x32xf32> -> vector<24x32xf32>
    %c0_30 = arith.constant 0 : index
    %c0_31 = arith.constant 0 : index
    %58 = vector.load %arg16[%c0_30, %c0_31] : memref<1x32xf32, #tpu.memory_space<vmem>>, vector<1x32xf32>
    %59 = vector.broadcast %58 : vector<1x32xf32> to vector<24x32xf32>
    %60 = arith.addf %57, %59 : vector<24x32xf32>
    %61 = vector.shape_cast %60 : vector<24x32xf32> to vector<12x2x32xf32>
    %c0_32 = arith.constant 0 : index
    %c0_33 = arith.constant 0 : index
    %62 = vector.load %arg17[%c0_32, %c0_33] : memref<32x1xf32, #tpu.memory_space<vmem>>, vector<32x1xf32>
    %cst_34 = arith.constant dense<0.000000e+00> : vector<24x1xf32>
    %63 = tpu.matmul %55, %62, %cst_34 {dimension_numbers = #tpu.dot_dimension_numbers<[1], [0], [0], [1], [0, 0, 1, 1], [], []>} : vector<24x32xf32>, vector<32x1xf32>, vector<24x1xf32> -> vector<24x1xf32>
    %c0_35 = arith.constant 0 : index
    %c0_36 = arith.constant 0 : index
    %64 = vector.load %arg18[%c0_35, %c0_36] : memref<1x1xf32, #tpu.memory_space<vmem>>, vector<1x1xf32>
    %65 = vector.broadcast %64 : vector<1x1xf32> to vector<24x1xf32>
    %66 = arith.addf %63, %65 : vector<24x1xf32>
    %67 = vector.shape_cast %66 : vector<24x1xf32> to vector<12x2x1xf32>
    %68 = vector.extract_strided_slice %67 {offsets = [0, 0, 0], sizes = [12, 1, 1], strides = [1, 1, 1]} : vector<12x2x1xf32> to vector<12x1x1xf32>
    %69 = vector.shape_cast %68 : vector<12x1x1xf32> to vector<12x1xf32>
    %70 = vector.extract_strided_slice %67 {offsets = [0, 1, 0], sizes = [12, 1, 1], strides = [1, 1, 1]} : vector<12x2x1xf32> to vector<12x1x1xf32>
    %71 = vector.shape_cast %70 : vector<12x1x1xf32> to vector<12x1xf32>
    %72 = arith.maximumf %69, %71 : vector<12x1xf32>
    %73 = arith.subf %69, %72 : vector<12x1xf32>
    %74 = math.exp %73 : vector<12x1xf32>
    %75 = arith.subf %71, %72 : vector<12x1xf32>
    %76 = math.exp %75 : vector<12x1xf32>
    %77 = arith.addf %74, %76 : vector<12x1xf32>
    %78 = tpu.reciprocal %77 {approx = true} : vector<12x1xf32> -> vector<12x1xf32>
    %79 = vector.extract_strided_slice %61 {offsets = [0, 0, 0], sizes = [12, 1, 32], strides = [1, 1, 1]} : vector<12x2x32xf32> to vector<12x1x32xf32>
    %80 = vector.shape_cast %79 : vector<12x1x32xf32> to vector<12x32xf32>
    %81 = arith.mulf %74, %78 : vector<12x1xf32>
    %82 = vector.broadcast %81 : vector<12x1xf32> to vector<12x32xf32>
    %83 = arith.mulf %80, %82 : vector<12x32xf32>
    %84 = vector.extract_strided_slice %61 {offsets = [0, 1, 0], sizes = [12, 1, 32], strides = [1, 1, 1]} : vector<12x2x32xf32> to vector<12x1x32xf32>
    %85 = vector.shape_cast %84 : vector<12x1x32xf32> to vector<12x32xf32>
    %86 = arith.mulf %76, %78 : vector<12x1xf32>
    %87 = vector.broadcast %86 : vector<12x1xf32> to vector<12x32xf32>
    %88 = arith.mulf %85, %87 : vector<12x32xf32>
    %89 = arith.addf %83, %88 : vector<12x32xf32>
    %cst_37 = arith.constant 5.000000e-01 : f32
    %90 = vector.broadcast %cst_37 : f32 to vector<12x32xf32>
    %91 = arith.mulf %89, %90 : vector<12x32xf32>
    %c0_38 = arith.constant 0 : index
    %c0_39 = arith.constant 0 : index
    %92 = vector.load %arg19[%c0_38, %c0_39] : memref<32x32xf32, #tpu.memory_space<vmem>>, vector<32x32xf32>
    %cst_40 = arith.constant dense<0.000000e+00> : vector<12x32xf32>
    %93 = tpu.matmul %91, %92, %cst_40 {dimension_numbers = #tpu.dot_dimension_numbers<[1], [0], [0], [1], [0, 0, 1, 1], [], []>} : vector<12x32xf32>, vector<32x32xf32>, vector<12x32xf32> -> vector<12x32xf32>
    %c0_41 = arith.constant 0 : index
    %c0_42 = arith.constant 0 : index
    %94 = vector.load %arg20[%c0_41, %c0_42] : memref<1x32xf32, #tpu.memory_space<vmem>>, vector<1x32xf32>
    %95 = vector.broadcast %94 : vector<1x32xf32> to vector<12x32xf32>
    %96 = arith.addf %93, %95 : vector<12x32xf32>
    %cst_43 = arith.constant 0.000000e+00 : f32
    %97 = vector.broadcast %cst_43 : f32 to vector<12x32xf32>
    %98 = arith.cmpf ogt, %96, %97 : vector<12x32xf32>
    %cst_44 = arith.constant 0.000000e+00 : f32
    %99 = vector.broadcast %cst_44 : f32 to vector<12x32xf32>
    %100 = arith.minimumf %96, %99 : vector<12x32xf32>
    %101 = math.exp %100 : vector<12x32xf32>
    %cst_45 = arith.constant 1.000000e+00 : f32
    %102 = vector.broadcast %cst_45 : f32 to vector<12x32xf32>
    %103 = arith.subf %101, %102 : vector<12x32xf32>
    %104 = arith.select %98, %96, %103 : vector<12x32xi1>, vector<12x32xf32>
    %c0_46 = arith.constant 0 : index
    %c0_47 = arith.constant 0 : index
    %105 = vector.load %arg21[%c0_46, %c0_47] : memref<32x32xf32, #tpu.memory_space<vmem>>, vector<32x32xf32>
    %cst_48 = arith.constant dense<0.000000e+00> : vector<12x32xf32>
    %106 = tpu.matmul %104, %105, %cst_48 {dimension_numbers = #tpu.dot_dimension_numbers<[1], [0], [0], [1], [0, 0, 1, 1], [], []>} : vector<12x32xf32>, vector<32x32xf32>, vector<12x32xf32> -> vector<12x32xf32>
    %c0_49 = arith.constant 0 : index
    %c0_50 = arith.constant 0 : index
    %107 = vector.load %arg22[%c0_49, %c0_50] : memref<1x32xf32, #tpu.memory_space<vmem>>, vector<1x32xf32>
    %108 = vector.broadcast %107 : vector<1x32xf32> to vector<12x32xf32>
    %109 = arith.addf %106, %108 : vector<12x32xf32>
    %cst_51 = arith.constant 0.000000e+00 : f32
    %110 = vector.broadcast %cst_51 : f32 to vector<12x32xf32>
    %111 = arith.cmpf ogt, %109, %110 : vector<12x32xf32>
    %cst_52 = arith.constant 0.000000e+00 : f32
    %112 = vector.broadcast %cst_52 : f32 to vector<12x32xf32>
    %113 = arith.minimumf %109, %112 : vector<12x32xf32>
    %114 = math.exp %113 : vector<12x32xf32>
    %cst_53 = arith.constant 1.000000e+00 : f32
    %115 = vector.broadcast %cst_53 : f32 to vector<12x32xf32>
    %116 = arith.subf %114, %115 : vector<12x32xf32>
    %117 = arith.select %111, %109, %116 : vector<12x32xi1>, vector<12x32xf32>
    %c0_54 = arith.constant 0 : index
    %c0_55 = arith.constant 0 : index
    %118 = vector.load %arg6[%c0_54, %c0_55] : memref<4x12xf32, #tpu.memory_space<vmem>>, vector<4x12xf32>
    %cst_56 = arith.constant dense<0.000000e+00> : vector<4x32xf32>
    %119 = tpu.matmul %118, %117, %cst_56 {dimension_numbers = #tpu.dot_dimension_numbers<[1], [0], [0], [1], [0, 0, 1, 1], [], []>} : vector<4x12xf32>, vector<12x32xf32>, vector<4x32xf32> -> vector<4x32xf32>
    %cst_57 = arith.constant 2.500000e-01 : f32
    %120 = vector.broadcast %cst_57 : f32 to vector<4x32xf32>
    %121 = arith.mulf %119, %120 : vector<4x32xf32>
    %c0_58 = arith.constant 0 : index
    %c0_59 = arith.constant 0 : index
    %122 = vector.load %arg23[%c0_58, %c0_59] : memref<32x32xf32, #tpu.memory_space<vmem>>, vector<32x32xf32>
    %cst_60 = arith.constant dense<0.000000e+00> : vector<4x32xf32>
    %123 = tpu.matmul %121, %122, %cst_60 {dimension_numbers = #tpu.dot_dimension_numbers<[1], [0], [0], [1], [0, 0, 1, 1], [], []>} : vector<4x32xf32>, vector<32x32xf32>, vector<4x32xf32> -> vector<4x32xf32>
    %c0_61 = arith.constant 0 : index
    %c0_62 = arith.constant 0 : index
    %124 = vector.load %arg24[%c0_61, %c0_62] : memref<1x32xf32, #tpu.memory_space<vmem>>, vector<1x32xf32>
    %125 = vector.broadcast %124 : vector<1x32xf32> to vector<4x32xf32>
    %126 = arith.addf %123, %125 : vector<4x32xf32>
    %cst_63 = arith.constant 0.000000e+00 : f32
    %127 = vector.broadcast %cst_63 : f32 to vector<4x32xf32>
    %128 = arith.cmpf ogt, %126, %127 : vector<4x32xf32>
    %cst_64 = arith.constant 0.000000e+00 : f32
    %129 = vector.broadcast %cst_64 : f32 to vector<4x32xf32>
    %130 = arith.minimumf %126, %129 : vector<4x32xf32>
    %131 = math.exp %130 : vector<4x32xf32>
    %cst_65 = arith.constant 1.000000e+00 : f32
    %132 = vector.broadcast %cst_65 : f32 to vector<4x32xf32>
    %133 = arith.subf %131, %132 : vector<4x32xf32>
    %134 = arith.select %128, %126, %133 : vector<4x32xi1>, vector<4x32xf32>
    %c0_66 = arith.constant 0 : index
    %c0_67 = arith.constant 0 : index
    %135 = vector.load %arg25[%c0_66, %c0_67] : memref<32x32xf32, #tpu.memory_space<vmem>>, vector<32x32xf32>
    %cst_68 = arith.constant dense<0.000000e+00> : vector<4x32xf32>
    %136 = tpu.matmul %134, %135, %cst_68 {dimension_numbers = #tpu.dot_dimension_numbers<[1], [0], [0], [1], [0, 0, 1, 1], [], []>} : vector<4x32xf32>, vector<32x32xf32>, vector<4x32xf32> -> vector<4x32xf32>
    %c0_69 = arith.constant 0 : index
    %c0_70 = arith.constant 0 : index
    %137 = vector.load %arg26[%c0_69, %c0_70] : memref<1x32xf32, #tpu.memory_space<vmem>>, vector<1x32xf32>
    %138 = vector.broadcast %137 : vector<1x32xf32> to vector<4x32xf32>
    %139 = arith.addf %136, %138 : vector<4x32xf32>
    %cst_71 = arith.constant 0.000000e+00 : f32
    %140 = vector.broadcast %cst_71 : f32 to vector<4x32xf32>
    %141 = arith.cmpf ogt, %139, %140 : vector<4x32xf32>
    %cst_72 = arith.constant 0.000000e+00 : f32
    %142 = vector.broadcast %cst_72 : f32 to vector<4x32xf32>
    %143 = arith.minimumf %139, %142 : vector<4x32xf32>
    %144 = math.exp %143 : vector<4x32xf32>
    %cst_73 = arith.constant 1.000000e+00 : f32
    %145 = vector.broadcast %cst_73 : f32 to vector<4x32xf32>
    %146 = arith.subf %144, %145 : vector<4x32xf32>
    %147 = arith.select %141, %139, %146 : vector<4x32xi1>, vector<4x32xf32>
    %c0_74 = arith.constant 0 : index
    %c0_75 = arith.constant 0 : index
    %148 = vector.load %arg5[%c0_74, %c0_75] : memref<12x4xf32, #tpu.memory_space<vmem>>, vector<12x4xf32>
    %cst_76 = arith.constant dense<0.000000e+00> : vector<12x32xf32>
    %149 = tpu.matmul %148, %147, %cst_76 {dimension_numbers = #tpu.dot_dimension_numbers<[1], [0], [0], [1], [0, 0, 1, 1], [], []>} : vector<12x4xf32>, vector<4x32xf32>, vector<12x32xf32> -> vector<12x32xf32>
    %c0_77 = arith.constant 0 : index
    %c0_78 = arith.constant 0 : index
    %150 = vector.load %arg4[%c0_77, %c0_78] : memref<12x4xf32, #tpu.memory_space<vmem>>, vector<12x4xf32>
    %cst_79 = arith.constant dense<0.000000e+00> : vector<12x32xf32>
    %151 = tpu.matmul %150, %147, %cst_79 {dimension_numbers = #tpu.dot_dimension_numbers<[1], [0], [0], [1], [0, 0, 1, 1], [], []>} : vector<12x4xf32>, vector<4x32xf32>, vector<12x32xf32> -> vector<12x32xf32>
    %152 = tpu.concatenate %149, %151, %117 in 1 : vector<12x32xf32>, vector<12x32xf32>, vector<12x32xf32> -> vector<12x96xf32>
    %c0_80 = arith.constant 0 : index
    %c0_81 = arith.constant 0 : index
    %153 = vector.load %arg27[%c0_80, %c0_81] : memref<96x32xf32, #tpu.memory_space<vmem>>, vector<96x32xf32>
    %cst_82 = arith.constant dense<0.000000e+00> : vector<12x32xf32>
    %154 = tpu.matmul %152, %153, %cst_82 {dimension_numbers = #tpu.dot_dimension_numbers<[1], [0], [0], [1], [0, 0, 1, 1], [], []>} : vector<12x96xf32>, vector<96x32xf32>, vector<12x32xf32> -> vector<12x32xf32>
    %c0_83 = arith.constant 0 : index
    %c0_84 = arith.constant 0 : index
    %155 = vector.load %arg28[%c0_83, %c0_84] : memref<1x32xf32, #tpu.memory_space<vmem>>, vector<1x32xf32>
    %156 = vector.broadcast %155 : vector<1x32xf32> to vector<12x32xf32>
    %157 = arith.addf %154, %156 : vector<12x32xf32>
    %cst_85 = arith.constant 0.000000e+00 : f32
    %158 = vector.broadcast %cst_85 : f32 to vector<12x32xf32>
    %159 = arith.cmpf ogt, %157, %158 : vector<12x32xf32>
    %cst_86 = arith.constant 0.000000e+00 : f32
    %160 = vector.broadcast %cst_86 : f32 to vector<12x32xf32>
    %161 = arith.minimumf %157, %160 : vector<12x32xf32>
    %162 = math.exp %161 : vector<12x32xf32>
    %cst_87 = arith.constant 1.000000e+00 : f32
    %163 = vector.broadcast %cst_87 : f32 to vector<12x32xf32>
    %164 = arith.subf %162, %163 : vector<12x32xf32>
    %165 = arith.select %159, %157, %164 : vector<12x32xi1>, vector<12x32xf32>
    %c0_88 = arith.constant 0 : index
    %c0_89 = arith.constant 0 : index
    %166 = vector.load %arg29[%c0_88, %c0_89] : memref<32x32xf32, #tpu.memory_space<vmem>>, vector<32x32xf32>
    %cst_90 = arith.constant dense<0.000000e+00> : vector<12x32xf32>
    %167 = tpu.matmul %165, %166, %cst_90 {dimension_numbers = #tpu.dot_dimension_numbers<[1], [0], [0], [1], [0, 0, 1, 1], [], []>} : vector<12x32xf32>, vector<32x32xf32>, vector<12x32xf32> -> vector<12x32xf32>
    %c0_91 = arith.constant 0 : index
    %c0_92 = arith.constant 0 : index
    %168 = vector.load %arg30[%c0_91, %c0_92] : memref<1x32xf32, #tpu.memory_space<vmem>>, vector<1x32xf32>
    %169 = vector.broadcast %168 : vector<1x32xf32> to vector<12x32xf32>
    %170 = arith.addf %167, %169 : vector<12x32xf32>
    %cst_93 = arith.constant 0.000000e+00 : f32
    %171 = vector.broadcast %cst_93 : f32 to vector<12x32xf32>
    %172 = arith.cmpf ogt, %170, %171 : vector<12x32xf32>
    %cst_94 = arith.constant 0.000000e+00 : f32
    %173 = vector.broadcast %cst_94 : f32 to vector<12x32xf32>
    %174 = arith.minimumf %170, %173 : vector<12x32xf32>
    %175 = math.exp %174 : vector<12x32xf32>
    %cst_95 = arith.constant 1.000000e+00 : f32
    %176 = vector.broadcast %cst_95 : f32 to vector<12x32xf32>
    %177 = arith.subf %175, %176 : vector<12x32xf32>
    %178 = arith.select %172, %170, %177 : vector<12x32xi1>, vector<12x32xf32>
    %c0_96 = arith.constant 0 : index
    %c0_97 = arith.constant 0 : index
    %179 = vector.load %arg31[%c0_96, %c0_97] : memref<32x128xf32, #tpu.memory_space<vmem>>, vector<32x128xf32>
    %cst_98 = arith.constant dense<0.000000e+00> : vector<12x128xf32>
    %180 = tpu.matmul %178, %179, %cst_98 {dimension_numbers = #tpu.dot_dimension_numbers<[1], [0], [0], [1], [0, 0, 1, 1], [], []>} : vector<12x32xf32>, vector<32x128xf32>, vector<12x128xf32> -> vector<12x128xf32>
    %c0_99 = arith.constant 0 : index
    %c0_100 = arith.constant 0 : index
    %181 = vector.load %arg32[%c0_99, %c0_100] : memref<1x128xf32, #tpu.memory_space<vmem>>, vector<1x128xf32>
    %182 = vector.broadcast %181 : vector<1x128xf32> to vector<12x128xf32>
    %183 = arith.addf %180, %182 : vector<12x128xf32>
    %c0_101 = arith.constant 0 : index
    %c0_102 = arith.constant 0 : index
    %c0_103 = arith.constant 0 : index
    %184 = vector.load %arg33[%c0_101, %c0_102, %c0_103] : memref<1x12x128xf32, #tpu.memory_space<vmem>>, vector<1x12x128xf32>
    %185 = vector.shape_cast %184 : vector<1x12x128xf32> to vector<12x128xf32>
    %186 = vector.shape_cast %183 : vector<12x128xf32> to vector<1x12x128xf32>
    tpu.vector_store %arg33[%c0_101, %c0_102, %c0_103], %186 {strides = array<i32>} : memref<1x12x128xf32, #tpu.memory_space<vmem>>, vector<1x12x128xf32>,
    return
  }
  func.func @transform_0(%arg0: i32) -> (i32, i32, i32) {
    %c0_i32 = arith.constant 0 : i32
    %c0_i32_0 = arith.constant 0 : i32
    %c0_i32_1 = arith.constant 0 : i32
    return %arg0, %c0_i32, %c0_i32_0 : i32, i32, i32
  }
  func.func @transform_1(%arg0: i32) -> (i32, i32) {
    %c0_i32 = arith.constant 0 : i32
    %c0_i32_0 = arith.constant 0 : i32
    %c0_i32_1 = arith.constant 0 : i32
    return %c0_i32, %c0_i32_0 : i32, i32
  }
  func.func @transform_2(%arg0: i32) -> (i32, i32) {
    %c0_i32 = arith.constant 0 : i32
    %c0_i32_0 = arith.constant 0 : i32
    %c0_i32_1 = arith.constant 0 : i32
    return %c0_i32, %c0_i32_0 : i32, i32
  }
  func.func @transform_3(%arg0: i32) -> (i32, i32) {
    %c0_i32 = arith.constant 0 : i32
    %c0_i32_0 = arith.constant 0 : i32
    %c0_i32_1 = arith.constant 0 : i32
    return %c0_i32, %c0_i32_0 : i32, i32
  }
  func.func @transform_4(%arg0: i32) -> (i32, i32) {
    %c0_i32 = arith.constant 0 : i32
    %c0_i32_0 = arith.constant 0 : i32
    %c0_i32_1 = arith.constant 0 : i32
    return %c0_i32, %c0_i32_0 : i32, i32
  }
  func.func @transform_5(%arg0: i32) -> (i32, i32) {
    %c0_i32 = arith.constant 0 : i32
    %c0_i32_0 = arith.constant 0 : i32
    %c0_i32_1 = arith.constant 0 : i32
    return %c0_i32, %c0_i32_0 : i32, i32
  }
  func.func @transform_6(%arg0: i32) -> (i32, i32) {
    %c0_i32 = arith.constant 0 : i32
    %c0_i32_0 = arith.constant 0 : i32
    %c0_i32_1 = arith.constant 0 : i32
    return %c0_i32, %c0_i32_0 : i32, i32
  }
  func.func @transform_7(%arg0: i32) -> (i32, i32) {
    %c0_i32 = arith.constant 0 : i32
    %c0_i32_0 = arith.constant 0 : i32
    %c0_i32_1 = arith.constant 0 : i32
    return %c0_i32, %c0_i32_0 : i32, i32
  }
  func.func @transform_8(%arg0: i32) -> (i32, i32) {
    %c0_i32 = arith.constant 0 : i32
    %c0_i32_0 = arith.constant 0 : i32
    %c0_i32_1 = arith.constant 0 : i32
    return %c0_i32, %c0_i32_0 : i32, i32
  }
  func.func @transform_9(%arg0: i32) -> (i32, i32) {
    %c0_i32 = arith.constant 0 : i32
    %c0_i32_0 = arith.constant 0 : i32
    %c0_i32_1 = arith.constant 0 : i32
    return %c0_i32, %c0_i32_0 : i32, i32
  }
  func.func @transform_10(%arg0: i32) -> (i32, i32) {
    %c0_i32 = arith.constant 0 : i32
    %c0_i32_0 = arith.constant 0 : i32
    %c0_i32_1 = arith.constant 0 : i32
    return %c0_i32, %c0_i32_0 : i32, i32
  }
  func.func @transform_11(%arg0: i32) -> (i32, i32) {
    %c0_i32 = arith.constant 0 : i32
    %c0_i32_0 = arith.constant 0 : i32
    %c0_i32_1 = arith.constant 0 : i32
    return %c0_i32, %c0_i32_0 : i32, i32
  }
  func.func @transform_12(%arg0: i32) -> (i32, i32) {
    %c0_i32 = arith.constant 0 : i32
    %c0_i32_0 = arith.constant 0 : i32
    %c0_i32_1 = arith.constant 0 : i32
    return %c0_i32, %c0_i32_0 : i32, i32
  }
  func.func @transform_13(%arg0: i32) -> (i32, i32) {
    %c0_i32 = arith.constant 0 : i32
    %c0_i32_0 = arith.constant 0 : i32
    %c0_i32_1 = arith.constant 0 : i32
    return %c0_i32, %c0_i32_0 : i32, i32
  }
  func.func @transform_14(%arg0: i32) -> (i32, i32) {
    %c0_i32 = arith.constant 0 : i32
    %c0_i32_0 = arith.constant 0 : i32
    %c0_i32_1 = arith.constant 0 : i32
    return %c0_i32, %c0_i32_0 : i32, i32
  }
  func.func @transform_15(%arg0: i32) -> (i32, i32) {
    %c0_i32 = arith.constant 0 : i32
    %c0_i32_0 = arith.constant 0 : i32
    %c0_i32_1 = arith.constant 0 : i32
    return %c0_i32, %c0_i32_0 : i32, i32
  }
  func.func @transform_16(%arg0: i32) -> (i32, i32) {
    %c0_i32 = arith.constant 0 : i32
    %c0_i32_0 = arith.constant 0 : i32
    %c0_i32_1 = arith.constant 0 : i32
    return %c0_i32, %c0_i32_0 : i32, i32
  }
  func.func @transform_17(%arg0: i32) -> (i32, i32) {
    %c0_i32 = arith.constant 0 : i32
    %c0_i32_0 = arith.constant 0 : i32
    %c0_i32_1 = arith.constant 0 : i32
    return %c0_i32, %c0_i32_0 : i32, i32
  }
  func.func @transform_18(%arg0: i32) -> (i32, i32) {
    %c0_i32 = arith.constant 0 : i32
    %c0_i32_0 = arith.constant 0 : i32
    %c0_i32_1 = arith.constant 0 : i32
    return %c0_i32, %c0_i32_0 : i32, i32
  }
  func.func @transform_19(%arg0: i32) -> (i32, i32) {
    %c0_i32 = arith.constant 0 : i32
    %c0_i32_0 = arith.constant 0 : i32
    %c0_i32_1 = arith.constant 0 : i32
    return %c0_i32, %c0_i32_0 : i32, i32
  }
  func.func @transform_20(%arg0: i32) -> (i32, i32) {
    %c0_i32 = arith.constant 0 : i32
    %c0_i32_0 = arith.constant 0 : i32
    %c0_i32_1 = arith.constant 0 : i32
    return %c0_i32, %c0_i32_0 : i32, i32
  }
  func.func @transform_21(%arg0: i32) -> (i32, i32) {
    %c0_i32 = arith.constant 0 : i32
    %c0_i32_0 = arith.constant 0 : i32
    %c0_i32_1 = arith.constant 0 : i32
    return %c0_i32, %c0_i32_0 : i32, i32
  }
  func.func @transform_22(%arg0: i32) -> (i32, i32) {
    %c0_i32 = arith.constant 0 : i32
    %c0_i32_0 = arith.constant 0 : i32
    %c0_i32_1 = arith.constant 0 : i32
    return %c0_i32, %c0_i32_0 : i32, i32
  }
  func.func @transform_23(%arg0: i32) -> (i32, i32) {
    %c0_i32 = arith.constant 0 : i32
    %c0_i32_0 = arith.constant 0 : i32
    %c0_i32_1 = arith.constant 0 : i32
    return %c0_i32, %c0_i32_0 : i32, i32
  }
  func.func @transform_24(%arg0: i32) -> (i32, i32) {
    %c0_i32 = arith.constant 0 : i32
    %c0_i32_0 = arith.constant 0 : i32
    %c0_i32_1 = arith.constant 0 : i32
    return %c0_i32, %c0_i32_0 : i32, i32
  }
  func.func @transform_25(%arg0: i32) -> (i32, i32) {
    %c0_i32 = arith.constant 0 : i32
    %c0_i32_0 = arith.constant 0 : i32
    %c0_i32_1 = arith.constant 0 : i32
    return %c0_i32, %c0_i32_0 : i32, i32
  }
  func.func @transform_26(%arg0: i32) -> (i32, i32) {
    %c0_i32 = arith.constant 0 : i32
    %c0_i32_0 = arith.constant 0 : i32
    %c0_i32_1 = arith.constant 0 : i32
    return %c0_i32, %c0_i32_0 : i32, i32
  }
  func.func @transform_27(%arg0: i32) -> (i32, i32) {
    %c0_i32 = arith.constant 0 : i32
    %c0_i32_0 = arith.constant 0 : i32
    %c0_i32_1 = arith.constant 0 : i32
    return %c0_i32, %c0_i32_0 : i32, i32
  }
  func.func @transform_28(%arg0: i32) -> (i32, i32) {
    %c0_i32 = arith.constant 0 : i32
    %c0_i32_0 = arith.constant 0 : i32
    %c0_i32_1 = arith.constant 0 : i32
    return %c0_i32, %c0_i32_0 : i32, i32
  }
  func.func @transform_29(%arg0: i32) -> (i32, i32) {
    %c0_i32 = arith.constant 0 : i32
    %c0_i32_0 = arith.constant 0 : i32
    %c0_i32_1 = arith.constant 0 : i32
    return %c0_i32, %c0_i32_0 : i32, i32
  }
  func.func @transform_30(%arg0: i32) -> (i32, i32) {
    %c0_i32 = arith.constant 0 : i32
    %c0_i32_0 = arith.constant 0 : i32
    %c0_i32_1 = arith.constant 0 : i32
    return %c0_i32, %c0_i32_0 : i32, i32
  }
  func.func @transform_31(%arg0: i32) -> (i32, i32) {
    %c0_i32 = arith.constant 0 : i32
    %c0_i32_0 = arith.constant 0 : i32
    %c0_i32_1 = arith.constant 0 : i32
    return %c0_i32, %c0_i32_0 : i32, i32
  }
  func.func @transform_32(%arg0: i32) -> (i32, i32, i32) {
    %c0_i32 = arith.constant 0 : i32
    %c0_i32_0 = arith.constant 0 : i32
    %c0_i32_1 = arith.constant 0 : i32
    return %arg0, %c0_i32, %c0_i32_0 : i32, i32, i32
  }
}

</mosaic_0001>

<llo_original>
// kernel: cnn_encoder_forward.1
$region0: #{cnn_encoder_forward.1}
  #allocation0 [shape = 'u32[]', space=smem, size = 0x4, offset = 0x4, fixed_abs, tag = 'smem constant byte address 0x4 - core index']
  #allocation1 [shape = 'u32[144,128]{1,0:T(1,128)}', space=vmem, size = 0x12000, scoped, tag = 'internal scratch']
  #allocation2 [shape = 'f32[1,1]{1,0:T(1,128)S(1)}', space=vmem, size = 0x200, scoped, tag = 'scoped memory for cnn_encoder_forward.1']
  %s0 = inlined_call_operand.smem [shape: u32[33], index: -1, kind: input, shape index: {}]
  %s1 = sld [smem:[%s0]]
  %s2 = scalar_lea.smem %s0, 1
  %s3 = sld [smem:[%s2]]
  %s4 = scalar_lea.smem %s0, 2
  %s5 = sld [smem:[%s4]]
  %s6 = scalar_lea.smem %s0, 3
  %s7 = sld [smem:[%s6]]
  %s8 = scalar_lea.smem %s0, 4
  %s9 = sld [smem:[%s8]]
  %s10 = scalar_lea.smem %s0, 5
  %s11 = sld [smem:[%s10]]
  %s12 = scalar_lea.smem %s0, 6
  %s13 = sld [smem:[%s12]]
  %s14 = scalar_lea.smem %s0, 7
  %s15 = sld [smem:[%s14]]
  %s16 = scalar_lea.smem %s0, 8
  %s17 = sld [smem:[%s16]]
  %s18 = scalar_lea.smem %s0, 9
  %s19 = sld [smem:[%s18]]
  %s20 = scalar_lea.smem %s0, 10
  %s21 = sld [smem:[%s20]]
  %s22 = scalar_lea.smem %s0, 11
  %s23 = sld [smem:[%s22]]
  %s24 = scalar_lea.smem %s0, 12
  %s25 = sld [smem:[%s24]]
  %s26 = scalar_lea.smem %s0, 13
  %s27 = sld [smem:[%s26]]
  %s28 = scalar_lea.smem %s0, 14
  %s29 = sld [smem:[%s28]]
  %s30 = scalar_lea.smem %s0, 15
  %s31 = sld [smem:[%s30]]
  %s32 = scalar_lea.smem %s0, 16
  %s33 = sld [smem:[%s32]]
  %s34 = scalar_lea.smem %s0, 17
  %s35 = sld [smem:[%s34]]
  %s36 = scalar_lea.smem %s0, 18
  %s37 = sld [smem:[%s36]]
  %s38 = scalar_lea.smem %s0, 19
  %s39 = sld [smem:[%s38]]
  %s40 = scalar_lea.smem %s0, 20
  %s41 = sld [smem:[%s40]]
  %s42 = scalar_lea.smem %s0, 21
  %s43 = sld [smem:[%s42]]
  %s44 = scalar_lea.smem %s0, 22
  %s45 = sld [smem:[%s44]]
  %s46 = scalar_lea.smem %s0, 23
  %s47 = sld [smem:[%s46]]
  %s48 = scalar_lea.smem %s0, 24
  %s49 = sld [smem:[%s48]]
  %s50 = scalar_lea.smem %s0, 25
  %s51 = sld [smem:[%s50]]
  %s52 = scalar_lea.smem %s0, 26
  %s53 = sld [smem:[%s52]]
  %s54 = scalar_lea.smem %s0, 27
  %s55 = sld [smem:[%s54]]
  %s56 = scalar_lea.smem %s0, 28
  %s57 = sld [smem:[%s56]]
  %s58 = scalar_lea.smem %s0, 29
  %s59 = sld [smem:[%s58]]
  %s60 = scalar_lea.smem %s0, 30
  %s61 = sld [smem:[%s60]]
  %s62 = scalar_lea.smem %s0, 31
  %s63 = sld [smem:[%s62]]
  %s64 = scalar_lea.smem %s0, 32
  %s65 = sld [smem:[%s64]]
  %s66 = sld [smem:[#allocation0]]
  $region161: #{cnn_encoder_forward.1} parent=0
    _
  %s68 = ssub.s32 1, %s66
  %s69 = scalar_select 0, %s68, %s66
  %v70 = vstv %s35
  %71 = vst [vmem:[#allocation2] sm:$0x1] %v70
  loop: start=0, step=1, limit=4
  $region2: #{cnn_encoder_forward.1} parent=0 // loop_pre_header
    _
  $region3: #{cnn_encoder_forward.1} parent=0 // loop_header
    %s73 = sphi 0, %s77
    %p74 = scmp.ge.s32.totalorder %s73, 4
    %s83 = sphi 0, %s85
    %s86 = sphi 0, %s83
    %s87 = sphi 0, %s86
    %s103 = sphi 0, %s87
    %s107 = sphi 0, %s107
    %s109 = sphi 0, %s107
    %s110 = sphi 0, %s109
    %s124 = sphi 0, %s110
    %s128 = sphi 0, %s128
    %s130 = sphi 0, %s128
    %s131 = sphi 0, %s130
    %s145 = sphi 0, %s131
    %s149 = sphi 0, %s149
    %s151 = sphi 0, %s149
    %s152 = sphi 0, %s151
    %s166 = sphi 0, %s152
    %s170 = sphi 0, %s170
    %s172 = sphi 0, %s170
    %s173 = sphi 0, %s172
    %s187 = sphi 0, %s173
    %s191 = sphi 0, %s191
    %s193 = sphi 0, %s191
    %s194 = sphi 0, %s193
    %s208 = sphi 0, %s194
    %s212 = sphi 0, %s212
    %s214 = sphi 0, %s212
    %s215 = sphi 0, %s214
    %s229 = sphi 0, %s215
    %s233 = sphi 0, %s233
    %s235 = sphi 0, %s233
    %s236 = sphi 0, %s235
    %s250 = sphi 0, %s236
    %s254 = sphi 0, %s254
    %s256 = sphi 0, %s254
    %s257 = sphi 0, %s256
    %s271 = sphi 0, %s257
    %s275 = sphi 0, %s275
    %s277 = sphi 0, %s275
    %s278 = sphi 0, %s277
    %s292 = sphi 0, %s278
    %s296 = sphi 0, %s296
    %s298 = sphi 0, %s296
    %s299 = sphi 0, %s298
    %s313 = sphi 0, %s299
    %s317 = sphi 0, %s317
    %s319 = sphi 0, %s317
    %s320 = sphi 0, %s319
    %s334 = sphi 0, %s320
    %s338 = sphi 0, %s338
    %s340 = sphi 0, %s338
    %s341 = sphi 0, %s340
    %s355 = sphi 0, %s341
    %s359 = sphi 0, %s359
    %s361 = sphi 0, %s359
    %s362 = sphi 0, %s361
    %s376 = sphi 0, %s362
    %s380 = sphi 0, %s380
    %s382 = sphi 0, %s380
    %s383 = sphi 0, %s382
    %s397 = sphi 0, %s383
    %s401 = sphi 0, %s401
    %s403 = sphi 0, %s401
    %s404 = sphi 0, %s403
    %s418 = sphi 0, %s404
    %s422 = sphi 0, %s422
    %s424 = sphi 0, %s422
    %s425 = sphi 0, %s424
    %s439 = sphi 0, %s425
    %s443 = sphi 0, %s443
    %s445 = sphi 0, %s443
    %s446 = sphi 0, %s445
    %s460 = sphi 0, %s446
    %s464 = sphi 0, %s464
    %s466 = sphi 0, %s464
    %s467 = sphi 0, %s466
    %s481 = sphi 0, %s467
    %s485 = sphi 0, %s485
    %s487 = sphi 0, %s485
    %s488 = sphi 0, %s487
    %s502 = sphi 0, %s488
    %s506 = sphi 0, %s506
    %s508 = sphi 0, %s506
    %s509 = sphi 0, %s508
    %s523 = sphi 0, %s509
    %s527 = sphi 0, %s527
    %s529 = sphi 0, %s527
    %s530 = sphi 0, %s529
    %s544 = sphi 0, %s530
    %s548 = sphi 0, %s548
    %s550 = sphi 0, %s548
    %s551 = sphi 0, %s550
    %s565 = sphi 0, %s551
    %s569 = sphi 0, %s569
    %s571 = sphi 0, %s569
    %s572 = sphi 0, %s571
    %s586 = sphi 0, %s572
    %s590 = sphi 0, %s590
    %s592 = sphi 0, %s590
    %s593 = sphi 0, %s592
    %s607 = sphi 0, %s593
    %s611 = sphi 0, %s611
    %s613 = sphi 0, %s611
    %s614 = sphi 0, %s613
    %s628 = sphi 0, %s614
    %s632 = sphi 0, %s632
    %s634 = sphi 0, %s632
    %s635 = sphi 0, %s634
    %s649 = sphi 0, %s635
    %s653 = sphi 0, %s653
    %s655 = sphi 0, %s653
    %s656 = sphi 0, %s655
    %s670 = sphi 0, %s656
    %s674 = sphi 0, %s674
    %s676 = sphi 0, %s674
    %s677 = sphi 0, %s676
    %s691 = sphi 0, %s677
    %s695 = sphi 0, %s695
    %s697 = sphi 0, %s695
    %s698 = sphi 0, %s697
    %s712 = sphi 0, %s698
    %s716 = sphi 0, %s716
    %s718 = sphi 0, %s716
    %s719 = sphi 0, %s718
    %s733 = sphi 0, %s719
    %s737 = sphi 0, %s737
    %s739 = sphi 0, %s737
    %s740 = sphi 0, %s739
    %s754 = sphi 0, %s740
    %s760 = sphi 0, %s762
    %s763 = sphi 0, %s760
    %s764 = sphi 0, %s763
    %s780 = sphi 0, %s764
  $region4: #{cnn_encoder_forward.1} parent=0 // loop_header_branch
    %76 = sbr.rel (%p74) target = $region8
  $region5: #{cnn_encoder_forward.1} parent=0 // loop_body
    %s78 = ssub.s32 %s73, 1
    %s79 = ssub.s32 %s73, 2
    %s80 = sadd.s32 %s73, 1
    %s81 = ssub.s32 %s73, %s80
    %p82 = scmp.eq.s32.totalorder %s81, 0
    %s84 = sadd.s32 %s83, 1
    %s85 = scalar_select %p82, %s83, %s84
    %p88 = pneg %p82
    %p89 = scmp.eq.s32.totalorder %s73, 1
    %p90 = por %p88, %p89
    %p91 = scmp.ne.s32.totalorder %s83, %s86
    %p92 = scmp.eq.s32.totalorder %s73, 0
    %p93 = por %p91, %p92
    %p94 = scmp.ne.s32.totalorder %s83, %s86
    %p95 = scmp.eq.s32.totalorder %s78, 1
    %p96 = por %p94, %p95
    %p97 = scmp.ne.s32.totalorder %s86, %s87
    %p98 = scmp.eq.s32.totalorder %s78, 0
    %p99 = por %p97, %p98
    %p100 = scmp.ne.s32.totalorder %s86, %s87
    %p101 = scmp.eq.s32.totalorder %s79, 1
    %p102 = por %p100, %p101
    %p104 = scmp.ne.s32.totalorder %s87, %s103
    %p105 = scmp.eq.s32.totalorder %s79, 0
    %p106 = por %p104, %p105
    %s108 = sadd.s32 %s107, 1
    %p111 = scmp.eq.s32.totalorder %s73, 1
    %p112 = scmp.ne.s32.totalorder %s107, %s109
    %p113 = scmp.eq.s32.totalorder %s73, 0
    %p114 = por %p112, %p113
    %p115 = scmp.ne.s32.totalorder %s107, %s109
    %p116 = scmp.eq.s32.totalorder %s78, 1
    %p117 = por %p115, %p116
    %p118 = scmp.ne.s32.totalorder %s109, %s110
    %p119 = scmp.eq.s32.totalorder %s78, 0
    %p120 = por %p118, %p119
    %p121 = scmp.ne.s32.totalorder %s109, %s110
    %p122 = scmp.eq.s32.totalorder %s79, 1
    %p123 = por %p121, %p122
    %p125 = scmp.ne.s32.totalorder %s110, %s124
    %p126 = scmp.eq.s32.totalorder %s79, 0
    %p127 = por %p125, %p126
    %s129 = sadd.s32 %s128, 1
    %p132 = scmp.eq.s32.totalorder %s73, 1
    %p133 = scmp.ne.s32.totalorder %s128, %s130
    %p134 = scmp.eq.s32.totalorder %s73, 0
    %p135 = por %p133, %p134
    %p136 = scmp.ne.s32.totalorder %s128, %s130
    %p137 = scmp.eq.s32.totalorder %s78, 1
    %p138 = por %p136, %p137
    %p139 = scmp.ne.s32.totalorder %s130, %s131
    %p140 = scmp.eq.s32.totalorder %s78, 0
    %p141 = por %p139, %p140
    %p142 = scmp.ne.s32.totalorder %s130, %s131
    %p143 = scmp.eq.s32.totalorder %s79, 1
    %p144 = por %p142, %p143
    %p146 = scmp.ne.s32.totalorder %s131, %s145
    %p147 = scmp.eq.s32.totalorder %s79, 0
    %p148 = por %p146, %p147
    %s150 = sadd.s32 %s149, 1
    %p153 = scmp.eq.s32.totalorder %s73, 1
    %p154 = scmp.ne.s32.totalorder %s149, %s151
    %p155 = scmp.eq.s32.totalorder %s73, 0
    %p156 = por %p154, %p155
    %p157 = scmp.ne.s32.totalorder %s149, %s151
    %p158 = scmp.eq.s32.totalorder %s78, 1
    %p159 = por %p157, %p158
    %p160 = scmp.ne.s32.totalorder %s151, %s152
    %p161 = scmp.eq.s32.totalorder %s78, 0
    %p162 = por %p160, %p161
    %p163 = scmp.ne.s32.totalorder %s151, %s152
    %p164 = scmp.eq.s32.totalorder %s79, 1
    %p165 = por %p163, %p164
    %p167 = scmp.ne.s32.totalorder %s152, %s166
    %p168 = scmp.eq.s32.totalorder %s79, 0
    %p169 = por %p167, %p168
    %s171 = sadd.s32 %s170, 1
    %p174 = scmp.eq.s32.totalorder %s73, 1
    %p175 = scmp.ne.s32.totalorder %s170, %s172
    %p176 = scmp.eq.s32.totalorder %s73, 0
    %p177 = por %p175, %p176
    %p178 = scmp.ne.s32.totalorder %s170, %s172
    %p179 = scmp.eq.s32.totalorder %s78, 1
    %p180 = por %p178, %p179
    %p181 = scmp.ne.s32.totalorder %s172, %s173
    %p182 = scmp.eq.s32.totalorder %s78, 0
    %p183 = por %p181, %p182
    %p184 = scmp.ne.s32.totalorder %s172, %s173
    %p185 = scmp.eq.s32.totalorder %s79, 1
    %p186 = por %p184, %p185
    %p188 = scmp.ne.s32.totalorder %s173, %s187
    %p189 = scmp.eq.s32.totalorder %s79, 0
    %p190 = por %p188, %p189
    %s192 = sadd.s32 %s191, 1
    %p195 = scmp.eq.s32.totalorder %s73, 1
    %p196 = scmp.ne.s32.totalorder %s191, %s193
    %p197 = scmp.eq.s32.totalorder %s73, 0
    %p198 = por %p196, %p197
    %p199 = scmp.ne.s32.totalorder %s191, %s193
    %p200 = scmp.eq.s32.totalorder %s78, 1
    %p201 = por %p199, %p200
    %p202 = scmp.ne.s32.totalorder %s193, %s194
    %p203 = scmp.eq.s32.totalorder %s78, 0
    %p204 = por %p202, %p203
    %p205 = scmp.ne.s32.totalorder %s193, %s194
    %p206 = scmp.eq.s32.totalorder %s79, 1
    %p207 = por %p205, %p206
    %p209 = scmp.ne.s32.totalorder %s194, %s208
    %p210 = scmp.eq.s32.totalorder %s79, 0
    %p211 = por %p209, %p210
    %s213 = sadd.s32 %s212, 1
    %p216 = scmp.eq.s32.totalorder %s73, 1
    %p217 = scmp.ne.s32.totalorder %s212, %s214
    %p218 = scmp.eq.s32.totalorder %s73, 0
    %p219 = por %p217, %p218
    %p220 = scmp.ne.s32.totalorder %s212, %s214
    %p221 = scmp.eq.s32.totalorder %s78, 1
    %p222 = por %p220, %p221
    %p223 = scmp.ne.s32.totalorder %s214, %s215
    %p224 = scmp.eq.s32.totalorder %s78, 0
    %p225 = por %p223, %p224
    %p226 = scmp.ne.s32.totalorder %s214, %s215
    %p227 = scmp.eq.s32.totalorder %s79, 1
    %p228 = por %p226, %p227
    %p230 = scmp.ne.s32.totalorder %s215, %s229
    %p231 = scmp.eq.s32.totalorder %s79, 0
    %p232 = por %p230, %p231
    %s234 = sadd.s32 %s233, 1
    %p237 = scmp.eq.s32.totalorder %s73, 1
    %p238 = scmp.ne.s32.totalorder %s233, %s235
    %p239 = scmp.eq.s32.totalorder %s73, 0
    %p240 = por %p238, %p239
    %p241 = scmp.ne.s32.totalorder %s233, %s235
    %p242 = scmp.eq.s32.totalorder %s78, 1
    %p243 = por %p241, %p242
    %p244 = scmp.ne.s32.totalorder %s235, %s236
    %p245 = scmp.eq.s32.totalorder %s78, 0
    %p246 = por %p244, %p245
    %p247 = scmp.ne.s32.totalorder %s235, %s236
    %p248 = scmp.eq.s32.totalorder %s79, 1
    %p249 = por %p247, %p248
    %p251 = scmp.ne.s32.totalorder %s236, %s250
    %p252 = scmp.eq.s32.totalorder %s79, 0
    %p253 = por %p251, %p252
    %s255 = sadd.s32 %s254, 1
    %p258 = scmp.eq.s32.totalorder %s73, 1
    %p259 = scmp.ne.s32.totalorder %s254, %s256
    %p260 = scmp.eq.s32.totalorder %s73, 0
    %p261 = por %p259, %p260
    %p262 = scmp.ne.s32.totalorder %s254, %s256
    %p263 = scmp.eq.s32.totalorder %s78, 1
    %p264 = por %p262, %p263
    %p265 = scmp.ne.s32.totalorder %s256, %s257
    %p266 = scmp.eq.s32.totalorder %s78, 0
    %p267 = por %p265, %p266
    %p268 = scmp.ne.s32.totalorder %s256, %s257
    %p269 = scmp.eq.s32.totalorder %s79, 1
    %p270 = por %p268, %p269
    %p272 = scmp.ne.s32.totalorder %s257, %s271
    %p273 = scmp.eq.s32.totalorder %s79, 0
    %p274 = por %p272, %p273
    %s276 = sadd.s32 %s275, 1
    %p279 = scmp.eq.s32.totalorder %s73, 1
    %p280 = scmp.ne.s32.totalorder %s275, %s277
    %p281 = scmp.eq.s32.totalorder %s73, 0
    %p282 = por %p280, %p281
    %p283 = scmp.ne.s32.totalorder %s275, %s277
    %p284 = scmp.eq.s32.totalorder %s78, 1
    %p285 = por %p283, %p284
    %p286 = scmp.ne.s32.totalorder %s277, %s278
    %p287 = scmp.eq.s32.totalorder %s78, 0
    %p288 = por %p286, %p287
    %p289 = scmp.ne.s32.totalorder %s277, %s278
    %p290 = scmp.eq.s32.totalorder %s79, 1
    %p291 = por %p289, %p290
    %p293 = scmp.ne.s32.totalorder %s278, %s292
    %p294 = scmp.eq.s32.totalorder %s79, 0
    %p295 = por %p293, %p294
    %s297 = sadd.s32 %s296, 1
    %p300 = scmp.eq.s32.totalorder %s73, 1
    %p301 = scmp.ne.s32.totalorder %s296, %s298
    %p302 = scmp.eq.s32.totalorder %s73, 0
    %p303 = por %p301, %p302
    %p304 = scmp.ne.s32.totalorder %s296, %s298
    %p305 = scmp.eq.s32.totalorder %s78, 1
    %p306 = por %p304, %p305
    %p307 = scmp.ne.s32.totalorder %s298, %s299
    %p308 = scmp.eq.s32.totalorder %s78, 0
    %p309 = por %p307, %p308
    %p310 = scmp.ne.s32.totalorder %s298, %s299
    %p311 = scmp.eq.s32.totalorder %s79, 1
    %p312 = por %p310, %p311
    %p314 = scmp.ne.s32.totalorder %s299, %s313
    %p315 = scmp.eq.s32.totalorder %s79, 0
    %p316 = por %p314, %p315
    %s318 = sadd.s32 %s317, 1
    %p321 = scmp.eq.s32.totalorder %s73, 1
    %p322 = scmp.ne.s32.totalorder %s317, %s319
    %p323 = scmp.eq.s32.totalorder %s73, 0
    %p324 = por %p322, %p323
    %p325 = scmp.ne.s32.totalorder %s317, %s319
    %p326 = scmp.eq.s32.totalorder %s78, 1
    %p327 = por %p325, %p326
    %p328 = scmp.ne.s32.totalorder %s319, %s320
    %p329 = scmp.eq.s32.totalorder %s78, 0
    %p330 = por %p328, %p329
    %p331 = scmp.ne.s32.totalorder %s319, %s320
    %p332 = scmp.eq.s32.totalorder %s79, 1
    %p333 = por %p331, %p332
    %p335 = scmp.ne.s32.totalorder %s320, %s334
    %p336 = scmp.eq.s32.totalorder %s79, 0
    %p337 = por %p335, %p336
    %s339 = sadd.s32 %s338, 1
    %p342 = scmp.eq.s32.totalorder %s73, 1
    %p343 = scmp.ne.s32.totalorder %s338, %s340
    %p344 = scmp.eq.s32.totalorder %s73, 0
    %p345 = por %p343, %p344
    %p346 = scmp.ne.s32.totalorder %s338, %s340
    %p347 = scmp.eq.s32.totalorder %s78, 1
    %p348 = por %p346, %p347
    %p349 = scmp.ne.s32.totalorder %s340, %s341
    %p350 = scmp.eq.s32.totalorder %s78, 0
    %p351 = por %p349, %p350
    %p352 = scmp.ne.s32.totalorder %s340, %s341
    %p353 = scmp.eq.s32.totalorder %s79, 1
    %p354 = por %p352, %p353
    %p356 = scmp.ne.s32.totalorder %s341, %s355
    %p357 = scmp.eq.s32.totalorder %s79, 0
    %p358 = por %p356, %p357
    %s360 = sadd.s32 %s359, 1
    %p363 = scmp.eq.s32.totalorder %s73, 1
    %p364 = scmp.ne.s32.totalorder %s359, %s361
    %p365 = scmp.eq.s32.totalorder %s73, 0
    %p366 = por %p364, %p365
    %p367 = scmp.ne.s32.totalorder %s359, %s361
    %p368 = scmp.eq.s32.totalorder %s78, 1
    %p369 = por %p367, %p368
    %p370 = scmp.ne.s32.totalorder %s361, %s362
    %p371 = scmp.eq.s32.totalorder %s78, 0
    %p372 = por %p370, %p371
    %p373 = scmp.ne.s32.totalorder %s361, %s362
    %p374 = scmp.eq.s32.totalorder %s79, 1
    %p375 = por %p373, %p374
    %p377 = scmp.ne.s32.totalorder %s362, %s376
    %p378 = scmp.eq.s32.totalorder %s79, 0
    %p379 = por %p377, %p378
    %s381 = sadd.s32 %s380, 1
    %p384 = scmp.eq.s32.totalorder %s73, 1
    %p385 = scmp.ne.s32.totalorder %s380, %s382
    %p386 = scmp.eq.s32.totalorder %s73, 0
    %p387 = por %p385, %p386
    %p388 = scmp.ne.s32.totalorder %s380, %s382
    %p389 = scmp.eq.s32.totalorder %s78, 1
    %p390 = por %p388, %p389
    %p391 = scmp.ne.s32.totalorder %s382, %s383
    %p392 = scmp.eq.s32.totalorder %s78, 0
    %p393 = por %p391, %p392
    %p394 = scmp.ne.s32.totalorder %s382, %s383
    %p395 = scmp.eq.s32.totalorder %s79, 1
    %p396 = por %p394, %p395
    %p398 = scmp.ne.s32.totalorder %s383, %s397
    %p399 = scmp.eq.s32.totalorder %s79, 0
    %p400 = por %p398, %p399
    %s402 = sadd.s32 %s401, 1
    %p405 = scmp.eq.s32.totalorder %s73, 1
    %p406 = scmp.ne.s32.totalorder %s401, %s403
    %p407 = scmp.eq.s32.totalorder %s73, 0
    %p408 = por %p406, %p407
    %p409 = scmp.ne.s32.totalorder %s401, %s403
    %p410 = scmp.eq.s32.totalorder %s78, 1
    %p411 = por %p409, %p410
    %p412 = scmp.ne.s32.totalorder %s403, %s404
    %p413 = scmp.eq.s32.totalorder %s78, 0
    %p414 = por %p412, %p413
    %p415 = scmp.ne.s32.totalorder %s403, %s404
    %p416 = scmp.eq.s32.totalorder %s79, 1
    %p417 = por %p415, %p416
    %p419 = scmp.ne.s32.totalorder %s404, %s418
    %p420 = scmp.eq.s32.totalorder %s79, 0
    %p421 = por %p419, %p420
    %s423 = sadd.s32 %s422, 1
    %p426 = scmp.eq.s32.totalorder %s73, 1
    %p427 = scmp.ne.s32.totalorder %s422, %s424
    %p428 = scmp.eq.s32.totalorder %s73, 0
    %p429 = por %p427, %p428
    %p430 = scmp.ne.s32.totalorder %s422, %s424
    %p431 = scmp.eq.s32.totalorder %s78, 1
    %p432 = por %p430, %p431
    %p433 = scmp.ne.s32.totalorder %s424, %s425
    %p434 = scmp.eq.s32.totalorder %s78, 0
    %p435 = por %p433, %p434
    %p436 = scmp.ne.s32.totalorder %s424, %s425
    %p437 = scmp.eq.s32.totalorder %s79, 1
    %p438 = por %p436, %p437
    %p440 = scmp.ne.s32.totalorder %s425, %s439
    %p441 = scmp.eq.s32.totalorder %s79, 0
    %p442 = por %p440, %p441
    %s444 = sadd.s32 %s443, 1
    %p447 = scmp.eq.s32.totalorder %s73, 1
    %p448 = scmp.ne.s32.totalorder %s443, %s445
    %p449 = scmp.eq.s32.totalorder %s73, 0
    %p450 = por %p448, %p449
    %p451 = scmp.ne.s32.totalorder %s443, %s445
    %p452 = scmp.eq.s32.totalorder %s78, 1
    %p453 = por %p451, %p452
    %p454 = scmp.ne.s32.totalorder %s445, %s446
    %p455 = scmp.eq.s32.totalorder %s78, 0
    %p456 = por %p454, %p455
    %p457 = scmp.ne.s32.totalorder %s445, %s446
    %p458 = scmp.eq.s32.totalorder %s79, 1
    %p459 = por %p457, %p458
    %p461 = scmp.ne.s32.totalorder %s446, %s460
    %p462 = scmp.eq.s32.totalorder %s79, 0
    %p463 = por %p461, %p462
    %s465 = sadd.s32 %s464, 1
    %p468 = scmp.eq.s32.totalorder %s73, 1
    %p469 = scmp.ne.s32.totalorder %s464, %s466
    %p470 = scmp.eq.s32.totalorder %s73, 0
    %p471 = por %p469, %p470
    %p472 = scmp.ne.s32.totalorder %s464, %s466
    %p473 = scmp.eq.s32.totalorder %s78, 1
    %p474 = por %p472, %p473
    %p475 = scmp.ne.s32.totalorder %s466, %s467
    %p476 = scmp.eq.s32.totalorder %s78, 0
    %p477 = por %p475, %p476
    %p478 = scmp.ne.s32.totalorder %s466, %s467
    %p479 = scmp.eq.s32.totalorder %s79, 1
    %p480 = por %p478, %p479
    %p482 = scmp.ne.s32.totalorder %s467, %s481
    %p483 = scmp.eq.s32.totalorder %s79, 0
    %p484 = por %p482, %p483
    %s486 = sadd.s32 %s485, 1
    %p489 = scmp.eq.s32.totalorder %s73, 1
    %p490 = scmp.ne.s32.totalorder %s485, %s487
    %p491 = scmp.eq.s32.totalorder %s73, 0
    %p492 = por %p490, %p491
    %p493 = scmp.ne.s32.totalorder %s485, %s487
    %p494 = scmp.eq.s32.totalorder %s78, 1
    %p495 = por %p493, %p494
    %p496 = scmp.ne.s32.totalorder %s487, %s488
    %p497 = scmp.eq.s32.totalorder %s78, 0
    %p498 = por %p496, %p497
    %p499 = scmp.ne.s32.totalorder %s487, %s488
    %p500 = scmp.eq.s32.totalorder %s79, 1
    %p501 = por %p499, %p500
    %p503 = scmp.ne.s32.totalorder %s488, %s502
    %p504 = scmp.eq.s32.totalorder %s79, 0
    %p505 = por %p503, %p504
    %s507 = sadd.s32 %s506, 1
    %p510 = scmp.eq.s32.totalorder %s73, 1
    %p511 = scmp.ne.s32.totalorder %s506, %s508
    %p512 = scmp.eq.s32.totalorder %s73, 0
    %p513 = por %p511, %p512
    %p514 = scmp.ne.s32.totalorder %s506, %s508
    %p515 = scmp.eq.s32.totalorder %s78, 1
    %p516 = por %p514, %p515
    %p517 = scmp.ne.s32.totalorder %s508, %s509
    %p518 = scmp.eq.s32.totalorder %s78, 0
    %p519 = por %p517, %p518
    %p520 = scmp.ne.s32.totalorder %s508, %s509
    %p521 = scmp.eq.s32.totalorder %s79, 1
    %p522 = por %p520, %p521
    %p524 = scmp.ne.s32.totalorder %s509, %s523
    %p525 = scmp.eq.s32.totalorder %s79, 0
    %p526 = por %p524, %p525
    %s528 = sadd.s32 %s527, 1
    %p531 = scmp.eq.s32.totalorder %s73, 1
    %p532 = scmp.ne.s32.totalorder %s527, %s529
    %p533 = scmp.eq.s32.totalorder %s73, 0
    %p534 = por %p532, %p533
    %p535 = scmp.ne.s32.totalorder %s527, %s529
    %p536 = scmp.eq.s32.totalorder %s78, 1
    %p537 = por %p535, %p536
    %p538 = scmp.ne.s32.totalorder %s529, %s530
    %p539 = scmp.eq.s32.totalorder %s78, 0
    %p540 = por %p538, %p539
    %p541 = scmp.ne.s32.totalorder %s529, %s530
    %p542 = scmp.eq.s32.totalorder %s79, 1
    %p543 = por %p541, %p542
    %p545 = scmp.ne.s32.totalorder %s530, %s544
    %p546 = scmp.eq.s32.totalorder %s79, 0
    %p547 = por %p545, %p546
    %s549 = sadd.s32 %s548, 1
    %p552 = scmp.eq.s32.totalorder %s73, 1
    %p553 = scmp.ne.s32.totalorder %s548, %s550
    %p554 = scmp.eq.s32.totalorder %s73, 0
    %p555 = por %p553, %p554
    %p556 = scmp.ne.s32.totalorder %s548, %s550
    %p557 = scmp.eq.s32.totalorder %s78, 1
    %p558 = por %p556, %p557
    %p559 = scmp.ne.s32.totalorder %s550, %s551
    %p560 = scmp.eq.s32.totalorder %s78, 0
    %p561 = por %p559, %p560
    %p562 = scmp.ne.s32.totalorder %s550, %s551
    %p563 = scmp.eq.s32.totalorder %s79, 1
    %p564 = por %p562, %p563
    %p566 = scmp.ne.s32.totalorder %s551, %s565
    %p567 = scmp.eq.s32.totalorder %s79, 0
    %p568 = por %p566, %p567
    %s570 = sadd.s32 %s569, 1
    %p573 = scmp.eq.s32.totalorder %s73, 1
    %p574 = scmp.ne.s32.totalorder %s569, %s571
    %p575 = scmp.eq.s32.totalorder %s73, 0
    %p576 = por %p574, %p575
    %p577 = scmp.ne.s32.totalorder %s569, %s571
    %p578 = scmp.eq.s32.totalorder %s78, 1
    %p579 = por %p577, %p578
    %p580 = scmp.ne.s32.totalorder %s571, %s572
    %p581 = scmp.eq.s32.totalorder %s78, 0
    %p582 = por %p580, %p581
    %p583 = scmp.ne.s32.totalorder %s571, %s572
    %p584 = scmp.eq.s32.totalorder %s79, 1
    %p585 = por %p583, %p584
    %p587 = scmp.ne.s32.totalorder %s572, %s586
    %p588 = scmp.eq.s32.totalorder %s79, 0
    %p589 = por %p587, %p588
    %s591 = sadd.s32 %s590, 1
    %p594 = scmp.eq.s32.totalorder %s73, 1
    %p595 = scmp.ne.s32.totalorder %s590, %s592
    %p596 = scmp.eq.s32.totalorder %s73, 0
    %p597 = por %p595, %p596
    %p598 = scmp.ne.s32.totalorder %s590, %s592
    %p599 = scmp.eq.s32.totalorder %s78, 1
    %p600 = por %p598, %p599
    %p601 = scmp.ne.s32.totalorder %s592, %s593
    %p602 = scmp.eq.s32.totalorder %s78, 0
    %p603 = por %p601, %p602
    %p604 = scmp.ne.s32.totalorder %s592, %s593
    %p605 = scmp.eq.s32.totalorder %s79, 1
    %p606 = por %p604, %p605
    %p608 = scmp.ne.s32.totalorder %s593, %s607
    %p609 = scmp.eq.s32.totalorder %s79, 0
    %p610 = por %p608, %p609
    %s612 = sadd.s32 %s611, 1
    %p615 = scmp.eq.s32.totalorder %s73, 1
    %p616 = scmp.ne.s32.totalorder %s611, %s613
    %p617 = scmp.eq.s32.totalorder %s73, 0
    %p618 = por %p616, %p617
    %p619 = scmp.ne.s32.totalorder %s611, %s613
    %p620 = scmp.eq.s32.totalorder %s78, 1
    %p621 = por %p619, %p620
    %p622 = scmp.ne.s32.totalorder %s613, %s614
    %p623 = scmp.eq.s32.totalorder %s78, 0
    %p624 = por %p622, %p623
    %p625 = scmp.ne.s32.totalorder %s613, %s614
    %p626 = scmp.eq.s32.totalorder %s79, 1
    %p627 = por %p625, %p626
    %p629 = scmp.ne.s32.totalorder %s614, %s628
    %p630 = scmp.eq.s32.totalorder %s79, 0
    %p631 = por %p629, %p630
    %s633 = sadd.s32 %s632, 1
    %p636 = scmp.eq.s32.totalorder %s73, 1
    %p637 = scmp.ne.s32.totalorder %s632, %s634
    %p638 = scmp.eq.s32.totalorder %s73, 0
    %p639 = por %p637, %p638
    %p640 = scmp.ne.s32.totalorder %s632, %s634
    %p641 = scmp.eq.s32.totalorder %s78, 1
    %p642 = por %p640, %p641
    %p643 = scmp.ne.s32.totalorder %s634, %s635
    %p644 = scmp.eq.s32.totalorder %s78, 0
    %p645 = por %p643, %p644
    %p646 = scmp.ne.s32.totalorder %s634, %s635
    %p647 = scmp.eq.s32.totalorder %s79, 1
    %p648 = por %p646, %p647
    %p650 = scmp.ne.s32.totalorder %s635, %s649
    %p651 = scmp.eq.s32.totalorder %s79, 0
    %p652 = por %p650, %p651
    %s654 = sadd.s32 %s653, 1
    %p657 = scmp.eq.s32.totalorder %s73, 1
    %p658 = scmp.ne.s32.totalorder %s653, %s655
    %p659 = scmp.eq.s32.totalorder %s73, 0
    %p660 = por %p658, %p659
    %p661 = scmp.ne.s32.totalorder %s653, %s655
    %p662 = scmp.eq.s32.totalorder %s78, 1
    %p663 = por %p661, %p662
    %p664 = scmp.ne.s32.totalorder %s655, %s656
    %p665 = scmp.eq.s32.totalorder %s78, 0
    %p666 = por %p664, %p665
    %p667 = scmp.ne.s32.totalorder %s655, %s656
    %p668 = scmp.eq.s32.totalorder %s79, 1
    %p669 = por %p667, %p668
    %p671 = scmp.ne.s32.totalorder %s656, %s670
    %p672 = scmp.eq.s32.totalorder %s79, 0
    %p673 = por %p671, %p672
    %s675 = sadd.s32 %s674, 1
    %p678 = scmp.eq.s32.totalorder %s73, 1
    %p679 = scmp.ne.s32.totalorder %s674, %s676
    %p680 = scmp.eq.s32.totalorder %s73, 0
    %p681 = por %p679, %p680
    %p682 = scmp.ne.s32.totalorder %s674, %s676
    %p683 = scmp.eq.s32.totalorder %s78, 1
    %p684 = por %p682, %p683
    %p685 = scmp.ne.s32.totalorder %s676, %s677
    %p686 = scmp.eq.s32.totalorder %s78, 0
    %p687 = por %p685, %p686
    %p688 = scmp.ne.s32.totalorder %s676, %s677
    %p689 = scmp.eq.s32.totalorder %s79, 1
    %p690 = por %p688, %p689
    %p692 = scmp.ne.s32.totalorder %s677, %s691
    %p693 = scmp.eq.s32.totalorder %s79, 0
    %p694 = por %p692, %p693
    %s696 = sadd.s32 %s695, 1
    %p699 = scmp.eq.s32.totalorder %s73, 1
    %p700 = scmp.ne.s32.totalorder %s695, %s697
    %p701 = scmp.eq.s32.totalorder %s73, 0
    %p702 = por %p700, %p701
    %p703 = scmp.ne.s32.totalorder %s695, %s697
    %p704 = scmp.eq.s32.totalorder %s78, 1
    %p705 = por %p703, %p704
    %p706 = scmp.ne.s32.totalorder %s697, %s698
    %p707 = scmp.eq.s32.totalorder %s78, 0
    %p708 = por %p706, %p707
    %p709 = scmp.ne.s32.totalorder %s697, %s698
    %p710 = scmp.eq.s32.totalorder %s79, 1
    %p711 = por %p709, %p710
    %p713 = scmp.ne.s32.totalorder %s698, %s712
    %p714 = scmp.eq.s32.totalorder %s79, 0
    %p715 = por %p713, %p714
    %s717 = sadd.s32 %s716, 1
    %p720 = scmp.eq.s32.totalorder %s73, 1
    %p721 = scmp.ne.s32.totalorder %s716, %s718
    %p722 = scmp.eq.s32.totalorder %s73, 0
    %p723 = por %p721, %p722
    %p724 = scmp.ne.s32.totalorder %s716, %s718
    %p725 = scmp.eq.s32.totalorder %s78, 1
    %p726 = por %p724, %p725
    %p727 = scmp.ne.s32.totalorder %s718, %s719
    %p728 = scmp.eq.s32.totalorder %s78, 0
    %p729 = por %p727, %p728
    %p730 = scmp.ne.s32.totalorder %s718, %s719
    %p731 = scmp.eq.s32.totalorder %s79, 1
    %p732 = por %p730, %p731
    %p734 = scmp.ne.s32.totalorder %s719, %s733
    %p735 = scmp.eq.s32.totalorder %s79, 0
    %p736 = por %p734, %p735
    %s738 = sadd.s32 %s737, 1
    %p741 = scmp.eq.s32.totalorder %s73, 1
    %p742 = scmp.ne.s32.totalorder %s737, %s739
    %p743 = scmp.eq.s32.totalorder %s73, 0
    %p744 = por %p742, %p743
    %p745 = scmp.ne.s32.totalorder %s737, %s739
    %p746 = scmp.eq.s32.totalorder %s78, 1
    %p747 = por %p745, %p746
    %p748 = scmp.ne.s32.totalorder %s739, %s740
    %p749 = scmp.eq.s32.totalorder %s78, 0
    %p750 = por %p748, %p749
    %p751 = scmp.ne.s32.totalorder %s739, %s740
    %p752 = scmp.eq.s32.totalorder %s79, 1
    %p753 = por %p751, %p752
    %p755 = scmp.ne.s32.totalorder %s740, %s754
    %p756 = scmp.eq.s32.totalorder %s79, 0
    %p757 = por %p755, %p756
    %s758 = ssub.s32 %s73, %s80
    %p759 = scmp.eq.s32.totalorder %s758, 0
    %s761 = sadd.s32 %s760, 1
    %s762 = scalar_select %p759, %s760, %s761
    %p765 = pneg %p759
    %p766 = scmp.eq.s32.totalorder %s73, 1
    %p767 = por %p765, %p766
    %p768 = scmp.ne.s32.totalorder %s760, %s763
    %p769 = scmp.eq.s32.totalorder %s73, 0
    %p770 = por %p768, %p769
    %p771 = scmp.ne.s32.totalorder %s760, %s763
    %p772 = scmp.eq.s32.totalorder %s78, 1
    %p773 = por %p771, %p772
    %p774 = scmp.ne.s32.totalorder %s763, %s764
    %p775 = scmp.eq.s32.totalorder %s78, 0
    %p776 = por %p774, %p775
    %p777 = scmp.ne.s32.totalorder %s763, %s764
    %p778 = scmp.eq.s32.totalorder %s79, 1
    %p779 = por %p777, %p778
    %p781 = scmp.ne.s32.totalorder %s764, %s780
    %p782 = scmp.eq.s32.totalorder %s79, 0
    %p783 = por %p781, %p782
    %p784 = scmp.le.s32.totalorder 1, %s73
    %p785 = scmp.lt.s32.totalorder %s73, 3
    %p786 = pnand %p784, %p785
    %p787 = pneg %p786
    // Predicated region
    $region9: #{cnn_encoder_forward.1} parent=5 // pred_check
      _
    $region10: #{cnn_encoder_forward.1} parent=5 // pred_check_branch
      %789 = sbr.rel (%p786) target = $region12
    $region11: #{cnn_encoder_forward.1} parent=5 // pred_region
      %s790 = ssub.s32 %s73, 1
      // Predicated region
      $region13: #{cnn_encoder_forward.1} parent=11 // pred_check
        %p791 = pneg %p120
      $region14: #{cnn_encoder_forward.1} parent=11 // pred_check_branch
        %793 = sbr.rel (%p791) target = $region16
      $region15: #{cnn_encoder_forward.1} parent=11 // pred_region
        _
      $region16: #{cnn_encoder_forward.1} parent=11 // pred_fallthru
        _
      // Predicated region
      $region17: #{cnn_encoder_forward.1} parent=11 // pred_check
        %p794 = pneg %p141
      $region18: #{cnn_encoder_forward.1} parent=11 // pred_check_branch
        %796 = sbr.rel (%p794) target = $region20
      $region19: #{cnn_encoder_forward.1} parent=11 // pred_region
        _
      $region20: #{cnn_encoder_forward.1} parent=11 // pred_fallthru
        _
      // Predicated region
      $region21: #{cnn_encoder_forward.1} parent=11 // pred_check
        %p797 = pneg %p162
      $region22: #{cnn_encoder_forward.1} parent=11 // pred_check_branch
        %799 = sbr.rel (%p797) target = $region24
      $region23: #{cnn_encoder_forward.1} parent=11 // pred_region
        _
      $region24: #{cnn_encoder_forward.1} parent=11 // pred_fallthru
        _
      // Predicated region
      $region25: #{cnn_encoder_forward.1} parent=11 // pred_check
        %p800 = pneg %p183
      $region26: #{cnn_encoder_forward.1} parent=11 // pred_check_branch
        %802 = sbr.rel (%p800) target = $region28
      $region27: #{cnn_encoder_forward.1} parent=11 // pred_region
        _
      $region28: #{cnn_encoder_forward.1} parent=11 // pred_fallthru
        _
      // Predicated region
      $region29: #{cnn_encoder_forward.1} parent=11 // pred_check
        %p803 = pneg %p204
      $region30: #{cnn_encoder_forward.1} parent=11 // pred_check_branch
        %805 = sbr.rel (%p803) target = $region32
      $region31: #{cnn_encoder_forward.1} parent=11 // pred_region
        _
      $region32: #{cnn_encoder_forward.1} parent=11 // pred_fallthru
        _
      // Predicated region
      $region33: #{cnn_encoder_forward.1} parent=11 // pred_check
        %p806 = pneg %p225
      $region34: #{cnn_encoder_forward.1} parent=11 // pred_check_branch
        %808 = sbr.rel (%p806) target = $region36
      $region35: #{cnn_encoder_forward.1} parent=11 // pred_region
        _
      $region36: #{cnn_encoder_forward.1} parent=11 // pred_fallthru
        _
      // Predicated region
      $region37: #{cnn_encoder_forward.1} parent=11 // pred_check
        %p809 = pneg %p246
      $region38: #{cnn_encoder_forward.1} parent=11 // pred_check_branch
        %811 = sbr.rel (%p809) target = $region40
      $region39: #{cnn_encoder_forward.1} parent=11 // pred_region
        _
      $region40: #{cnn_encoder_forward.1} parent=11 // pred_fallthru
        _
      // Predicated region
      $region41: #{cnn_encoder_forward.1} parent=11 // pred_check
        %p812 = pneg %p267
      $region42: #{cnn_encoder_forward.1} parent=11 // pred_check_branch
        %814 = sbr.rel (%p812) target = $region44
      $region43: #{cnn_encoder_forward.1} parent=11 // pred_region
        _
      $region44: #{cnn_encoder_forward.1} parent=11 // pred_fallthru
        _
      // Predicated region
      $region45: #{cnn_encoder_forward.1} parent=11 // pred_check
        %p815 = pneg %p288
      $region46: #{cnn_encoder_forward.1} parent=11 // pred_check_branch
        %817 = sbr.rel (%p815) target = $region48
      $region47: #{cnn_encoder_forward.1} parent=11 // pred_region
        _
      $region48: #{cnn_encoder_forward.1} parent=11 // pred_fallthru
        _
      // Predicated region
      $region49: #{cnn_encoder_forward.1} parent=11 // pred_check
        %p818 = pneg %p309
      $region50: #{cnn_encoder_forward.1} parent=11 // pred_check_branch
        %820 = sbr.rel (%p818) target = $region52
      $region51: #{cnn_encoder_forward.1} parent=11 // pred_region
        _
      $region52: #{cnn_encoder_forward.1} parent=11 // pred_fallthru
        _
      // Predicated region
      $region53: #{cnn_encoder_forward.1} parent=11 // pred_check
        %p821 = pneg %p330
      $region54: #{cnn_encoder_forward.1} parent=11 // pred_check_branch
        %823 = sbr.rel (%p821) target = $region56
      $region55: #{cnn_encoder_forward.1} parent=11 // pred_region
        _
      $region56: #{cnn_encoder_forward.1} parent=11 // pred_fallthru
        _
      // Predicated region
      $region57: #{cnn_encoder_forward.1} parent=11 // pred_check
        %p824 = pneg %p351
      $region58: #{cnn_encoder_forward.1} parent=11 // pred_check_branch
        %826 = sbr.rel (%p824) target = $region60
      $region59: #{cnn_encoder_forward.1} parent=11 // pred_region
        _
      $region60: #{cnn_encoder_forward.1} parent=11 // pred_fallthru
        _
      // Predicated region
      $region61: #{cnn_encoder_forward.1} parent=11 // pred_check
        %p827 = pneg %p372
      $region62: #{cnn_encoder_forward.1} parent=11 // pred_check_branch
        %829 = sbr.rel (%p827) target = $region64
      $region63: #{cnn_encoder_forward.1} parent=11 // pred_region
        _
      $region64: #{cnn_encoder_forward.1} parent=11 // pred_fallthru
        _
      // Predicated region
      $region65: #{cnn_encoder_forward.1} parent=11 // pred_check
        %p830 = pneg %p393
      $region66: #{cnn_encoder_forward.1} parent=11 // pred_check_branch
        %832 = sbr.rel (%p830) target = $region68
      $region67: #{cnn_encoder_forward.1} parent=11 // pred_region
        _
      $region68: #{cnn_encoder_forward.1} parent=11 // pred_fallthru
        _
      // Predicated region
      $region69: #{cnn_encoder_forward.1} parent=11 // pred_check
        %p833 = pneg %p414
      $region70: #{cnn_encoder_forward.1} parent=11 // pred_check_branch
        %835 = sbr.rel (%p833) target = $region72
      $region71: #{cnn_encoder_forward.1} parent=11 // pred_region
        _
      $region72: #{cnn_encoder_forward.1} parent=11 // pred_fallthru
        _
      // Predicated region
      $region73: #{cnn_encoder_forward.1} parent=11 // pred_check
        %p836 = pneg %p435
      $region74: #{cnn_encoder_forward.1} parent=11 // pred_check_branch
        %838 = sbr.rel (%p836) target = $region76
      $region75: #{cnn_encoder_forward.1} parent=11 // pred_region
        _
      $region76: #{cnn_encoder_forward.1} parent=11 // pred_fallthru
        _
      // Predicated region
      $region77: #{cnn_encoder_forward.1} parent=11 // pred_check
        %p839 = pneg %p456
      $region78: #{cnn_encoder_forward.1} parent=11 // pred_check_branch
        %841 = sbr.rel (%p839) target = $region80
      $region79: #{cnn_encoder_forward.1} parent=11 // pred_region
        _
      $region80: #{cnn_encoder_forward.1} parent=11 // pred_fallthru
        _
      // Predicated region
      $region81: #{cnn_encoder_forward.1} parent=11 // pred_check
        %p842 = pneg %p477
      $region82: #{cnn_encoder_forward.1} parent=11 // pred_check_branch
        %844 = sbr.rel (%p842) target = $region84
      $region83: #{cnn_encoder_forward.1} parent=11 // pred_region
        _
      $region84: #{cnn_encoder_forward.1} parent=11 // pred_fallthru
        _
      // Predicated region
      $region85: #{cnn_encoder_forward.1} parent=11 // pred_check
        %p845 = pneg %p498
      $region86: #{cnn_encoder_forward.1} parent=11 // pred_check_branch
        %847 = sbr.rel (%p845) target = $region88
      $region87: #{cnn_encoder_forward.1} parent=11 // pred_region
        _
      $region88: #{cnn_encoder_forward.1} parent=11 // pred_fallthru
        _
      // Predicated region
      $region89: #{cnn_encoder_forward.1} parent=11 // pred_check
        %p848 = pneg %p519
      $region90: #{cnn_encoder_forward.1} parent=11 // pred_check_branch
        %850 = sbr.rel (%p848) target = $region92
      $region91: #{cnn_encoder_forward.1} parent=11 // pred_region
        _
      $region92: #{cnn_encoder_forward.1} parent=11 // pred_fallthru
        _
      // Predicated region
      $region93: #{cnn_encoder_forward.1} parent=11 // pred_check
        %p851 = pneg %p540
      $region94: #{cnn_encoder_forward.1} parent=11 // pred_check_branch
        %853 = sbr.rel (%p851) target = $region96
      $region95: #{cnn_encoder_forward.1} parent=11 // pred_region
        _
      $region96: #{cnn_encoder_forward.1} parent=11 // pred_fallthru
        _
      // Predicated region
      $region97: #{cnn_encoder_forward.1} parent=11 // pred_check
        %p854 = pneg %p561
      $region98: #{cnn_encoder_forward.1} parent=11 // pred_check_branch
        %856 = sbr.rel (%p854) target = $region100
      $region99: #{cnn_encoder_forward.1} parent=11 // pred_region
        _
      $region100: #{cnn_encoder_forward.1} parent=11 // pred_fallthru
        _
      // Predicated region
      $region101: #{cnn_encoder_forward.1} parent=11 // pred_check
        %p857 = pneg %p582
      $region102: #{cnn_encoder_forward.1} parent=11 // pred_check_branch
        %859 = sbr.rel (%p857) target = $region104
      $region103: #{cnn_encoder_forward.1} parent=11 // pred_region
        _
      $region104: #{cnn_encoder_forward.1} parent=11 // pred_fallthru
        _
      // Predicated region
      $region105: #{cnn_encoder_forward.1} parent=11 // pred_check
        %p860 = pneg %p603
      $region106: #{cnn_encoder_forward.1} parent=11 // pred_check_branch
        %862 = sbr.rel (%p860) target = $region108
      $region107: #{cnn_encoder_forward.1} parent=11 // pred_region
        _
      $region108: #{cnn_encoder_forward.1} parent=11 // pred_fallthru
        _
      // Predicated region
      $region109: #{cnn_encoder_forward.1} parent=11 // pred_check
        %p863 = pneg %p624
      $region110: #{cnn_encoder_forward.1} parent=11 // pred_check_branch
        %865 = sbr.rel (%p863) target = $region112
      $region111: #{cnn_encoder_forward.1} parent=11 // pred_region
        _
      $region112: #{cnn_encoder_forward.1} parent=11 // pred_fallthru
        _
      // Predicated region
      $region113: #{cnn_encoder_forward.1} parent=11 // pred_check
        %p866 = pneg %p645
      $region114: #{cnn_encoder_forward.1} parent=11 // pred_check_branch
        %868 = sbr.rel (%p866) target = $region116
      $region115: #{cnn_encoder_forward.1} parent=11 // pred_region
        _
      $region116: #{cnn_encoder_forward.1} parent=11 // pred_fallthru
        _
      // Predicated region
      $region117: #{cnn_encoder_forward.1} parent=11 // pred_check
        %p869 = pneg %p666
      $region118: #{cnn_encoder_forward.1} parent=11 // pred_check_branch
        %871 = sbr.rel (%p869) target = $region120
      $region119: #{cnn_encoder_forward.1} parent=11 // pred_region
        _
      $region120: #{cnn_encoder_forward.1} parent=11 // pred_fallthru
        _
      // Predicated region
      $region121: #{cnn_encoder_forward.1} parent=11 // pred_check
        %p872 = pneg %p687
      $region122: #{cnn_encoder_forward.1} parent=11 // pred_check_branch
        %874 = sbr.rel (%p872) target = $region124
      $region123: #{cnn_encoder_forward.1} parent=11 // pred_region
        _
      $region124: #{cnn_encoder_forward.1} parent=11 // pred_fallthru
        _
      // Predicated region
      $region125: #{cnn_encoder_forward.1} parent=11 // pred_check
        %p875 = pneg %p708
      $region126: #{cnn_encoder_forward.1} parent=11 // pred_check_branch
        %877 = sbr.rel (%p875) target = $region128
      $region127: #{cnn_encoder_forward.1} parent=11 // pred_region
        _
      $region128: #{cnn_encoder_forward.1} parent=11 // pred_fallthru
        _
      // Predicated region
      $region129: #{cnn_encoder_forward.1} parent=11 // pred_check
        %p878 = pneg %p729
      $region130: #{cnn_encoder_forward.1} parent=11 // pred_check_branch
        %880 = sbr.rel (%p878) target = $region132
      $region131: #{cnn_encoder_forward.1} parent=11 // pred_region
        _
      $region132: #{cnn_encoder_forward.1} parent=11 // pred_fallthru
        _
      // Predicated region
      $region133: #{cnn_encoder_forward.1} parent=11 // pred_check
        %p881 = pneg %p750
      $region134: #{cnn_encoder_forward.1} parent=11 // pred_check_branch
        %883 = sbr.rel (%p881) target = $region136
      $region135: #{cnn_encoder_forward.1} parent=11 // pred_region
        _
      $region136: #{cnn_encoder_forward.1} parent=11 // pred_fallthru
        _
    $region12: #{cnn_encoder_forward.1} parent=5 // pred_fallthru
      _
    %p884 = scmp.lt.s32.totalorder %s73, 2
    // Predicated region
    $region137: #{cnn_encoder_forward.1} parent=5 // pred_check
      %p885 = pneg %p884
    $region138: #{cnn_encoder_forward.1} parent=5 // pred_check_branch
      %887 = sbr.rel (%p885) target = $region140
    $region139: #{cnn_encoder_forward.1} parent=5 // pred_region
      // Predicated region
      $region141: #{cnn_encoder_forward.1} parent=139 // pred_check
        %p888 = pneg %p93
      $region142: #{cnn_encoder_forward.1} parent=139 // pred_check_branch
        %890 = sbr.rel (%p888) target = $region144
      $region143: #{cnn_encoder_forward.1} parent=139 // pred_region
        %p891 = scmp.lt.s32.totalorder %s73, 1
        %s892 = scalar_select %p891, %s73, 1
        %s893 = smul.addr %s892, 8
        %s894 = smul.addr %s893, 8
        %s895 = scalar_lea.vmem %s1, %s894
      $region144: #{cnn_encoder_forward.1} parent=139 // pred_fallthru
        _
    $region140: #{cnn_encoder_forward.1} parent=5 // pred_fallthru
      _
    %p896 = scmp.le.s32.totalorder 1, %s73
    %p897 = scmp.lt.s32.totalorder %s73, 3
    %p898 = pnand %p896, %p897
    %p899 = pneg %p898
    // Predicated region
    $region145: #{cnn_encoder_forward.1} parent=5 // pred_check
      _
    $region146: #{cnn_encoder_forward.1} parent=5 // pred_check_branch
      %901 = sbr.rel (%p898) target = $region148
    $region147: #{cnn_encoder_forward.1} parent=5 // pred_region
      %s902 = ssub.s32 %s73, 1
      %p903 = scmp.lt.s32.totalorder %s78, 1
      %s904 = scalar_select %p903, %s78, 1
      %s905 = smul.addr %s904, 8
      %s906 = smul.addr %s905, 8
      %s907 = scalar_lea.vmem %s1, %s906
      %p908 = pneg %p99
      %p909 = pneg %p96
      %p910 = pneg %p120
      %p911 = pneg %p117
      %p912 = pneg %p141
      %p913 = pneg %p138
      %p914 = pneg %p162
      %p915 = pneg %p159
      %p916 = pneg %p183
      %p917 = pneg %p180
      %p918 = pneg %p204
      %p919 = pneg %p201
      %p920 = pneg %p225
      %p921 = pneg %p222
      %p922 = pneg %p246
      %p923 = pneg %p243
      %p924 = pneg %p267
      %p925 = pneg %p264
      %p926 = pneg %p288
      %p927 = pneg %p285
      %p928 = pneg %p309
      %p929 = pneg %p306
      %p930 = pneg %p330
      %p931 = pneg %p327
      %p932 = pneg %p351
      %p933 = pneg %p348
      %p934 = pneg %p372
      %p935 = pneg %p369
      %p936 = pneg %p393
      %p937 = pneg %p390
      %p938 = pneg %p414
      %p939 = pneg %p411
      %p940 = pneg %p435
      %p941 = pneg %p432
      %p942 = pneg %p456
      %p943 = pneg %p453
      %p944 = pneg %p477
      %p945 = pneg %p474
      %p946 = pneg %p498
      %p947 = pneg %p495
      %p948 = pneg %p519
      %p949 = pneg %p516
      %p950 = pneg %p540
      %p951 = pneg %p537
      %p952 = pneg %p561
      %p953 = pneg %p558
      %p954 = pneg %p582
      %p955 = pneg %p579
      %p956 = pneg %p603
      %p957 = pneg %p600
      %p958 = pneg %p624
      %p959 = pneg %p621
      %p960 = pneg %p645
      %p961 = pneg %p642
      %p962 = pneg %p666
      %p963 = pneg %p663
      %p964 = pneg %p687
      %p965 = pneg %p684
      %p966 = pneg %p708
      %p967 = pneg %p705
      %p968 = pneg %p729
      %p969 = pneg %p726
      %p970 = pneg %p750
      %p971 = pneg %p747
      %p972 = pneg %p776
      %p973 = pneg %p773
      %p974 = scmp.lt.s32.totalorder %s78, 1
      %s975 = scalar_select %p974, %s78, 1
      %s976 = smul.addr %s975, 2
      %s977 = smul.addr %s976, 8
      %s978 = scalar_lea.vmem %s65, %s977
      %p979 = scmp.lt.s32.totalorder %s78, 1
      %s980 = scalar_select %p979, %s78, 1
      %s981 = smul.addr %s980, 8
      %s982 = smul.addr %s981, 8
      %s983 = scalar_lea.vmem %s1, %s982
      %p984 = scmp.lt.s32.totalorder %s78, 1
      %s985 = scalar_select %p984, %s78, 1
      %s986 = smul.addr %s985, 2
      %s987 = smul.addr %s986, 8
      %s988 = scalar_lea.vmem %s65, %s987
      %v989 = vld [vmem:[%s983] sm:$0xff]
      %v990 = vld [vmem:[%s983 + $0x8] sm:$0xff]
      %v991 = vld [vmem:[%s983 + $0x10] sm:$0xff]
      %v992 = vld [vmem:[%s983 + $0x18] sm:$0xff]
      %v993 = vld [vmem:[%s983 + $0x20] sm:$0xff]
      %v994 = vld [vmem:[%s983 + $0x28] sm:$0xff]
      %v995 = vld [vmem:[%s983 + $0x30] sm:$0xff]
      %v996 = vld [vmem:[%s983 + $0x38] sm:$0xff]
      %v997 = vld [vmem:[%s3] sm:$0xff]
      %v998 = vld [vmem:[%s3 + $0x8] sm:$0xff]
      %v999 = vld [vmem:[%s3 + $0x10] sm:$0xff]
      %v1000 = vld [vmem:[%s3 + $0x18] sm:$0xff]
      %v1001 = vld [vmem:[%s3 + $0x20] sm:$0xff]
      %v1002 = vld [vmem:[%s3 + $0x28] sm:$0xff]
      %v1003 = vld [vmem:[%s3 + $0x30] sm:$0xff]
      %v1004 = vld [vmem:[%s3 + $0x38] sm:$0xff]
      %v1005 = vld [vmem:[%s3 + $0x40] sm:$0xff]
      %v1006 = vld [vmem:[%s3 + $0x48] sm:$0xff]
      %v1007 = vld [vmem:[%s3 + $0x50] sm:$0xff]
      %v1008 = vld [vmem:[%s3 + $0x58] sm:$0xff]
      %v1009 = vld [vmem:[%s3 + $0x60] sm:$0xff]
      %v1010 = vld [vmem:[%s3 + $0x68] sm:$0xff]
      %v1011 = vld [vmem:[%s3 + $0x70] sm:$0xff]
      %v1012 = vld [vmem:[%s3 + $0x78] sm:$0xff]
      %v1013 = vld [vmem:[%s3 + $0x80] sm:$0xff]
      %v1014 = vld [vmem:[%s3 + $0x88] sm:$0xff]
      %v1015 = vld [vmem:[%s3 + $0x90] sm:$0xff]
      %v1016 = vld [vmem:[%s3 + $0x98] sm:$0xff]
      %v1017 = vld [vmem:[%s3 + $0xa0] sm:$0xff]
      %v1018 = vld [vmem:[%s3 + $0xa8] sm:$0xff]
      %v1019 = vld [vmem:[%s3 + $0xb0] sm:$0xff]
      %v1020 = vld [vmem:[%s3 + $0xb8] sm:$0xff]
      %vm1021 = vcmask 523264
      %v1023 = vsel %vm1021, %v997, 0
      %v1026 = vsel %vm1021, %v998, 0
      %v1029 = vsel %vm1021, %v999, 0
      %v1032 = vsel %vm1021, %v1000, 0
      %v1035 = vsel %vm1021, %v1001, 0
      %v1038 = vsel %vm1021, %v1002, 0
      %v1041 = vsel %vm1021, %v1003, 0
      %v1044 = vsel %vm1021, %v1004, 0
      %v1047 = vsel %vm1021, %v1005, 0
      %v1050 = vsel %vm1021, %v1006, 0
      %v1053 = vsel %vm1021, %v1007, 0
      %v1056 = vsel %vm1021, %v1008, 0
      %v1059 = vsel %vm1021, %v1009, 0
      %v1062 = vsel %vm1021, %v1010, 0
      %v1065 = vsel %vm1021, %v1011, 0
      %v1068 = vsel %vm1021, %v1012, 0
      %v1071 = vsel %vm1021, %v1013, 0
      %v1074 = vsel %vm1021, %v1014, 0
      %v1077 = vsel %vm1021, %v1015, 0
      %v1080 = vsel %vm1021, %v1016, 0
      %v1083 = vsel %vm1021, %v1017, 0
      %v1086 = vsel %vm1021, %v1018, 0
      %v1089 = vsel %vm1021, %v1019, 0
      %v1092 = vsel %vm1021, %v1020, 0
      %1094 = vmatprep.subr.mxu0 0.0
      %1095 = vmatpush1.msra.mxu0 %v989
      %1096 = vmatprep.subr.mxu0 0.0
      %1097 = vmatpush1.msra.mxu0 %v990
      %1098 = vmatprep.subr.mxu0 0.0
      %1099 = vmatpush1.msra.mxu0 %v991
      %1100 = vmatprep.subr.mxu0 0.0
      %1101 = vmatpush1.msra.mxu0 %v992
      %1102 = vmatprep.subr.mxu0 0.0
      %1103 = vmatpush1.msra.mxu0 %v993
      %1104 = vmatprep.subr.mxu0 0.0
      %1105 = vmatpush1.msra.mxu0 %v994
      %1106 = vmatprep.subr.mxu0 0.0
      %1107 = vmatpush1.msra.mxu0 %v995
      %1108 = vmatprep.subr.mxu0 0.0
      %1109 = vmatpush1.msra.mxu0 %v996
      %1110 = vmatprep.subr.mxu0 0.0
      %1111 = vmatpush1.msra.mxu0 0.0
      %1112 = vmatprep.subr.mxu0 0.0
      %1113 = vmatpush1.msra.mxu0 0.0
      %1114 = vmatprep.subr.mxu0 0.0
      %1115 = vmatpush1.msra.mxu0 0.0
      %1116 = vmatprep.subr.mxu0 0.0
      %1117 = vmatpush1.msra.mxu0 0.0
      %1118 = vmatprep.subr.mxu0 0.0
      %1119 = vmatpush1.msra.mxu0 0.0
      %1120 = vmatprep.subr.mxu0 0.0
      %1121 = vmatpush1.msra.mxu0 0.0
      %1122 = vmatprep.subr.mxu0 0.0
      %1123 = vmatpush1.msra.mxu0 0.0
      %1124 = vmatprep.subr.mxu0 0.0
      %1125 = vmatpush1.msra.mxu0 0.0
      %1126 = vmatprep.subr.mxu0 0.0
      %1127 = vmatpush1.msra.mxu0 0.0
      %1128 = vmatprep.subr.mxu0 0.0
      %1129 = vmatpush1.msra.mxu0 0.0
      %1130 = vmatprep.subr.mxu0 0.0
      %1131 = vmatpush1.msra.mxu0 0.0
      %1132 = vmatprep.subr.mxu0 0.0
      %1133 = vmatpush1.msra.mxu0 0.0
      %1134 = vmatprep.subr.mxu0 0.0
      %1135 = vmatpush1.msra.mxu0 0.0
      %1136 = vmatprep.subr.mxu0 0.0
      %1137 = vmatpush1.msra.mxu0 0.0
      %1138 = vmatprep.subr.mxu0 0.0
      %1139 = vmatpush1.msra.mxu0 0.0
      %1140 = vmatprep.subr.mxu0 0.0
      %1141 = vmatpush1.msra.mxu0 0.0
      %1142 = vmatprep.subr.mxu0 0.0
      %1143 = vmatpush1.msra.mxu0 0.0
      %1144 = vmatprep.subr.mxu0 0.0
      %1145 = vmatpush1.msra.mxu0 0.0
      %1146 = vmatprep.subr.mxu0 0.0
      %1147 = vmatpush1.msra.mxu0 0.0
      %1148 = vmatprep.subr.mxu0 0.0
      %1149 = vmatpush1.msra.mxu0 0.0
      %1150 = vmatprep.subr.mxu0 0.0
      %1151 = vmatpush1.msra.mxu0 0.0
      %1152 = vmatprep.subr.mxu0 0.0
      %1153 = vmatpush1.msra.mxu0 0.0
      %1154 = vmatprep.subr.mxu0 0.0
      %1155 = vmatpush1.msra.mxu0 0.0
      %1156 = vmatprep.subr.mxu0 0.0
      %1157 = vmatpush1.msra.mxu0 0.0
      %1158 = vmatprep.mubr.f32.mxu0 0.0
      %1159 = vmatmul.mubr.f32.gmra.mrb[0].mxu0 %v1023
      %v1160 = vpop.f32.mrb[0].mxu0
      %v1161 = vadd.f32 0.0, %v1160
      %v1162 = vpop.f32.mrb[0].mxu0
      %1163 = vmatprep.mubr.f32.mxu0 0.0
      %1164 = vmatmul.mubr.f32.gmra.mrb[0].mxu0 %v1026
      %v1165 = vpop.f32.mrb[0].mxu0
      %v1166 = vadd.f32 0.0, %v1165
      %v1167 = vpop.f32.mrb[0].mxu0
      %1168 = vmatprep.mubr.f32.mxu0 0.0
      %1169 = vmatmul.mubr.f32.gmra.mrb[0].mxu0 %v1029
      %v1170 = vpop.f32.mrb[0].mxu0
      %v1171 = vadd.f32 0.0, %v1170
      %v1172 = vpop.f32.mrb[0].mxu0
      %1173 = vmatprep.mubr.f32.mxu0 0.0
      %1174 = vmatmul.mubr.f32.gmra.mrb[0].mxu0 %v1032
      %v1175 = vpop.f32.mrb[0].mxu0
      %v1176 = vadd.f32 0.0, %v1175
      %v1177 = vpop.f32.mrb[0].mxu0
      %1178 = vmatprep.mubr.f32.mxu0 0.0
      %1179 = vmatmul.mubr.f32.gmra.mrb[0].mxu0 %v1035
      %v1180 = vpop.f32.mrb[0].mxu0
      %v1181 = vadd.f32 0.0, %v1180
      %v1182 = vpop.f32.mrb[0].mxu0
      %1183 = vmatprep.mubr.f32.mxu0 0.0
      %1184 = vmatmul.mubr.f32.gmra.mrb[0].mxu0 %v1038
      %v1185 = vpop.f32.mrb[0].mxu0
      %v1186 = vadd.f32 0.0, %v1185
      %v1187 = vpop.f32.mrb[0].mxu0
      %1188 = vmatprep.mubr.f32.mxu0 0.0
      %1189 = vmatmul.mubr.f32.gmra.mrb[0].mxu0 %v1041
      %v1190 = vpop.f32.mrb[0].mxu0
      %v1191 = vadd.f32 0.0, %v1190
      %v1192 = vpop.f32.mrb[0].mxu0
      %1193 = vmatprep.mubr.f32.mxu0 0.0
      %1194 = vmatmul.mubr.f32.gmra.mrb[0].mxu0 %v1044
      %v1195 = vpop.f32.mrb[0].mxu0
      %v1196 = vadd.f32 0.0, %v1195
      %v1197 = vpop.f32.mrb[0].mxu0
      %1198 = vmatprep.mubr.f32.mxu0 0.0
      %1199 = vmatmul.mubr.f32.gmra.mrb[0].mxu0 %v1047
      %v1200 = vpop.f32.mrb[0].mxu0
      %v1201 = vadd.f32 0.0, %v1200
      %v1202 = vpop.f32.mrb[0].mxu0
      %1203 = vmatprep.mubr.f32.mxu0 0.0
      %1204 = vmatmul.mubr.f32.gmra.mrb[0].mxu0 %v1050
      %v1205 = vpop.f32.mrb[0].mxu0
      %v1206 = vadd.f32 0.0, %v1205
      %v1207 = vpop.f32.mrb[0].mxu0
      %1208 = vmatprep.mubr.f32.mxu0 0.0
      %1209 = vmatmul.mubr.f32.gmra.mrb[0].mxu0 %v1053
      %v1210 = vpop.f32.mrb[0].mxu0
      %v1211 = vadd.f32 0.0, %v1210
      %v1212 = vpop.f32.mrb[0].mxu0
      %1213 = vmatprep.mubr.f32.mxu0 0.0
      %1214 = vmatmul.mubr.f32.gmra.mrb[0].mxu0 %v1056
      %v1215 = vpop.f32.mrb[0].mxu0
      %v1216 = vadd.f32 0.0, %v1215
      %v1217 = vpop.f32.mrb[0].mxu0
      %1218 = vmatprep.mubr.f32.mxu0 0.0
      %1219 = vmatmul.mubr.f32.gmra.mrb[0].mxu0 %v1059
      %v1220 = vpop.f32.mrb[0].mxu0
      %v1221 = vadd.f32 0.0, %v1220
      %v1222 = vpop.f32.mrb[0].mxu0
      %1223 = vmatprep.mubr.f32.mxu0 0.0
      %1224 = vmatmul.mubr.f32.gmra.mrb[0].mxu0 %v1062
      %v1225 = vpop.f32.mrb[0].mxu0
      %v1226 = vadd.f32 0.0, %v1225
      %v1227 = vpop.f32.mrb[0].mxu0
      %1228 = vmatprep.mubr.f32.mxu0 0.0
      %1229 = vmatmul.mubr.f32.gmra.mrb[0].mxu0 %v1065
      %v1230 = vpop.f32.mrb[0].mxu0
      %v1231 = vadd.f32 0.0, %v1230
      %v1232 = vpop.f32.mrb[0].mxu0
      %1233 = vmatprep.mubr.f32.mxu0 0.0
      %1234 = vmatmul.mubr.f32.gmra.mrb[0].mxu0 %v1068
      %v1235 = vpop.f32.mrb[0].mxu0
      %v1236 = vadd.f32 0.0, %v1235
      %v1237 = vpop.f32.mrb[0].mxu0
      %1238 = vmatprep.mubr.f32.mxu0 0.0
      %1239 = vmatmul.mubr.f32.gmra.mrb[0].mxu0 %v1071
      %v1240 = vpop.f32.mrb[0].mxu0
      %v1241 = vadd.f32 0.0, %v1240
      %v1242 = vpop.f32.mrb[0].mxu0
      %1243 = vmatprep.mubr.f32.mxu0 0.0
      %1244 = vmatmul.mubr.f32.gmra.mrb[0].mxu0 %v1074
      %v1245 = vpop.f32.mrb[0].mxu0
      %v1246 = vadd.f32 0.0, %v1245
      %v1247 = vpop.f32.mrb[0].mxu0
      %1248 = vmatprep.mubr.f32.mxu0 0.0
      %1249 = vmatmul.mubr.f32.gmra.mrb[0].mxu0 %v1077
      %v1250 = vpop.f32.mrb[0].mxu0
      %v1251 = vadd.f32 0.0, %v1250
      %v1252 = vpop.f32.mrb[0].mxu0
      %1253 = vmatprep.mubr.f32.mxu0 0.0
      %1254 = vmatmul.mubr.f32.gmra.mrb[0].mxu0 %v1080
      %v1255 = vpop.f32.mrb[0].mxu0
      %v1256 = vadd.f32 0.0, %v1255
      %v1257 = vpop.f32.mrb[0].mxu0
      %1258 = vmatprep.mubr.f32.mxu0 0.0
      %1259 = vmatmul.mubr.f32.gmra.mrb[0].mxu0 %v1083
      %v1260 = vpop.f32.mrb[0].mxu0
      %v1261 = vadd.f32 0.0, %v1260
      %v1262 = vpop.f32.mrb[0].mxu0
      %1263 = vmatprep.mubr.f32.mxu0 0.0
      %1264 = vmatmul.mubr.f32.gmra.mrb[0].mxu0 %v1086
      %v1265 = vpop.f32.mrb[0].mxu0
      %v1266 = vadd.f32 0.0, %v1265
      %v1267 = vpop.f32.mrb[0].mxu0
      %1268 = vmatprep.mubr.f32.mxu0 0.0
      %1269 = vmatmul.mubr.f32.gmra.mrb[0].mxu0 %v1089
      %v1270 = vpop.f32.mrb[0].mxu0
      %v1271 = vadd.f32 0.0, %v1270
      %v1272 = vpop.f32.mrb[0].mxu0
      %1273 = vmatprep.mubr.f32.mxu0 0.0
      %1274 = vmatmul.mubr.f32.gmra.mrb[0].mxu0 %v1092
      %v1275 = vpop.f32.mrb[0].mxu0
      %v1276 = vadd.f32 0.0, %v1275
      %v1277 = vpop.f32.mrb[0].mxu0
      %1278 = vdwg.mxu0
      %v1279 = vld [vmem:[%s5] sm:$0xff]
      %v1280 = vld [vmem:[%s5 + $0x8] sm:$0xff]
      %v1281 = vld [vmem:[%s5 + $0x10] sm:$0xff]
      %v1282 = vld [vmem:[%s5 + $0x18] sm:$0xff]
      %v1283 = vld [vmem:[%s5 + $0x20] sm:$0xff]
      %v1284 = vld [vmem:[%s5 + $0x28] sm:$0xff]
      %v1285 = vld [vmem:[%s5 + $0x30] sm:$0xff]
      %v1286 = vld [vmem:[%s5 + $0x38] sm:$0xff]
      %v1287 = vld [vmem:[%s5 + $0x40] sm:$0xff]
      %v1288 = vld [vmem:[%s5 + $0x48] sm:$0xff]
      %v1289 = vld [vmem:[%s5 + $0x50] sm:$0xff]
      %v1290 = vld [vmem:[%s5 + $0x58] sm:$0xff]
      %v1291 = vld [vmem:[%s5 + $0x60] sm:$0xff]
      %v1292 = vld [vmem:[%s5 + $0x68] sm:$0xff]
      %v1293 = vld [vmem:[%s5 + $0x70] sm:$0xff]
      %v1294 = vld [vmem:[%s5 + $0x78] sm:$0xff]
      %v1295 = vld [vmem:[%s5 + $0x80] sm:$0xff]
      %v1296 = vld [vmem:[%s5 + $0x88] sm:$0xff]
      %v1297 = vld [vmem:[%s5 + $0x90] sm:$0xff]
      %v1298 = vld [vmem:[%s5 + $0x98] sm:$0xff]
      %v1299 = vld [vmem:[%s5 + $0xa0] sm:$0xff]
      %v1300 = vld [vmem:[%s5 + $0xa8] sm:$0xff]
      %v1301 = vld [vmem:[%s5 + $0xb0] sm:$0xff]
      %v1302 = vld [vmem:[%s5 + $0xb8] sm:$0xff]
      %v1304 = vsel %vm1021, %v1279, 0
      %v1307 = vsel %vm1021, %v1280, 0
      %v1310 = vsel %vm1021, %v1281, 0
      %v1313 = vsel %vm1021, %v1282, 0
      %v1316 = vsel %vm1021, %v1283, 0
      %v1319 = vsel %vm1021, %v1284, 0
      %v1322 = vsel %vm1021, %v1285, 0
      %v1325 = vsel %vm1021, %v1286, 0
      %v1328 = vsel %vm1021, %v1287, 0
      %v1331 = vsel %vm1021, %v1288, 0
      %v1334 = vsel %vm1021, %v1289, 0
      %v1337 = vsel %vm1021, %v1290, 0
      %v1340 = vsel %vm1021, %v1291, 0
      %v1343 = vsel %vm1021, %v1292, 0
      %v1346 = vsel %vm1021, %v1293, 0
      %v1349 = vsel %vm1021, %v1294, 0
      %v1352 = vsel %vm1021, %v1295, 0
      %v1355 = vsel %vm1021, %v1296, 0
      %v1358 = vsel %vm1021, %v1297, 0
      %v1361 = vsel %vm1021, %v1298, 0
      %v1364 = vsel %vm1021, %v1299, 0
      %v1367 = vsel %vm1021, %v1300, 0
      %v1370 = vsel %vm1021, %v1301, 0
      %v1373 = vsel %vm1021, %v1302, 0
      %1375 = vmatprep.subr.mxu0 0.0
      %1376 = vmatpush1.msra.mxu0 %v989
      %1377 = vmatprep.subr.mxu0 0.0
      %1378 = vmatpush1.msra.mxu0 %v990
      %1379 = vmatprep.subr.mxu0 0.0
      %1380 = vmatpush1.msra.mxu0 %v991
      %1381 = vmatprep.subr.mxu0 0.0
      %1382 = vmatpush1.msra.mxu0 %v992
      %1383 = vmatprep.subr.mxu0 0.0
      %1384 = vmatpush1.msra.mxu0 %v993
      %1385 = vmatprep.subr.mxu0 0.0
      %1386 = vmatpush1.msra.mxu0 %v994
      %1387 = vmatprep.subr.mxu0 0.0
      %1388 = vmatpush1.msra.mxu0 %v995
      %1389 = vmatprep.subr.mxu0 0.0
      %1390 = vmatpush1.msra.mxu0 %v996
      %1391 = vmatprep.subr.mxu0 0.0
      %1392 = vmatpush1.msra.mxu0 0.0
      %1393 = vmatprep.subr.mxu0 0.0
      %1394 = vmatpush1.msra.mxu0 0.0
      %1395 = vmatprep.subr.mxu0 0.0
      %1396 = vmatpush1.msra.mxu0 0.0
      %1397 = vmatprep.subr.mxu0 0.0
      %1398 = vmatpush1.msra.mxu0 0.0
      %1399 = vmatprep.subr.mxu0 0.0
      %1400 = vmatpush1.msra.mxu0 0.0
      %1401 = vmatprep.subr.mxu0 0.0
      %1402 = vmatpush1.msra.mxu0 0.0
      %1403 = vmatprep.subr.mxu0 0.0
      %1404 = vmatpush1.msra.mxu0 0.0
      %1405 = vmatprep.subr.mxu0 0.0
      %1406 = vmatpush1.msra.mxu0 0.0
      %1407 = vmatprep.subr.mxu0 0.0
      %1408 = vmatpush1.msra.mxu0 0.0
      %1409 = vmatprep.subr.mxu0 0.0
      %1410 = vmatpush1.msra.mxu0 0.0
      %1411 = vmatprep.subr.mxu0 0.0
      %1412 = vmatpush1.msra.mxu0 0.0
      %1413 = vmatprep.subr.mxu0 0.0
      %1414 = vmatpush1.msra.mxu0 0.0
      %1415 = vmatprep.subr.mxu0 0.0
      %1416 = vmatpush1.msra.mxu0 0.0
      %1417 = vmatprep.subr.mxu0 0.0
      %1418 = vmatpush1.msra.mxu0 0.0
      %1419 = vmatprep.subr.mxu0 0.0
      %1420 = vmatpush1.msra.mxu0 0.0
      %1421 = vmatprep.subr.mxu0 0.0
      %1422 = vmatpush1.msra.mxu0 0.0
      %1423 = vmatprep.subr.mxu0 0.0
      %1424 = vmatpush1.msra.mxu0 0.0
      %1425 = vmatprep.subr.mxu0 0.0
      %1426 = vmatpush1.msra.mxu0 0.0
      %1427 = vmatprep.subr.mxu0 0.0
      %1428 = vmatpush1.msra.mxu0 0.0
      %1429 = vmatprep.subr.mxu0 0.0
      %1430 = vmatpush1.msra.mxu0 0.0
      %1431 = vmatprep.subr.mxu0 0.0
      %1432 = vmatpush1.msra.mxu0 0.0
      %1433 = vmatprep.subr.mxu0 0.0
      %1434 = vmatpush1.msra.mxu0 0.0
      %1435 = vmatprep.subr.mxu0 0.0
      %1436 = vmatpush1.msra.mxu0 0.0
      %1437 = vmatprep.subr.mxu0 0.0
      %1438 = vmatpush1.msra.mxu0 0.0
      %1439 = vmatprep.mubr.f32.mxu0 0.0
      %1440 = vmatmul.mubr.f32.gmra.mrb[0].mxu0 %v1304
      %v1441 = vpop.f32.mrb[0].mxu0
      %v1442 = vadd.f32 0.0, %v1441
      %v1443 = vpop.f32.mrb[0].mxu0
      %1444 = vmatprep.mubr.f32.mxu0 0.0
      %1445 = vmatmul.mubr.f32.gmra.mrb[0].mxu0 %v1307
      %v1446 = vpop.f32.mrb[0].mxu0
      %v1447 = vadd.f32 0.0, %v1446
      %v1448 = vpop.f32.mrb[0].mxu0
      %1449 = vmatprep.mubr.f32.mxu0 0.0
      %1450 = vmatmul.mubr.f32.gmra.mrb[0].mxu0 %v1310
      %v1451 = vpop.f32.mrb[0].mxu0
      %v1452 = vadd.f32 0.0, %v1451
      %v1453 = vpop.f32.mrb[0].mxu0
      %1454 = vmatprep.mubr.f32.mxu0 0.0
      %1455 = vmatmul.mubr.f32.gmra.mrb[0].mxu0 %v1313
      %v1456 = vpop.f32.mrb[0].mxu0
      %v1457 = vadd.f32 0.0, %v1456
      %v1458 = vpop.f32.mrb[0].mxu0
      %1459 = vmatprep.mubr.f32.mxu0 0.0
      %1460 = vmatmul.mubr.f32.gmra.mrb[0].mxu0 %v1316
      %v1461 = vpop.f32.mrb[0].mxu0
      %v1462 = vadd.f32 0.0, %v1461
      %v1463 = vpop.f32.mrb[0].mxu0
      %1464 = vmatprep.mubr.f32.mxu0 0.0
      %1465 = vmatmul.mubr.f32.gmra.mrb[0].mxu0 %v1319
      %v1466 = vpop.f32.mrb[0].mxu0
      %v1467 = vadd.f32 0.0, %v1466
      %v1468 = vpop.f32.mrb[0].mxu0
      %1469 = vmatprep.mubr.f32.mxu0 0.0
      %1470 = vmatmul.mubr.f32.gmra.mrb[0].mxu0 %v1322
      %v1471 = vpop.f32.mrb[0].mxu0
      %v1472 = vadd.f32 0.0, %v1471
      %v1473 = vpop.f32.mrb[0].mxu0
      %1474 = vmatprep.mubr.f32.mxu0 0.0
      %1475 = vmatmul.mubr.f32.gmra.mrb[0].mxu0 %v1325
      %v1476 = vpop.f32.mrb[0].mxu0
      %v1477 = vadd.f32 0.0, %v1476
      %v1478 = vpop.f32.mrb[0].mxu0
      %1479 = vmatprep.mubr.f32.mxu0 0.0
      %1480 = vmatmul.mubr.f32.gmra.mrb[0].mxu0 %v1328
      %v1481 = vpop.f32.mrb[0].mxu0
      %v1482 = vadd.f32 0.0, %v1481
      %v1483 = vpop.f32.mrb[0].mxu0
      %1484 = vmatprep.mubr.f32.mxu0 0.0
      %1485 = vmatmul.mubr.f32.gmra.mrb[0].mxu0 %v1331
      %v1486 = vpop.f32.mrb[0].mxu0
      %v1487 = vadd.f32 0.0, %v1486
      %v1488 = vpop.f32.mrb[0].mxu0
      %1489 = vmatprep.mubr.f32.mxu0 0.0
      %1490 = vmatmul.mubr.f32.gmra.mrb[0].mxu0 %v1334
      %v1491 = vpop.f32.mrb[0].mxu0
      %v1492 = vadd.f32 0.0, %v1491
      %v1493 = vpop.f32.mrb[0].mxu0
      %1494 = vmatprep.mubr.f32.mxu0 0.0
      %1495 = vmatmul.mubr.f32.gmra.mrb[0].mxu0 %v1337
      %v1496 = vpop.f32.mrb[0].mxu0
      %v1497 = vadd.f32 0.0, %v1496
      %v1498 = vpop.f32.mrb[0].mxu0
      %1499 = vmatprep.mubr.f32.mxu0 0.0
      %1500 = vmatmul.mubr.f32.gmra.mrb[0].mxu0 %v1340
      %v1501 = vpop.f32.mrb[0].mxu0
      %v1502 = vadd.f32 0.0, %v1501
      %v1503 = vpop.f32.mrb[0].mxu0
      %1504 = vmatprep.mubr.f32.mxu0 0.0
      %1505 = vmatmul.mubr.f32.gmra.mrb[0].mxu0 %v1343
      %v1506 = vpop.f32.mrb[0].mxu0
      %v1507 = vadd.f32 0.0, %v1506
      %v1508 = vpop.f32.mrb[0].mxu0
      %1509 = vmatprep.mubr.f32.mxu0 0.0
      %1510 = vmatmul.mubr.f32.gmra.mrb[0].mxu0 %v1346
      %v1511 = vpop.f32.mrb[0].mxu0
      %v1512 = vadd.f32 0.0, %v1511
      %v1513 = vpop.f32.mrb[0].mxu0
      %1514 = vmatprep.mubr.f32.mxu0 0.0
      %1515 = vmatmul.mubr.f32.gmra.mrb[0].mxu0 %v1349
      %v1516 = vpop.f32.mrb[0].mxu0
      %v1517 = vadd.f32 0.0, %v1516
      %v1518 = vpop.f32.mrb[0].mxu0
      %1519 = vmatprep.mubr.f32.mxu0 0.0
      %1520 = vmatmul.mubr.f32.gmra.mrb[0].mxu0 %v1352
      %v1521 = vpop.f32.mrb[0].mxu0
      %v1522 = vadd.f32 0.0, %v1521
      %v1523 = vpop.f32.mrb[0].mxu0
      %1524 = vmatprep.mubr.f32.mxu0 0.0
      %1525 = vmatmul.mubr.f32.gmra.mrb[0].mxu0 %v1355
      %v1526 = vpop.f32.mrb[0].mxu0
      %v1527 = vadd.f32 0.0, %v1526
      %v1528 = vpop.f32.mrb[0].mxu0
      %1529 = vmatprep.mubr.f32.mxu0 0.0
      %1530 = vmatmul.mubr.f32.gmra.mrb[0].mxu0 %v1358
      %v1531 = vpop.f32.mrb[0].mxu0
      %v1532 = vadd.f32 0.0, %v1531
      %v1533 = vpop.f32.mrb[0].mxu0
      %1534 = vmatprep.mubr.f32.mxu0 0.0
      %1535 = vmatmul.mubr.f32.gmra.mrb[0].mxu0 %v1361
      %v1536 = vpop.f32.mrb[0].mxu0
      %v1537 = vadd.f32 0.0, %v1536
      %v1538 = vpop.f32.mrb[0].mxu0
      %1539 = vmatprep.mubr.f32.mxu0 0.0
      %1540 = vmatmul.mubr.f32.gmra.mrb[0].mxu0 %v1364
      %v1541 = vpop.f32.mrb[0].mxu0
      %v1542 = vadd.f32 0.0, %v1541
      %v1543 = vpop.f32.mrb[0].mxu0
      %1544 = vmatprep.mubr.f32.mxu0 0.0
      %1545 = vmatmul.mubr.f32.gmra.mrb[0].mxu0 %v1367
      %v1546 = vpop.f32.mrb[0].mxu0
      %v1547 = vadd.f32 0.0, %v1546
      %v1548 = vpop.f32.mrb[0].mxu0
      %1549 = vmatprep.mubr.f32.mxu0 0.0
      %1550 = vmatmul.mubr.f32.gmra.mrb[0].mxu0 %v1370
      %v1551 = vpop.f32.mrb[0].mxu0
      %v1552 = vadd.f32 0.0, %v1551
      %v1553 = vpop.f32.mrb[0].mxu0
      %1554 = vmatprep.mubr.f32.mxu0 0.0
      %1555 = vmatmul.mubr.f32.gmra.mrb[0].mxu0 %v1373
      %v1556 = vpop.f32.mrb[0].mxu0
      %v1557 = vadd.f32 0.0, %v1556
      %v1558 = vpop.f32.mrb[0].mxu0
      %1559 = vdwg.mxu0
      %1584 = vrot.lane.b32.xlu0 %v1442, 4
      %v1585 = vpop.permute.xlu0 %1584
      %1586 = vrot.lane.b32.xlu0 %v1447, 4
      %v1587 = vpop.permute.xlu0 %1586
      %1588 = vrot.lane.b32.xlu0 %v1452, 4
      %v1589 = vpop.permute.xlu0 %1588
      %1590 = vrot.lane.b32.xlu0 %v1457, 4
      %v1591 = vpop.permute.xlu0 %1590
      %1592 = vrot.lane.b32.xlu0 %v1462, 4
      %v1593 = vpop.permute.xlu0 %1592
      %1594 = vrot.lane.b32.xlu0 %v1467, 4
      %v1595 = vpop.permute.xlu0 %1594
      %1596 = vrot.lane.b32.xlu0 %v1472, 4
      %v1597 = vpop.permute.xlu0 %1596
      %1598 = vrot.lane.b32.xlu0 %v1477, 4
      %v1599 = vpop.permute.xlu0 %1598
      %1600 = vrot.lane.b32.xlu0 %v1482, 4
      %v1601 = vpop.permute.xlu0 %1600
      %1602 = vrot.lane.b32.xlu0 %v1487, 4
      %v1603 = vpop.permute.xlu0 %1602
      %1604 = vrot.lane.b32.xlu0 %v1492, 4
      %v1605 = vpop.permute.xlu0 %1604
      %1606 = vrot.lane.b32.xlu0 %v1497, 4
      %v1607 = vpop.permute.xlu0 %1606
      %1608 = vrot.lane.b32.xlu0 %v1502, 4
      %v1609 = vpop.permute.xlu0 %1608
      %1610 = vrot.lane.b32.xlu0 %v1507, 4
      %v1611 = vpop.permute.xlu0 %1610
      %1612 = vrot.lane.b32.xlu0 %v1512, 4
      %v1613 = vpop.permute.xlu0 %1612
      %1614 = vrot.lane.b32.xlu0 %v1517, 4
      %v1615 = vpop.permute.xlu0 %1614
      %1616 = vrot.lane.b32.xlu0 %v1522, 4
      %v1617 = vpop.permute.xlu0 %1616
      %1618 = vrot.lane.b32.xlu0 %v1527, 4
      %v1619 = vpop.permute.xlu0 %1618
      %1620 = vrot.lane.b32.xlu0 %v1532, 4
      %v1621 = vpop.permute.xlu0 %1620
      %1622 = vrot.lane.b32.xlu0 %v1537, 4
      %v1623 = vpop.permute.xlu0 %1622
      %1624 = vrot.lane.b32.xlu0 %v1542, 4
      %v1625 = vpop.permute.xlu0 %1624
      %1626 = vrot.lane.b32.xlu0 %v1547, 4
      %v1627 = vpop.permute.xlu0 %1626
      %1628 = vrot.lane.b32.xlu0 %v1552, 4
      %v1629 = vpop.permute.xlu0 %1628
      %1630 = vrot.lane.b32.xlu0 %v1557, 4
      %v1631 = vpop.permute.xlu0 %1630
      %vm1656 = vcmask 31744
      %v1657 = vsel %vm1656, %v1161, %v1585
      %v1658 = vsel %vm1656, %v1166, %v1587
      %v1659 = vsel %vm1656, %v1171, %v1589
      %v1660 = vsel %vm1656, %v1176, %v1591
      %v1661 = vsel %vm1656, %v1181, %v1593
      %v1662 = vsel %vm1656, %v1186, %v1595
      %v1663 = vsel %vm1656, %v1191, %v1597
      %v1664 = vsel %vm1656, %v1196, %v1599
      %v1665 = vsel %vm1656, %v1201, %v1601
      %v1666 = vsel %vm1656, %v1206, %v1603
      %v1667 = vsel %vm1656, %v1211, %v1605
      %v1668 = vsel %vm1656, %v1216, %v1607
      %v1669 = vsel %vm1656, %v1221, %v1609
      %v1670 = vsel %vm1656, %v1226, %v1611
      %v1671 = vsel %vm1656, %v1231, %v1613
      %v1672 = vsel %vm1656, %v1236, %v1615
      %v1673 = vsel %vm1656, %v1241, %v1617
      %v1674 = vsel %vm1656, %v1246, %v1619
      %v1675 = vsel %vm1656, %v1251, %v1621
      %v1676 = vsel %vm1656, %v1256, %v1623
      %v1677 = vsel %vm1656, %v1261, %v1625
      %v1678 = vsel %vm1656, %v1266, %v1627
      %v1679 = vsel %vm1656, %v1271, %v1629
      %v1680 = vsel %vm1656, %v1276, %v1631
      %vm1705 = vcmask 1046528
      %v1706 = vrot.slane %v1657, 1
      %v1707 = vrot.slane %v1658, 1
      %v1708 = vsel %vm1705, %v1706, %v1707
      %v1709 = vrot.slane %v1659, 1
      %v1710 = vrot.slane %v1660, 1
      %v1711 = vsel %vm1705, %v1709, %v1710
      %v1712 = vrot.slane %v1661, 1
      %v1713 = vrot.slane %v1662, 1
      %v1714 = vsel %vm1705, %v1712, %v1713
      %v1715 = vrot.slane %v1663, 1
      %v1716 = vrot.slane %v1664, 1
      %v1717 = vsel %vm1705, %v1715, %v1716
      %v1718 = vrot.slane %v1665, 1
      %v1719 = vrot.slane %v1666, 1
      %v1720 = vsel %vm1705, %v1718, %v1719
      %v1721 = vrot.slane %v1667, 1
      %v1722 = vrot.slane %v1668, 1
      %v1723 = vsel %vm1705, %v1721, %v1722
      %v1724 = vrot.slane %v1669, 1
      %v1725 = vrot.slane %v1670, 1
      %v1726 = vsel %vm1705, %v1724, %v1725
      %v1727 = vrot.slane %v1671, 1
      %v1728 = vrot.slane %v1672, 1
      %v1729 = vsel %vm1705, %v1727, %v1728
      %v1730 = vrot.slane %v1673, 1
      %v1731 = vrot.slane %v1674, 1
      %v1732 = vsel %vm1705, %v1730, %v1731
      %v1733 = vrot.slane %v1675, 1
      %v1734 = vrot.slane %v1676, 1
      %v1735 = vsel %vm1705, %v1733, %v1734
      %v1736 = vrot.slane %v1677, 1
      %v1737 = vrot.slane %v1678, 1
      %v1738 = vsel %vm1705, %v1736, %v1737
      %v1739 = vrot.slane %v1679, 1
      %v1740 = vrot.slane %v1680, 1
      %v1741 = vsel %vm1705, %v1739, %v1740
      %1742 = vrot.lane.b32.xlu0 %v1708, 8
      %v1743 = vpop.permute.xlu0 %1742
      %1744 = vrot.lane.b32.xlu0 %v1707, 8
      %v1745 = vpop.permute.xlu0 %1744
      %1746 = vrot.lane.b32.xlu0 %v1711, 8
      %v1747 = vpop.permute.xlu0 %1746
      %1748 = vrot.lane.b32.xlu0 %v1710, 8
      %v1749 = vpop.permute.xlu0 %1748
      %1750 = vrot.lane.b32.xlu0 %v1714, 8
      %v1751 = vpop.permute.xlu0 %1750
      %1752 = vrot.lane.b32.xlu0 %v1713, 8
      %v1753 = vpop.permute.xlu0 %1752
      %1754 = vrot.lane.b32.xlu0 %v1717, 8
      %v1755 = vpop.permute.xlu0 %1754
      %1756 = vrot.lane.b32.xlu0 %v1716, 8
      %v1757 = vpop.permute.xlu0 %1756
      %1758 = vrot.lane.b32.xlu0 %v1720, 8
      %v1759 = vpop.permute.xlu0 %1758
      %1760 = vrot.lane.b32.xlu0 %v1719, 8
      %v1761 = vpop.permute.xlu0 %1760
      %1762 = vrot.lane.b32.xlu0 %v1723, 8
      %v1763 = vpop.permute.xlu0 %1762
      %1764 = vrot.lane.b32.xlu0 %v1722, 8
      %v1765 = vpop.permute.xlu0 %1764
      %1766 = vrot.lane.b32.xlu0 %v1726, 8
      %v1767 = vpop.permute.xlu0 %1766
      %1768 = vrot.lane.b32.xlu0 %v1725, 8
      %v1769 = vpop.permute.xlu0 %1768
      %1770 = vrot.lane.b32.xlu0 %v1729, 8
      %v1771 = vpop.permute.xlu0 %1770
      %1772 = vrot.lane.b32.xlu0 %v1728, 8
      %v1773 = vpop.permute.xlu0 %1772
      %1774 = vrot.lane.b32.xlu0 %v1732, 8
      %v1775 = vpop.permute.xlu0 %1774
      %1776 = vrot.lane.b32.xlu0 %v1731, 8
      %v1777 = vpop.permute.xlu0 %1776
      %1778 = vrot.lane.b32.xlu0 %v1735, 8
      %v1779 = vpop.permute.xlu0 %1778
      %1780 = vrot.lane.b32.xlu0 %v1734, 8
      %v1781 = vpop.permute.xlu0 %1780
      %1782 = vrot.lane.b32.xlu0 %v1738, 8
      %v1783 = vpop.permute.xlu0 %1782
      %1784 = vrot.lane.b32.xlu0 %v1737, 8
      %v1785 = vpop.permute.xlu0 %1784
      %1786 = vrot.lane.b32.xlu0 %v1741, 8
      %v1787 = vpop.permute.xlu0 %1786
      %1788 = vrot.lane.b32.xlu0 %v1740, 8
      %v1789 = vpop.permute.xlu0 %1788
      %vm1814 = vcmask 1045504
      %v1815 = vrot.slane %v1657, 2
      %v1816 = vrot.slane %v1658, 2
      %v1817 = vsel %vm1814, %v1815, %v1816
      %v1818 = vrot.slane %v1659, 2
      %v1819 = vrot.slane %v1660, 2
      %v1820 = vsel %vm1814, %v1818, %v1819
      %v1821 = vrot.slane %v1661, 2
      %v1822 = vrot.slane %v1662, 2
      %v1823 = vsel %vm1814, %v1821, %v1822
      %v1824 = vrot.slane %v1663, 2
      %v1825 = vrot.slane %v1664, 2
      %v1826 = vsel %vm1814, %v1824, %v1825
      %v1827 = vrot.slane %v1665, 2
      %v1828 = vrot.slane %v1666, 2
      %v1829 = vsel %vm1814, %v1827, %v1828
      %v1830 = vrot.slane %v1667, 2
      %v1831 = vrot.slane %v1668, 2
      %v1832 = vsel %vm1814, %v1830, %v1831
      %v1833 = vrot.slane %v1669, 2
      %v1834 = vrot.slane %v1670, 2
      %v1835 = vsel %vm1814, %v1833, %v1834
      %v1836 = vrot.slane %v1671, 2
      %v1837 = vrot.slane %v1672, 2
      %v1838 = vsel %vm1814, %v1836, %v1837
      %v1839 = vrot.slane %v1673, 2
      %v1840 = vrot.slane %v1674, 2
      %v1841 = vsel %vm1814, %v1839, %v1840
      %v1842 = vrot.slane %v1675, 2
      %v1843 = vrot.slane %v1676, 2
      %v1844 = vsel %vm1814, %v1842, %v1843
      %v1845 = vrot.slane %v1677, 2
      %v1846 = vrot.slane %v1678, 2
      %v1847 = vsel %vm1814, %v1845, %v1846
      %v1848 = vrot.slane %v1679, 2
      %v1849 = vrot.slane %v1680, 2
      %v1850 = vsel %vm1814, %v1848, %v1849
      %1851 = vrot.lane.b32.xlu0 %v1817, 16
      %v1852 = vpop.permute.xlu0 %1851
      %1853 = vrot.lane.b32.xlu0 %v1816, 16
      %v1854 = vpop.permute.xlu0 %1853
      %1855 = vrot.lane.b32.xlu0 %v1820, 16
      %v1856 = vpop.permute.xlu0 %1855
      %1857 = vrot.lane.b32.xlu0 %v1819, 16
      %v1858 = vpop.permute.xlu0 %1857
      %1859 = vrot.lane.b32.xlu0 %v1823, 16
      %v1860 = vpop.permute.xlu0 %1859
      %1861 = vrot.lane.b32.xlu0 %v1822, 16
      %v1862 = vpop.permute.xlu0 %1861
      %1863 = vrot.lane.b32.xlu0 %v1826, 16
      %v1864 = vpop.permute.xlu0 %1863
      %1865 = vrot.lane.b32.xlu0 %v1825, 16
      %v1866 = vpop.permute.xlu0 %1865
      %1867 = vrot.lane.b32.xlu0 %v1829, 16
      %v1868 = vpop.permute.xlu0 %1867
      %1869 = vrot.lane.b32.xlu0 %v1828, 16
      %v1870 = vpop.permute.xlu0 %1869
      %1871 = vrot.lane.b32.xlu0 %v1832, 16
      %v1872 = vpop.permute.xlu0 %1871
      %1873 = vrot.lane.b32.xlu0 %v1831, 16
      %v1874 = vpop.permute.xlu0 %1873
      %1875 = vrot.lane.b32.xlu0 %v1835, 16
      %v1876 = vpop.permute.xlu0 %1875
      %1877 = vrot.lane.b32.xlu0 %v1834, 16
      %v1878 = vpop.permute.xlu0 %1877
      %1879 = vrot.lane.b32.xlu0 %v1838, 16
      %v1880 = vpop.permute.xlu0 %1879
      %1881 = vrot.lane.b32.xlu0 %v1837, 16
      %v1882 = vpop.permute.xlu0 %1881
      %1883 = vrot.lane.b32.xlu0 %v1841, 16
      %v1884 = vpop.permute.xlu0 %1883
      %1885 = vrot.lane.b32.xlu0 %v1840, 16
      %v1886 = vpop.permute.xlu0 %1885
      %1887 = vrot.lane.b32.xlu0 %v1844, 16
      %v1888 = vpop.permute.xlu0 %1887
      %1889 = vrot.lane.b32.xlu0 %v1843, 16
      %v1890 = vpop.permute.xlu0 %1889
      %1891 = vrot.lane.b32.xlu0 %v1847, 16
      %v1892 = vpop.permute.xlu0 %1891
      %1893 = vrot.lane.b32.xlu0 %v1846, 16
      %v1894 = vpop.permute.xlu0 %1893
      %1895 = vrot.lane.b32.xlu0 %v1850, 16
      %v1896 = vpop.permute.xlu0 %1895
      %1897 = vrot.lane.b32.xlu0 %v1849, 16
      %v1898 = vpop.permute.xlu0 %1897
      %vm1923 = vcmask 1044480
      %v1924 = vrot.slane %v1657, 3
      %v1925 = vrot.slane %v1658, 3
      %v1926 = vsel %vm1923, %v1924, %v1925
      %v1927 = vrot.slane %v1659, 3
      %v1928 = vrot.slane %v1660, 3
      %v1929 = vsel %vm1923, %v1927, %v1928
      %v1930 = vrot.slane %v1661, 3
      %v1931 = vrot.slane %v1662, 3
      %v1932 = vsel %vm1923, %v1930, %v1931
      %v1933 = vrot.slane %v1663, 3
      %v1934 = vrot.slane %v1664, 3
      %v1935 = vsel %vm1923, %v1933, %v1934
      %v1936 = vrot.slane %v1665, 3
      %v1937 = vrot.slane %v1666, 3
      %v1938 = vsel %vm1923, %v1936, %v1937
      %v1939 = vrot.slane %v1667, 3
      %v1940 = vrot.slane %v1668, 3
      %v1941 = vsel %vm1923, %v1939, %v1940
      %v1942 = vrot.slane %v1669, 3
      %v1943 = vrot.slane %v1670, 3
      %v1944 = vsel %vm1923, %v1942, %v1943
      %v1945 = vrot.slane %v1671, 3
      %v1946 = vrot.slane %v1672, 3
      %v1947 = vsel %vm1923, %v1945, %v1946
      %v1948 = vrot.slane %v1673, 3
      %v1949 = vrot.slane %v1674, 3
      %v1950 = vsel %vm1923, %v1948, %v1949
      %v1951 = vrot.slane %v1675, 3
      %v1952 = vrot.slane %v1676, 3
      %v1953 = vsel %vm1923, %v1951, %v1952
      %v1954 = vrot.slane %v1677, 3
      %v1955 = vrot.slane %v1678, 3
      %v1956 = vsel %vm1923, %v1954, %v1955
      %v1957 = vrot.slane %v1679, 3
      %v1958 = vrot.slane %v1680, 3
      %v1959 = vsel %vm1923, %v1957, %v1958
      %1960 = vrot.lane.b32.xlu0 %v1926, 24
      %v1961 = vpop.permute.xlu0 %1960
      %1962 = vrot.lane.b32.xlu0 %v1925, 24
      %v1963 = vpop.permute.xlu0 %1962
      %1964 = vrot.lane.b32.xlu0 %v1929, 24
      %v1965 = vpop.permute.xlu0 %1964
      %1966 = vrot.lane.b32.xlu0 %v1928, 24
      %v1967 = vpop.permute.xlu0 %1966
      %1968 = vrot.lane.b32.xlu0 %v1932, 24
      %v1969 = vpop.permute.xlu0 %1968
      %1970 = vrot.lane.b32.xlu0 %v1931, 24
      %v1971 = vpop.permute.xlu0 %1970
      %1972 = vrot.lane.b32.xlu0 %v1935, 24
      %v1973 = vpop.permute.xlu0 %1972
      %1974 = vrot.lane.b32.xlu0 %v1934, 24
      %v1975 = vpop.permute.xlu0 %1974
      %1976 = vrot.lane.b32.xlu0 %v1938, 24
      %v1977 = vpop.permute.xlu0 %1976
      %1978 = vrot.lane.b32.xlu0 %v1937, 24
      %v1979 = vpop.permute.xlu0 %1978
      %1980 = vrot.lane.b32.xlu0 %v1941, 24
      %v1981 = vpop.permute.xlu0 %1980
      %1982 = vrot.lane.b32.xlu0 %v1940, 24
      %v1983 = vpop.permute.xlu0 %1982
      %1984 = vrot.lane.b32.xlu0 %v1944, 24
      %v1985 = vpop.permute.xlu0 %1984
      %1986 = vrot.lane.b32.xlu0 %v1943, 24
      %v1987 = vpop.permute.xlu0 %1986
      %1988 = vrot.lane.b32.xlu0 %v1947, 24
      %v1989 = vpop.permute.xlu0 %1988
      %1990 = vrot.lane.b32.xlu0 %v1946, 24
      %v1991 = vpop.permute.xlu0 %1990
      %1992 = vrot.lane.b32.xlu0 %v1950, 24
      %v1993 = vpop.permute.xlu0 %1992
      %1994 = vrot.lane.b32.xlu0 %v1949, 24
      %v1995 = vpop.permute.xlu0 %1994
      %1996 = vrot.lane.b32.xlu0 %v1953, 24
      %v1997 = vpop.permute.xlu0 %1996
      %1998 = vrot.lane.b32.xlu0 %v1952, 24
      %v1999 = vpop.permute.xlu0 %1998
      %2000 = vrot.lane.b32.xlu0 %v1956, 24
      %v2001 = vpop.permute.xlu0 %2000
      %2002 = vrot.lane.b32.xlu0 %v1955, 24
      %v2003 = vpop.permute.xlu0 %2002
      %2004 = vrot.lane.b32.xlu0 %v1959, 24
      %v2005 = vpop.permute.xlu0 %2004
      %2006 = vrot.lane.b32.xlu0 %v1958, 24
      %v2007 = vpop.permute.xlu0 %2006
      %vm2032 = vcmask 1043456
      %v2033 = vrot.slane %v1657, 4
      %v2034 = vrot.slane %v1658, 4
      %v2035 = vsel %vm2032, %v2033, %v2034
      %v2036 = vrot.slane %v1659, 4
      %v2037 = vrot.slane %v1660, 4
      %v2038 = vsel %vm2032, %v2036, %v2037
      %v2039 = vrot.slane %v1661, 4
      %v2040 = vrot.slane %v1662, 4
      %v2041 = vsel %vm2032, %v2039, %v2040
      %v2042 = vrot.slane %v1663, 4
      %v2043 = vrot.slane %v1664, 4
      %v2044 = vsel %vm2032, %v2042, %v2043
      %v2045 = vrot.slane %v1665, 4
      %v2046 = vrot.slane %v1666, 4
      %v2047 = vsel %vm2032, %v2045, %v2046
      %v2048 = vrot.slane %v1667, 4
      %v2049 = vrot.slane %v1668, 4
      %v2050 = vsel %vm2032, %v2048, %v2049
      %v2051 = vrot.slane %v1669, 4
      %v2052 = vrot.slane %v1670, 4
      %v2053 = vsel %vm2032, %v2051, %v2052
      %v2054 = vrot.slane %v1671, 4
      %v2055 = vrot.slane %v1672, 4
      %v2056 = vsel %vm2032, %v2054, %v2055
      %v2057 = vrot.slane %v1673, 4
      %v2058 = vrot.slane %v1674, 4
      %v2059 = vsel %vm2032, %v2057, %v2058
      %v2060 = vrot.slane %v1675, 4
      %v2061 = vrot.slane %v1676, 4
      %v2062 = vsel %vm2032, %v2060, %v2061
      %v2063 = vrot.slane %v1677, 4
      %v2064 = vrot.slane %v1678, 4
      %v2065 = vsel %vm2032, %v2063, %v2064
      %v2066 = vrot.slane %v1679, 4
      %v2067 = vrot.slane %v1680, 4
      %v2068 = vsel %vm2032, %v2066, %v2067
      %2069 = vrot.lane.b32.xlu0 %v2035, 32
      %v2070 = vpop.permute.xlu0 %2069
      %2071 = vrot.lane.b32.xlu0 %v2034, 32
      %v2072 = vpop.permute.xlu0 %2071
      %2073 = vrot.lane.b32.xlu0 %v2038, 32
      %v2074 = vpop.permute.xlu0 %2073
      %2075 = vrot.lane.b32.xlu0 %v2037, 32
      %v2076 = vpop.permute.xlu0 %2075
      %2077 = vrot.lane.b32.xlu0 %v2041, 32
      %v2078 = vpop.permute.xlu0 %2077
      %2079 = vrot.lane.b32.xlu0 %v2040, 32
      %v2080 = vpop.permute.xlu0 %2079
      %2081 = vrot.lane.b32.xlu0 %v2044, 32
      %v2082 = vpop.permute.xlu0 %2081
      %2083 = vrot.lane.b32.xlu0 %v2043, 32
      %v2084 = vpop.permute.xlu0 %2083
      %2085 = vrot.lane.b32.xlu0 %v2047, 32
      %v2086 = vpop.permute.xlu0 %2085
      %2087 = vrot.lane.b32.xlu0 %v2046, 32
      %v2088 = vpop.permute.xlu0 %2087
      %2089 = vrot.lane.b32.xlu0 %v2050, 32
      %v2090 = vpop.permute.xlu0 %2089
      %2091 = vrot.lane.b32.xlu0 %v2049, 32
      %v2092 = vpop.permute.xlu0 %2091
      %2093 = vrot.lane.b32.xlu0 %v2053, 32
      %v2094 = vpop.permute.xlu0 %2093
      %2095 = vrot.lane.b32.xlu0 %v2052, 32
      %v2096 = vpop.permute.xlu0 %2095
      %2097 = vrot.lane.b32.xlu0 %v2056, 32
      %v2098 = vpop.permute.xlu0 %2097
      %2099 = vrot.lane.b32.xlu0 %v2055, 32
      %v2100 = vpop.permute.xlu0 %2099
      %2101 = vrot.lane.b32.xlu0 %v2059, 32
      %v2102 = vpop.permute.xlu0 %2101
      %2103 = vrot.lane.b32.xlu0 %v2058, 32
      %v2104 = vpop.permute.xlu0 %2103
      %2105 = vrot.lane.b32.xlu0 %v2062, 32
      %v2106 = vpop.permute.xlu0 %2105
      %2107 = vrot.lane.b32.xlu0 %v2061, 32
      %v2108 = vpop.permute.xlu0 %2107
      %2109 = vrot.lane.b32.xlu0 %v2065, 32
      %v2110 = vpop.permute.xlu0 %2109
      %2111 = vrot.lane.b32.xlu0 %v2064, 32
      %v2112 = vpop.permute.xlu0 %2111
      %2113 = vrot.lane.b32.xlu0 %v2068, 32
      %v2114 = vpop.permute.xlu0 %2113
      %2115 = vrot.lane.b32.xlu0 %v2067, 32
      %v2116 = vpop.permute.xlu0 %2115
      %vm2141 = vcmask 64512
      %v2142 = vsel %vm2141, %v1657, %v1743
      %v2143 = vsel %vm2141, %v1658, %v1745
      %v2144 = vsel %vm2141, %v1659, %v1747
      %v2145 = vsel %vm2141, %v1660, %v1749
      %v2146 = vsel %vm2141, %v1661, %v1751
      %v2147 = vsel %vm2141, %v1662, %v1753
      %v2148 = vsel %vm2141, %v1663, %v1755
      %v2149 = vsel %vm2141, %v1664, %v1757
      %v2150 = vsel %vm2141, %v1665, %v1759
      %v2151 = vsel %vm2141, %v1666, %v1761
      %v2152 = vsel %vm2141, %v1667, %v1763
      %v2153 = vsel %vm2141, %v1668, %v1765
      %v2154 = vsel %vm2141, %v1669, %v1767
      %v2155 = vsel %vm2141, %v1670, %v1769
      %v2156 = vsel %vm2141, %v1671, %v1771
      %v2157 = vsel %vm2141, %v1672, %v1773
      %v2158 = vsel %vm2141, %v1673, %v1775
      %v2159 = vsel %vm2141, %v1674, %v1777
      %v2160 = vsel %vm2141, %v1675, %v1779
      %v2161 = vsel %vm2141, %v1676, %v1781
      %v2162 = vsel %vm2141, %v1677, %v1783
      %v2163 = vsel %vm2141, %v1678, %v1785
      %v2164 = vsel %vm2141, %v1679, %v1787
      %v2165 = vsel %vm2141, %v1680, %v1789
      %vm2166 = vcmask 130048
      %v2167 = vsel %vm2166, %v2142, %v1852
      %v2168 = vsel %vm2166, %v2143, %v1854
      %v2169 = vsel %vm2166, %v2144, %v1856
      %v2170 = vsel %vm2166, %v2145, %v1858
      %v2171 = vsel %vm2166, %v2146, %v1860
      %v2172 = vsel %vm2166, %v2147, %v1862
      %v2173 = vsel %vm2166, %v2148, %v1864
      %v2174 = vsel %vm2166, %v2149, %v1866
      %v2175 = vsel %vm2166, %v2150, %v1868
      %v2176 = vsel %vm2166, %v2151, %v1870
      %v2177 = vsel %vm2166, %v2152, %v1872
      %v2178 = vsel %vm2166, %v2153, %v1874
      %v2179 = vsel %vm2166, %v2154, %v1876
      %v2180 = vsel %vm2166, %v2155, %v1878
      %v2181 = vsel %vm2166, %v2156, %v1880
      %v2182 = vsel %vm2166, %v2157, %v1882
      %v2183 = vsel %vm2166, %v2158, %v1884
      %v2184 = vsel %vm2166, %v2159, %v1886
      %v2185 = vsel %vm2166, %v2160, %v1888
      %v2186 = vsel %vm2166, %v2161, %v1890
      %v2187 = vsel %vm2166, %v2162, %v1892
      %v2188 = vsel %vm2166, %v2163, %v1894
      %v2189 = vsel %vm2166, %v2164, %v1896
      %v2190 = vsel %vm2166, %v2165, %v1898
      %vm2191 = vcmask 195584
      %v2192 = vsel %vm2191, %v2167, %v1961
      %v2193 = vsel %vm2191, %v2168, %v1963
      %v2194 = vsel %vm2191, %v2169, %v1965
      %v2195 = vsel %vm2191, %v2170, %v1967
      %v2196 = vsel %vm2191, %v2171, %v1969
      %v2197 = vsel %vm2191, %v2172, %v1971
      %v2198 = vsel %vm2191, %v2173, %v1973
      %v2199 = vsel %vm2191, %v2174, %v1975
      %v2200 = vsel %vm2191, %v2175, %v1977
      %v2201 = vsel %vm2191, %v2176, %v1979
      %v2202 = vsel %vm2191, %v2177, %v1981
      %v2203 = vsel %vm2191, %v2178, %v1983
      %v2204 = vsel %vm2191, %v2179, %v1985
      %v2205 = vsel %vm2191, %v2180, %v1987
      %v2206 = vsel %vm2191, %v2181, %v1989
      %v2207 = vsel %vm2191, %v2182, %v1991
      %v2208 = vsel %vm2191, %v2183, %v1993
      %v2209 = vsel %vm2191, %v2184, %v1995
      %v2210 = vsel %vm2191, %v2185, %v1997
      %v2211 = vsel %vm2191, %v2186, %v1999
      %v2212 = vsel %vm2191, %v2187, %v2001
      %v2213 = vsel %vm2191, %v2188, %v2003
      %v2214 = vsel %vm2191, %v2189, %v2005
      %v2215 = vsel %vm2191, %v2190, %v2007
      %vm2216 = vcmask 261120
      %v2217 = vsel %vm2216, %v2192, %v2070
      %v2218 = vsel %vm2216, %v2193, %v2072
      %v2219 = vsel %vm2216, %v2194, %v2074
      %v2220 = vsel %vm2216, %v2195, %v2076
      %v2221 = vsel %vm2216, %v2196, %v2078
      %v2222 = vsel %vm2216, %v2197, %v2080
      %v2223 = vsel %vm2216, %v2198, %v2082
      %v2224 = vsel %vm2216, %v2199, %v2084
      %v2225 = vsel %vm2216, %v2200, %v2086
      %v2226 = vsel %vm2216, %v2201, %v2088
      %v2227 = vsel %vm2216, %v2202, %v2090
      %v2228 = vsel %vm2216, %v2203, %v2092
      %v2229 = vsel %vm2216, %v2204, %v2094
      %v2230 = vsel %vm2216, %v2205, %v2096
      %v2231 = vsel %vm2216, %v2206, %v2098
      %v2232 = vsel %vm2216, %v2207, %v2100
      %v2233 = vsel %vm2216, %v2208, %v2102
      %v2234 = vsel %vm2216, %v2209, %v2104
      %v2235 = vsel %vm2216, %v2210, %v2106
      %v2236 = vsel %vm2216, %v2211, %v2108
      %v2237 = vsel %vm2216, %v2212, %v2110
      %v2238 = vsel %vm2216, %v2213, %v2112
      %v2239 = vsel %vm2216, %v2214, %v2114
      %v2240 = vsel %vm2216, %v2215, %v2116
      %v2265 = vcombine.high %v2217, %v2217
      %v2266 = vcombine.high %v2219, %v2219
      %v2267 = vcombine.high %v2221, %v2221
      %v2268 = vcombine.high %v2223, %v2223
      %v2269 = vcombine.high %v2225, %v2225
      %v2270 = vcombine.high %v2227, %v2227
      %v2271 = vcombine.high %v2229, %v2229
      %v2272 = vcombine.high %v2231, %v2231
      %v2273 = vcombine.high %v2233, %v2233
      %v2274 = vcombine.high %v2235, %v2235
      %v2275 = vcombine.high %v2237, %v2237
      %v2276 = vcombine.high %v2239, %v2239
      %v2277 = vld [vmem:[%s13] sm:$0xff]
      %v2278 = vld [vmem:[%s13 + $0x8] sm:$0xff]
      %v2279 = vld [vmem:[%s13 + $0x10] sm:$0xff]
      %v2280 = vld [vmem:[%s13 + $0x18] sm:$0xff]
      %v2281 = vld [vmem:[%s13 + $0x20] sm:$0xff]
      %v2282 = vld [vmem:[%s15] sm:$0x1]
      %v2284 = vlaneseq
      %v2285 = vshrl.u32 %v2284, 7
      %v2286 = vsub.s32 0, %v2285
      %v2287 = vrot.slane %v2282, %v2286
      %v2289 = vcombine.low %v2217, %v2265
      %v2290 = vcombine.low %v2218, %v2219
      %v2291 = vcombine.low %v2266, %v2220
      %v2292 = vcombine.low %v2221, %v2267
      %v2293 = vcombine.low %v2222, %v2223
      %v2294 = vcombine.low %v2268, %v2224
      %v2295 = vcombine.low %v2225, %v2269
      %v2296 = vcombine.low %v2226, %v2227
      %v2297 = vcombine.low %v2270, %v2228
      %v2298 = vcombine.low %v2229, %v2271
      %v2299 = vcombine.low %v2230, %v2231
      %v2300 = vcombine.low %v2272, %v2232
      %v2301 = vcombine.low %v2233, %v2273
      %v2302 = vcombine.low %v2234, %v2235
      %v2303 = vcombine.low %v2274, %v2236
      %v2304 = vcombine.low %v2237, %v2275
      %v2305 = vcombine.low %v2238, %v2239
      %v2306 = vcombine.low %v2276, %v2240
      %vm2307 = vcmask 326656
      %v2308 = vsel %vm2307, %v2289, 0
      %v2310 = vsel %vm2307, %v2290, 0
      %v2312 = vsel %vm2307, %v2291, 0
      %v2314 = vsel %vm2307, %v2292, 0
      %v2316 = vsel %vm2307, %v2293, 0
      %v2318 = vsel %vm2307, %v2294, 0
      %v2320 = vsel %vm2307, %v2295, 0
      %v2322 = vsel %vm2307, %v2296, 0
      %v2324 = vsel %vm2307, %v2297, 0
      %v2326 = vsel %vm2307, %v2298, 0
      %v2328 = vsel %vm2307, %v2299, 0
      %v2330 = vsel %vm2307, %v2300, 0
      %v2332 = vsel %vm2307, %v2301, 0
      %v2334 = vsel %vm2307, %v2302, 0
      %v2336 = vsel %vm2307, %v2303, 0
      %v2338 = vsel %vm2307, %v2304, 0
      %v2340 = vsel %vm2307, %v2305, 0
      %v2342 = vsel %vm2307, %v2306, 0
      %2344 = vmatprep.subr.mxu0 0.0
      %2345 = vmatpush1.msra.mxu0 %v2277
      %2346 = vmatprep.subr.mxu0 0.0
      %2347 = vmatpush1.msra.mxu0 %v2278
      %2348 = vmatprep.subr.mxu0 0.0
      %2349 = vmatpush1.msra.mxu0 %v2279
      %2350 = vmatprep.subr.mxu0 0.0
      %2351 = vmatpush1.msra.mxu0 %v2280
      %2352 = vmatprep.subr.mxu0 0.0
      %2353 = vmatpush1.msra.mxu0 %v2281
      %2354 = vmatprep.subr.mxu0 0.0
      %2355 = vmatpush1.msra.mxu0 0.0
      %2356 = vmatprep.subr.mxu0 0.0
      %2357 = vmatpush1.msra.mxu0 0.0
      %2358 = vmatprep.subr.mxu0 0.0
      %2359 = vmatpush1.msra.mxu0 0.0
      %2360 = vmatprep.subr.mxu0 0.0
      %2361 = vmatpush1.msra.mxu0 0.0
      %2362 = vmatprep.subr.mxu0 0.0
      %2363 = vmatpush1.msra.mxu0 0.0
      %2364 = vmatprep.subr.mxu0 0.0
      %2365 = vmatpush1.msra.mxu0 0.0
      %2366 = vmatprep.subr.mxu0 0.0
      %2367 = vmatpush1.msra.mxu0 0.0
      %2368 = vmatprep.subr.mxu0 0.0
      %2369 = vmatpush1.msra.mxu0 0.0
      %2370 = vmatprep.subr.mxu0 0.0
      %2371 = vmatpush1.msra.mxu0 0.0
      %2372 = vmatprep.subr.mxu0 0.0
      %2373 = vmatpush1.msra.mxu0 0.0
      %2374 = vmatprep.subr.mxu0 0.0
      %2375 = vmatpush1.msra.mxu0 0.0
      %2376 = vmatprep.subr.mxu0 0.0
      %2377 = vmatpush1.msra.mxu0 0.0
      %2378 = vmatprep.subr.mxu0 0.0
      %2379 = vmatpush1.msra.mxu0 0.0
      %2380 = vmatprep.subr.mxu0 0.0
      %2381 = vmatpush1.msra.mxu0 0.0
      %2382 = vmatprep.subr.mxu0 0.0
      %2383 = vmatpush1.msra.mxu0 0.0
      %2384 = vmatprep.subr.mxu0 0.0
      %2385 = vmatpush1.msra.mxu0 0.0
      %2386 = vmatprep.subr.mxu0 0.0
      %2387 = vmatpush1.msra.mxu0 0.0
      %2388 = vmatprep.subr.mxu0 0.0
      %2389 = vmatpush1.msra.mxu0 0.0
      %2390 = vmatprep.subr.mxu0 0.0
      %2391 = vmatpush1.msra.mxu0 0.0
      %2392 = vmatprep.subr.mxu0 0.0
      %2393 = vmatpush1.msra.mxu0 0.0
      %2394 = vmatprep.subr.mxu0 0.0
      %2395 = vmatpush1.msra.mxu0 0.0
      %2396 = vmatprep.subr.mxu0 0.0
      %2397 = vmatpush1.msra.mxu0 0.0
      %2398 = vmatprep.subr.mxu0 0.0
      %2399 = vmatpush1.msra.mxu0 0.0
      %2400 = vmatprep.subr.mxu0 0.0
      %2401 = vmatpush1.msra.mxu0 0.0
      %2402 = vmatprep.subr.mxu0 0.0
      %2403 = vmatpush1.msra.mxu0 0.0
      %2404 = vmatprep.subr.mxu0 0.0
      %2405 = vmatpush1.msra.mxu0 0.0
      %2406 = vmatprep.subr.mxu0 0.0
      %2407 = vmatpush1.msra.mxu0 0.0
      %2408 = vmatprep.mubr.f32.mxu0 0.0
      %2409 = vmatmul.mubr.f32.gmra.mrb[0].mxu0 %v2308
      %v2410 = vpop.f32.mrb[0].mxu0
      %v2411 = vadd.f32 %v2287, %v2410
      %v2412 = vpop.f32.mrb[0].mxu0
      %2413 = vmatprep.mubr.f32.mxu0 0.0
      %2414 = vmatmul.mubr.f32.gmra.mrb[0].mxu0 %v2310
      %v2415 = vpop.f32.mrb[0].mxu0
      %v2416 = vadd.f32 %v2287, %v2415
      %v2417 = vpop.f32.mrb[0].mxu0
      %2418 = vmatprep.mubr.f32.mxu0 0.0
      %2419 = vmatmul.mubr.f32.gmra.mrb[0].mxu0 %v2312
      %v2420 = vpop.f32.mrb[0].mxu0
      %v2421 = vadd.f32 %v2287, %v2420
      %v2422 = vpop.f32.mrb[0].mxu0
      %2423 = vmatprep.mubr.f32.mxu0 0.0
      %2424 = vmatmul.mubr.f32.gmra.mrb[0].mxu0 %v2314
      %v2425 = vpop.f32.mrb[0].mxu0
      %v2426 = vadd.f32 %v2287, %v2425
      %v2427 = vpop.f32.mrb[0].mxu0
      %2428 = vmatprep.mubr.f32.mxu0 0.0
      %2429 = vmatmul.mubr.f32.gmra.mrb[0].mxu0 %v2316
      %v2430 = vpop.f32.mrb[0].mxu0
      %v2431 = vadd.f32 %v2287, %v2430
      %v2432 = vpop.f32.mrb[0].mxu0
      %2433 = vmatprep.mubr.f32.mxu0 0.0
      %2434 = vmatmul.mubr.f32.gmra.mrb[0].mxu0 %v2318
      %v2435 = vpop.f32.mrb[0].mxu0
      %v2436 = vadd.f32 %v2287, %v2435
      %v2437 = vpop.f32.mrb[0].mxu0
      %2438 = vmatprep.mubr.f32.mxu0 0.0
      %2439 = vmatmul.mubr.f32.gmra.mrb[0].mxu0 %v2320
      %v2440 = vpop.f32.mrb[0].mxu0
      %v2441 = vadd.f32 %v2287, %v2440
      %v2442 = vpop.f32.mrb[0].mxu0
      %2443 = vmatprep.mubr.f32.mxu0 0.0
      %2444 = vmatmul.mubr.f32.gmra.mrb[0].mxu0 %v2322
      %v2445 = vpop.f32.mrb[0].mxu0
      %v2446 = vadd.f32 %v2287, %v2445
      %v2447 = vpop.f32.mrb[0].mxu0
      %2448 = vmatprep.mubr.f32.mxu0 0.0
      %2449 = vmatmul.mubr.f32.gmra.mrb[0].mxu0 %v2324
      %v2450 = vpop.f32.mrb[0].mxu0
      %v2451 = vadd.f32 %v2287, %v2450
      %v2452 = vpop.f32.mrb[0].mxu0
      %2453 = vmatprep.mubr.f32.mxu0 0.0
      %2454 = vmatmul.mubr.f32.gmra.mrb[0].mxu0 %v2326
      %v2455 = vpop.f32.mrb[0].mxu0
      %v2456 = vadd.f32 %v2287, %v2455
      %v2457 = vpop.f32.mrb[0].mxu0
      %2458 = vmatprep.mubr.f32.mxu0 0.0
      %2459 = vmatmul.mubr.f32.gmra.mrb[0].mxu0 %v2328
      %v2460 = vpop.f32.mrb[0].mxu0
      %v2461 = vadd.f32 %v2287, %v2460
      %v2462 = vpop.f32.mrb[0].mxu0
      %2463 = vmatprep.mubr.f32.mxu0 0.0
      %2464 = vmatmul.mubr.f32.gmra.mrb[0].mxu0 %v2330
      %v2465 = vpop.f32.mrb[0].mxu0
      %v2466 = vadd.f32 %v2287, %v2465
      %v2467 = vpop.f32.mrb[0].mxu0
      %2468 = vmatprep.mubr.f32.mxu0 0.0
      %2469 = vmatmul.mubr.f32.gmra.mrb[0].mxu0 %v2332
      %v2470 = vpop.f32.mrb[0].mxu0
      %v2471 = vadd.f32 %v2287, %v2470
      %v2472 = vpop.f32.mrb[0].mxu0
      %2473 = vmatprep.mubr.f32.mxu0 0.0
      %2474 = vmatmul.mubr.f32.gmra.mrb[0].mxu0 %v2334
      %v2475 = vpop.f32.mrb[0].mxu0
      %v2476 = vadd.f32 %v2287, %v2475
      %v2477 = vpop.f32.mrb[0].mxu0
      %2478 = vmatprep.mubr.f32.mxu0 0.0
      %2479 = vmatmul.mubr.f32.gmra.mrb[0].mxu0 %v2336
      %v2480 = vpop.f32.mrb[0].mxu0
      %v2481 = vadd.f32 %v2287, %v2480
      %v2482 = vpop.f32.mrb[0].mxu0
      %2483 = vmatprep.mubr.f32.mxu0 0.0
      %2484 = vmatmul.mubr.f32.gmra.mrb[0].mxu0 %v2338
      %v2485 = vpop.f32.mrb[0].mxu0
      %v2486 = vadd.f32 %v2287, %v2485
      %v2487 = vpop.f32.mrb[0].mxu0
      %2488 = vmatprep.mubr.f32.mxu0 0.0
      %2489 = vmatmul.mubr.f32.gmra.mrb[0].mxu0 %v2340
      %v2490 = vpop.f32.mrb[0].mxu0
      %v2491 = vadd.f32 %v2287, %v2490
      %v2492 = vpop.f32.mrb[0].mxu0
      %2493 = vmatprep.mubr.f32.mxu0 0.0
      %2494 = vmatmul.mubr.f32.gmra.mrb[0].mxu0 %v2342
      %v2495 = vpop.f32.mrb[0].mxu0
      %v2496 = vadd.f32 %v2287, %v2495
      %v2497 = vpop.f32.mrb[0].mxu0
      %2498 = vdwg.mxu0
      %v2499 = vmax.f32 %v2411, 0.0
      %v2500 = vmax.f32 %v2416, 0.0
      %v2501 = vmax.f32 %v2421, 0.0
      %v2502 = vmax.f32 %v2426, 0.0
      %v2503 = vmax.f32 %v2431, 0.0
      %v2504 = vmax.f32 %v2436, 0.0
      %v2505 = vmax.f32 %v2441, 0.0
      %v2506 = vmax.f32 %v2446, 0.0
      %v2507 = vmax.f32 %v2451, 0.0
      %v2508 = vmax.f32 %v2456, 0.0
      %v2509 = vmax.f32 %v2461, 0.0
      %v2510 = vmax.f32 %v2466, 0.0
      %v2511 = vmax.f32 %v2471, 0.0
      %v2512 = vmax.f32 %v2476, 0.0
      %v2513 = vmax.f32 %v2481, 0.0
      %v2514 = vmax.f32 %v2486, 0.0
      %v2515 = vmax.f32 %v2491, 0.0
      %v2516 = vmax.f32 %v2496, 0.0
      %v2517 = vld [vmem:[%s17] sm:$0x1]
      %v2519 = vlaneseq
      %v2520 = vshrl.u32 %v2519, 7
      %v2521 = vsub.s32 0, %v2520
      %v2522 = vrot.slane %v2517, %v2521
      %v2524 = vmul.f32 %v2499, %v2522
      %v2525 = vmul.f32 %v2500, %v2522
      %v2526 = vmul.f32 %v2501, %v2522
      %v2527 = vmul.f32 %v2502, %v2522
      %v2528 = vmul.f32 %v2503, %v2522
      %v2529 = vmul.f32 %v2504, %v2522
      %v2530 = vmul.f32 %v2505, %v2522
      %v2531 = vmul.f32 %v2506, %v2522
      %v2532 = vmul.f32 %v2507, %v2522
      %v2533 = vmul.f32 %v2508, %v2522
      %v2534 = vmul.f32 %v2509, %v2522
      %v2535 = vmul.f32 %v2510, %v2522
      %v2536 = vmul.f32 %v2511, %v2522
      %v2537 = vmul.f32 %v2512, %v2522
      %v2538 = vmul.f32 %v2513, %v2522
      %v2539 = vmul.f32 %v2514, %v2522
      %v2540 = vmul.f32 %v2515, %v2522
      %v2541 = vmul.f32 %v2516, %v2522
      %v2542 = vld [vmem:[%s19] sm:$0x1]
      %v2544 = vlaneseq
      %v2545 = vshrl.u32 %v2544, 7
      %v2546 = vsub.s32 0, %v2545
      %v2547 = vrot.slane %v2542, %v2546
      %v2549 = vadd.f32 %v2524, %v2547
      %v2550 = vadd.f32 %v2525, %v2547
      %v2551 = vadd.f32 %v2526, %v2547
      %v2552 = vadd.f32 %v2527, %v2547
      %v2553 = vadd.f32 %v2528, %v2547
      %v2554 = vadd.f32 %v2529, %v2547
      %v2555 = vadd.f32 %v2530, %v2547
      %v2556 = vadd.f32 %v2531, %v2547
      %v2557 = vadd.f32 %v2532, %v2547
      %v2558 = vadd.f32 %v2533, %v2547
      %v2559 = vadd.f32 %v2534, %v2547
      %v2560 = vadd.f32 %v2535, %v2547
      %v2561 = vadd.f32 %v2536, %v2547
      %v2562 = vadd.f32 %v2537, %v2547
      %v2563 = vadd.f32 %v2538, %v2547
      %v2564 = vadd.f32 %v2539, %v2547
      %v2565 = vadd.f32 %v2540, %v2547
      %v2566 = vadd.f32 %v2541, %v2547
      %v2585 = vcombine.high %v2549, %v2549
      %v2587 = vunpack.c.l.s4 1983009808
      %v2588 = vunpack.c.0.s8 %v2587
      %v2589 = vlaneseq
      %v2590 = vshrl.u32 %v2589, 7
      %v2591 = vsub.s32 %v2588, %v2590
      %v2592 = vrot.slane %v2549, %v2591
      %v2594 = vunpack.c.l.s4 1983009808
      %v2595 = vunpack.c.0.s8 %v2594
      %v2596 = vlaneseq
      %v2597 = vshrl.u32 %v2596, 7
      %v2598 = vsub.s32 %v2595, %v2597
      %v2599 = vrot.slane %v2585, %v2598
      %v2600 = vcombine.high %v2592, %v2592
      %v2601 = vcombine.high %v2599, %v2599
      %v2602 = vcombine.high %v2550, %v2550
      %v2604 = vunpack.c.l.s4 1983009808
      %v2605 = vunpack.c.0.s8 %v2604
      %v2606 = vlaneseq
      %v2607 = vshrl.u32 %v2606, 7
      %v2608 = vsub.s32 %v2605, %v2607
      %v2609 = vrot.slane %v2550, %v2608
      %v2611 = vunpack.c.l.s4 1983009808
      %v2612 = vunpack.c.0.s8 %v2611
      %v2613 = vlaneseq
      %v2614 = vshrl.u32 %v2613, 7
      %v2615 = vsub.s32 %v2612, %v2614
      %v2616 = vrot.slane %v2602, %v2615
      %v2617 = vcombine.high %v2609, %v2609
      %v2618 = vcombine.high %v2616, %v2616
      %v2619 = vcombine.high %v2551, %v2551
      %v2621 = vunpack.c.l.s4 1983009808
      %v2622 = vunpack.c.0.s8 %v2621
      %v2623 = vlaneseq
      %v2624 = vshrl.u32 %v2623, 7
      %v2625 = vsub.s32 %v2622, %v2624
      %v2626 = vrot.slane %v2551, %v2625
      %v2628 = vunpack.c.l.s4 1983009808
      %v2629 = vunpack.c.0.s8 %v2628
      %v2630 = vlaneseq
      %v2631 = vshrl.u32 %v2630, 7
      %v2632 = vsub.s32 %v2629, %v2631
      %v2633 = vrot.slane %v2619, %v2632
      %v2634 = vcombine.high %v2626, %v2626
      %v2635 = vcombine.high %v2633, %v2633
      %v2636 = vcombine.high %v2552, %v2552
      %v2638 = vunpack.c.l.s4 1983009808
      %v2639 = vunpack.c.0.s8 %v2638
      %v2640 = vlaneseq
      %v2641 = vshrl.u32 %v2640, 7
      %v2642 = vsub.s32 %v2639, %v2641
      %v2643 = vrot.slane %v2552, %v2642
      %v2645 = vunpack.c.l.s4 1983009808
      %v2646 = vunpack.c.0.s8 %v2645
      %v2647 = vlaneseq
      %v2648 = vshrl.u32 %v2647, 7
      %v2649 = vsub.s32 %v2646, %v2648
      %v2650 = vrot.slane %v2636, %v2649
      %v2651 = vcombine.high %v2643, %v2643
      %v2652 = vcombine.high %v2650, %v2650
      %v2653 = vcombine.high %v2553, %v2553
      %v2655 = vunpack.c.l.s4 1983009808
      %v2656 = vunpack.c.0.s8 %v2655
      %v2657 = vlaneseq
      %v2658 = vshrl.u32 %v2657, 7
      %v2659 = vsub.s32 %v2656, %v2658
      %v2660 = vrot.slane %v2553, %v2659
      %v2662 = vunpack.c.l.s4 1983009808
      %v2663 = vunpack.c.0.s8 %v2662
      %v2664 = vlaneseq
      %v2665 = vshrl.u32 %v2664, 7
      %v2666 = vsub.s32 %v2663, %v2665
      %v2667 = vrot.slane %v2653, %v2666
      %v2668 = vcombine.high %v2660, %v2660
      %v2669 = vcombine.high %v2667, %v2667
      %v2670 = vcombine.high %v2554, %v2554
      %v2672 = vunpack.c.l.s4 1983009808
      %v2673 = vunpack.c.0.s8 %v2672
      %v2674 = vlaneseq
      %v2675 = vshrl.u32 %v2674, 7
      %v2676 = vsub.s32 %v2673, %v2675
      %v2677 = vrot.slane %v2554, %v2676
      %v2679 = vunpack.c.l.s4 1983009808
      %v2680 = vunpack.c.0.s8 %v2679
      %v2681 = vlaneseq
      %v2682 = vshrl.u32 %v2681, 7
      %v2683 = vsub.s32 %v2680, %v2682
      %v2684 = vrot.slane %v2670, %v2683
      %v2685 = vcombine.high %v2677, %v2677
      %v2686 = vcombine.high %v2684, %v2684
      %v2687 = vcombine.high %v2555, %v2555
      %v2689 = vunpack.c.l.s4 1983009808
      %v2690 = vunpack.c.0.s8 %v2689
      %v2691 = vlaneseq
      %v2692 = vshrl.u32 %v2691, 7
      %v2693 = vsub.s32 %v2690, %v2692
      %v2694 = vrot.slane %v2555, %v2693
      %v2696 = vunpack.c.l.s4 1983009808
      %v2697 = vunpack.c.0.s8 %v2696
      %v2698 = vlaneseq
      %v2699 = vshrl.u32 %v2698, 7
      %v2700 = vsub.s32 %v2697, %v2699
      %v2701 = vrot.slane %v2687, %v2700
      %v2702 = vcombine.high %v2694, %v2694
      %v2703 = vcombine.high %v2701, %v2701
      %v2704 = vcombine.high %v2556, %v2556
      %v2706 = vunpack.c.l.s4 1983009808
      %v2707 = vunpack.c.0.s8 %v2706
      %v2708 = vlaneseq
      %v2709 = vshrl.u32 %v2708, 7
      %v2710 = vsub.s32 %v2707, %v2709
      %v2711 = vrot.slane %v2556, %v2710
      %v2713 = vunpack.c.l.s4 1983009808
      %v2714 = vunpack.c.0.s8 %v2713
      %v2715 = vlaneseq
      %v2716 = vshrl.u32 %v2715, 7
      %v2717 = vsub.s32 %v2714, %v2716
      %v2718 = vrot.slane %v2704, %v2717
      %v2719 = vcombine.high %v2711, %v2711
      %v2720 = vcombine.high %v2718, %v2718
      %v2721 = vcombine.high %v2557, %v2557
      %v2723 = vunpack.c.l.s4 1983009808
      %v2724 = vunpack.c.0.s8 %v2723
      %v2725 = vlaneseq
      %v2726 = vshrl.u32 %v2725, 7
      %v2727 = vsub.s32 %v2724, %v2726
      %v2728 = vrot.slane %v2557, %v2727
      %v2730 = vunpack.c.l.s4 1983009808
      %v2731 = vunpack.c.0.s8 %v2730
      %v2732 = vlaneseq
      %v2733 = vshrl.u32 %v2732, 7
      %v2734 = vsub.s32 %v2731, %v2733
      %v2735 = vrot.slane %v2721, %v2734
      %v2736 = vcombine.high %v2728, %v2728
      %v2737 = vcombine.high %v2735, %v2735
      %v2738 = vcombine.high %v2558, %v2558
      %v2740 = vunpack.c.l.s4 1983009808
      %v2741 = vunpack.c.0.s8 %v2740
      %v2742 = vlaneseq
      %v2743 = vshrl.u32 %v2742, 7
      %v2744 = vsub.s32 %v2741, %v2743
      %v2745 = vrot.slane %v2558, %v2744
      %v2747 = vunpack.c.l.s4 1983009808
      %v2748 = vunpack.c.0.s8 %v2747
      %v2749 = vlaneseq
      %v2750 = vshrl.u32 %v2749, 7
      %v2751 = vsub.s32 %v2748, %v2750
      %v2752 = vrot.slane %v2738, %v2751
      %v2753 = vcombine.high %v2745, %v2745
      %v2754 = vcombine.high %v2752, %v2752
      %v2755 = vcombine.high %v2559, %v2559
      %v2757 = vunpack.c.l.s4 1983009808
      %v2758 = vunpack.c.0.s8 %v2757
      %v2759 = vlaneseq
      %v2760 = vshrl.u32 %v2759, 7
      %v2761 = vsub.s32 %v2758, %v2760
      %v2762 = vrot.slane %v2559, %v2761
      %v2764 = vunpack.c.l.s4 1983009808
      %v2765 = vunpack.c.0.s8 %v2764
      %v2766 = vlaneseq
      %v2767 = vshrl.u32 %v2766, 7
      %v2768 = vsub.s32 %v2765, %v2767
      %v2769 = vrot.slane %v2755, %v2768
      %v2770 = vcombine.high %v2762, %v2762
      %v2771 = vcombine.high %v2769, %v2769
      %v2772 = vcombine.high %v2560, %v2560
      %v2774 = vunpack.c.l.s4 1983009808
      %v2775 = vunpack.c.0.s8 %v2774
      %v2776 = vlaneseq
      %v2777 = vshrl.u32 %v2776, 7
      %v2778 = vsub.s32 %v2775, %v2777
      %v2779 = vrot.slane %v2560, %v2778
      %v2781 = vunpack.c.l.s4 1983009808
      %v2782 = vunpack.c.0.s8 %v2781
      %v2783 = vlaneseq
      %v2784 = vshrl.u32 %v2783, 7
      %v2785 = vsub.s32 %v2782, %v2784
      %v2786 = vrot.slane %v2772, %v2785
      %v2787 = vcombine.high %v2779, %v2779
      %v2788 = vcombine.high %v2786, %v2786
      %v2789 = vcombine.high %v2561, %v2561
      %v2791 = vunpack.c.l.s4 1983009808
      %v2792 = vunpack.c.0.s8 %v2791
      %v2793 = vlaneseq
      %v2794 = vshrl.u32 %v2793, 7
      %v2795 = vsub.s32 %v2792, %v2794
      %v2796 = vrot.slane %v2561, %v2795
      %v2798 = vunpack.c.l.s4 1983009808
      %v2799 = vunpack.c.0.s8 %v2798
      %v2800 = vlaneseq
      %v2801 = vshrl.u32 %v2800, 7
      %v2802 = vsub.s32 %v2799, %v2801
      %v2803 = vrot.slane %v2789, %v2802
      %v2804 = vcombine.high %v2796, %v2796
      %v2805 = vcombine.high %v2803, %v2803
      %v2806 = vcombine.high %v2562, %v2562
      %v2808 = vunpack.c.l.s4 1983009808
      %v2809 = vunpack.c.0.s8 %v2808
      %v2810 = vlaneseq
      %v2811 = vshrl.u32 %v2810, 7
      %v2812 = vsub.s32 %v2809, %v2811
      %v2813 = vrot.slane %v2562, %v2812
      %v2815 = vunpack.c.l.s4 1983009808
      %v2816 = vunpack.c.0.s8 %v2815
      %v2817 = vlaneseq
      %v2818 = vshrl.u32 %v2817, 7
      %v2819 = vsub.s32 %v2816, %v2818
      %v2820 = vrot.slane %v2806, %v2819
      %v2821 = vcombine.high %v2813, %v2813
      %v2822 = vcombine.high %v2820, %v2820
      %v2823 = vcombine.high %v2563, %v2563
      %v2825 = vunpack.c.l.s4 1983009808
      %v2826 = vunpack.c.0.s8 %v2825
      %v2827 = vlaneseq
      %v2828 = vshrl.u32 %v2827, 7
      %v2829 = vsub.s32 %v2826, %v2828
      %v2830 = vrot.slane %v2563, %v2829
      %v2832 = vunpack.c.l.s4 1983009808
      %v2833 = vunpack.c.0.s8 %v2832
      %v2834 = vlaneseq
      %v2835 = vshrl.u32 %v2834, 7
      %v2836 = vsub.s32 %v2833, %v2835
      %v2837 = vrot.slane %v2823, %v2836
      %v2838 = vcombine.high %v2830, %v2830
      %v2839 = vcombine.high %v2837, %v2837
      %v2840 = vcombine.high %v2564, %v2564
      %v2842 = vunpack.c.l.s4 1983009808
      %v2843 = vunpack.c.0.s8 %v2842
      %v2844 = vlaneseq
      %v2845 = vshrl.u32 %v2844, 7
      %v2846 = vsub.s32 %v2843, %v2845
      %v2847 = vrot.slane %v2564, %v2846
      %v2849 = vunpack.c.l.s4 1983009808
      %v2850 = vunpack.c.0.s8 %v2849
      %v2851 = vlaneseq
      %v2852 = vshrl.u32 %v2851, 7
      %v2853 = vsub.s32 %v2850, %v2852
      %v2854 = vrot.slane %v2840, %v2853
      %v2855 = vcombine.high %v2847, %v2847
      %v2856 = vcombine.high %v2854, %v2854
      %v2857 = vcombine.high %v2565, %v2565
      %v2859 = vunpack.c.l.s4 1983009808
      %v2860 = vunpack.c.0.s8 %v2859
      %v2861 = vlaneseq
      %v2862 = vshrl.u32 %v2861, 7
      %v2863 = vsub.s32 %v2860, %v2862
      %v2864 = vrot.slane %v2565, %v2863
      %v2866 = vunpack.c.l.s4 1983009808
      %v2867 = vunpack.c.0.s8 %v2866
      %v2868 = vlaneseq
      %v2869 = vshrl.u32 %v2868, 7
      %v2870 = vsub.s32 %v2867, %v2869
      %v2871 = vrot.slane %v2857, %v2870
      %v2872 = vcombine.high %v2864, %v2864
      %v2873 = vcombine.high %v2871, %v2871
      %v2874 = vcombine.high %v2566, %v2566
      %v2876 = vunpack.c.l.s4 1983009808
      %v2877 = vunpack.c.0.s8 %v2876
      %v2878 = vlaneseq
      %v2879 = vshrl.u32 %v2878, 7
      %v2880 = vsub.s32 %v2877, %v2879
      %v2881 = vrot.slane %v2566, %v2880
      %v2883 = vunpack.c.l.s4 1983009808
      %v2884 = vunpack.c.0.s8 %v2883
      %v2885 = vlaneseq
      %v2886 = vshrl.u32 %v2885, 7
      %v2887 = vsub.s32 %v2884, %v2886
      %v2888 = vrot.slane %v2874, %v2887
      %v2889 = vcombine.high %v2881, %v2881
      %v2890 = vcombine.high %v2888, %v2888
      %v2963 = vrot.slane %v2592, 7
      %v2964 = vrot.slane %v2963, 2
      %v2965 = vrot.slane %v2600, 7
      %v2966 = vrot.slane %v2965, 2
      %v2967 = vrot.slane %v2599, 7
      %v2968 = vrot.slane %v2967, 2
      %v2969 = vrot.slane %v2601, 7
      %v2970 = vrot.slane %v2969, 2
      %v2971 = vrot.slane %v2609, 7
      %v2972 = vrot.slane %v2971, 2
      %v2973 = vrot.slane %v2617, 7
      %v2974 = vrot.slane %v2973, 2
      %v2975 = vrot.slane %v2616, 7
      %v2976 = vrot.slane %v2975, 2
      %v2977 = vrot.slane %v2618, 7
      %v2978 = vrot.slane %v2977, 2
      %v2979 = vrot.slane %v2626, 7
      %v2980 = vrot.slane %v2979, 2
      %v2981 = vrot.slane %v2634, 7
      %v2982 = vrot.slane %v2981, 2
      %v2983 = vrot.slane %v2633, 7
      %v2984 = vrot.slane %v2983, 2
      %v2985 = vrot.slane %v2635, 7
      %v2986 = vrot.slane %v2985, 2
      %v2987 = vrot.slane %v2643, 7
      %v2988 = vrot.slane %v2987, 2
      %v2989 = vrot.slane %v2651, 7
      %v2990 = vrot.slane %v2989, 2
      %v2991 = vrot.slane %v2650, 7
      %v2992 = vrot.slane %v2991, 2
      %v2993 = vrot.slane %v2652, 7
      %v2994 = vrot.slane %v2993, 2
      %v2995 = vrot.slane %v2660, 7
      %v2996 = vrot.slane %v2995, 2
      %v2997 = vrot.slane %v2668, 7
      %v2998 = vrot.slane %v2997, 2
      %v2999 = vrot.slane %v2667, 7
      %v3000 = vrot.slane %v2999, 2
      %v3001 = vrot.slane %v2669, 7
      %v3002 = vrot.slane %v3001, 2
      %v3003 = vrot.slane %v2677, 7
      %v3004 = vrot.slane %v3003, 2
      %v3005 = vrot.slane %v2685, 7
      %v3006 = vrot.slane %v3005, 2
      %v3007 = vrot.slane %v2684, 7
      %v3008 = vrot.slane %v3007, 2
      %v3009 = vrot.slane %v2686, 7
      %v3010 = vrot.slane %v3009, 2
      %v3011 = vrot.slane %v2694, 7
      %v3012 = vrot.slane %v3011, 2
      %v3013 = vrot.slane %v2702, 7
      %v3014 = vrot.slane %v3013, 2
      %v3015 = vrot.slane %v2701, 7
      %v3016 = vrot.slane %v3015, 2
      %v3017 = vrot.slane %v2703, 7
      %v3018 = vrot.slane %v3017, 2
      %v3019 = vrot.slane %v2711, 7
      %v3020 = vrot.slane %v3019, 2
      %v3021 = vrot.slane %v2719, 7
      %v3022 = vrot.slane %v3021, 2
      %v3023 = vrot.slane %v2718, 7
      %v3024 = vrot.slane %v3023, 2
      %v3025 = vrot.slane %v2720, 7
      %v3026 = vrot.slane %v3025, 2
      %v3027 = vrot.slane %v2728, 7
      %v3028 = vrot.slane %v3027, 2
      %v3029 = vrot.slane %v2736, 7
      %v3030 = vrot.slane %v3029, 2
      %v3031 = vrot.slane %v2735, 7
      %v3032 = vrot.slane %v3031, 2
      %v3033 = vrot.slane %v2737, 7
      %v3034 = vrot.slane %v3033, 2
      %v3035 = vrot.slane %v2745, 7
      %v3036 = vrot.slane %v3035, 2
      %v3037 = vrot.slane %v2753, 7
      %v3038 = vrot.slane %v3037, 2
      %v3039 = vrot.slane %v2752, 7
      %v3040 = vrot.slane %v3039, 2
      %v3041 = vrot.slane %v2754, 7
      %v3042 = vrot.slane %v3041, 2
      %v3043 = vrot.slane %v2762, 7
      %v3044 = vrot.slane %v3043, 2
      %v3045 = vrot.slane %v2770, 7
      %v3046 = vrot.slane %v3045, 2
      %v3047 = vrot.slane %v2769, 7
      %v3048 = vrot.slane %v3047, 2
      %v3049 = vrot.slane %v2771, 7
      %v3050 = vrot.slane %v3049, 2
      %v3051 = vrot.slane %v2779, 7
      %v3052 = vrot.slane %v3051, 2
      %v3053 = vrot.slane %v2787, 7
      %v3054 = vrot.slane %v3053, 2
      %v3055 = vrot.slane %v2786, 7
      %v3056 = vrot.slane %v3055, 2
      %v3057 = vrot.slane %v2788, 7
      %v3058 = vrot.slane %v3057, 2
      %v3059 = vrot.slane %v2796, 7
      %v3060 = vrot.slane %v3059, 2
      %v3061 = vrot.slane %v2804, 7
      %v3062 = vrot.slane %v3061, 2
      %v3063 = vrot.slane %v2803, 7
      %v3064 = vrot.slane %v3063, 2
      %v3065 = vrot.slane %v2805, 7
      %v3066 = vrot.slane %v3065, 2
      %v3067 = vrot.slane %v2813, 7
      %v3068 = vrot.slane %v3067, 2
      %v3069 = vrot.slane %v2821, 7
      %v3070 = vrot.slane %v3069, 2
      %v3071 = vrot.slane %v2820, 7
      %v3072 = vrot.slane %v3071, 2
      %v3073 = vrot.slane %v2822, 7
      %v3074 = vrot.slane %v3073, 2
      %v3075 = vrot.slane %v2830, 7
      %v3076 = vrot.slane %v3075, 2
      %v3077 = vrot.slane %v2838, 7
      %v3078 = vrot.slane %v3077, 2
      %v3079 = vrot.slane %v2837, 7
      %v3080 = vrot.slane %v3079, 2
      %v3081 = vrot.slane %v2839, 7
      %v3082 = vrot.slane %v3081, 2
      %v3083 = vrot.slane %v2847, 7
      %v3084 = vrot.slane %v3083, 2
      %v3085 = vrot.slane %v2855, 7
      %v3086 = vrot.slane %v3085, 2
      %v3087 = vrot.slane %v2854, 7
      %v3088 = vrot.slane %v3087, 2
      %v3089 = vrot.slane %v2856, 7
      %v3090 = vrot.slane %v3089, 2
      %v3091 = vrot.slane %v2864, 7
      %v3092 = vrot.slane %v3091, 2
      %v3093 = vrot.slane %v2872, 7
      %v3094 = vrot.slane %v3093, 2
      %v3095 = vrot.slane %v2871, 7
      %v3096 = vrot.slane %v3095, 2
      %v3097 = vrot.slane %v2873, 7
      %v3098 = vrot.slane %v3097, 2
      %v3099 = vrot.slane %v2881, 7
      %v3100 = vrot.slane %v3099, 2
      %v3101 = vrot.slane %v2889, 7
      %v3102 = vrot.slane %v3101, 2
      %v3103 = vrot.slane %v2888, 7
      %v3104 = vrot.slane %v3103, 2
      %v3105 = vrot.slane %v2890, 7
      %v3106 = vrot.slane %v3105, 2
      %v3179 = vmax.f32 %v2592, %v2964
      %v3180 = vmax.f32 %v2600, %v2966
      %v3181 = vmax.f32 %v2599, %v2968
      %v3182 = vmax.f32 %v2601, %v2970
      %v3183 = vmax.f32 %v2609, %v2972
      %v3184 = vmax.f32 %v2617, %v2974
      %v3185 = vmax.f32 %v2616, %v2976
      %v3186 = vmax.f32 %v2618, %v2978
      %v3187 = vmax.f32 %v2626, %v2980
      %v3188 = vmax.f32 %v2634, %v2982
      %v3189 = vmax.f32 %v2633, %v2984
      %v3190 = vmax.f32 %v2635, %v2986
      %v3191 = vmax.f32 %v2643, %v2988
      %v3192 = vmax.f32 %v2651, %v2990
      %v3193 = vmax.f32 %v2650, %v2992
      %v3194 = vmax.f32 %v2652, %v2994
      %v3195 = vmax.f32 %v2660, %v2996
      %v3196 = vmax.f32 %v2668, %v2998
      %v3197 = vmax.f32 %v2667, %v3000
      %v3198 = vmax.f32 %v2669, %v3002
      %v3199 = vmax.f32 %v2677, %v3004
      %v3200 = vmax.f32 %v2685, %v3006
      %v3201 = vmax.f32 %v2684, %v3008
      %v3202 = vmax.f32 %v2686, %v3010
      %v3203 = vmax.f32 %v2694, %v3012
      %v3204 = vmax.f32 %v2702, %v3014
      %v3205 = vmax.f32 %v2701, %v3016
      %v3206 = vmax.f32 %v2703, %v3018
      %v3207 = vmax.f32 %v2711, %v3020
      %v3208 = vmax.f32 %v2719, %v3022
      %v3209 = vmax.f32 %v2718, %v3024
      %v3210 = vmax.f32 %v2720, %v3026
      %v3211 = vmax.f32 %v2728, %v3028
      %v3212 = vmax.f32 %v2736, %v3030
      %v3213 = vmax.f32 %v2735, %v3032
      %v3214 = vmax.f32 %v2737, %v3034
      %v3215 = vmax.f32 %v2745, %v3036
      %v3216 = vmax.f32 %v2753, %v3038
      %v3217 = vmax.f32 %v2752, %v3040
      %v3218 = vmax.f32 %v2754, %v3042
      %v3219 = vmax.f32 %v2762, %v3044
      %v3220 = vmax.f32 %v2770, %v3046
      %v3221 = vmax.f32 %v2769, %v3048
      %v3222 = vmax.f32 %v2771, %v3050
      %v3223 = vmax.f32 %v2779, %v3052
      %v3224 = vmax.f32 %v2787, %v3054
      %v3225 = vmax.f32 %v2786, %v3056
      %v3226 = vmax.f32 %v2788, %v3058
      %v3227 = vmax.f32 %v2796, %v3060
      %v3228 = vmax.f32 %v2804, %v3062
      %v3229 = vmax.f32 %v2803, %v3064
      %v3230 = vmax.f32 %v2805, %v3066
      %v3231 = vmax.f32 %v2813, %v3068
      %v3232 = vmax.f32 %v2821, %v3070
      %v3233 = vmax.f32 %v2820, %v3072
      %v3234 = vmax.f32 %v2822, %v3074
      %v3235 = vmax.f32 %v2830, %v3076
      %v3236 = vmax.f32 %v2838, %v3078
      %v3237 = vmax.f32 %v2837, %v3080
      %v3238 = vmax.f32 %v2839, %v3082
      %v3239 = vmax.f32 %v2847, %v3084
      %v3240 = vmax.f32 %v2855, %v3086
      %v3241 = vmax.f32 %v2854, %v3088
      %v3242 = vmax.f32 %v2856, %v3090
      %v3243 = vmax.f32 %v2864, %v3092
      %v3244 = vmax.f32 %v2872, %v3094
      %v3245 = vmax.f32 %v2871, %v3096
      %v3246 = vmax.f32 %v2873, %v3098
      %v3247 = vmax.f32 %v2881, %v3100
      %v3248 = vmax.f32 %v2889, %v3102
      %v3249 = vmax.f32 %v2888, %v3104
      %v3250 = vmax.f32 %v2890, %v3106
      %v3275 = vlaneseq
      %v3276 = vshrl.u32 %v3275, 7
      %v3277 = vsub.s32 0, %v3276
      %v3278 = vrot.slane %v3179, %v3277
      %v3279 = vlaneseq
      %v3280 = vshrl.u32 %v3279, 7
      %v3281 = vsub.s32 0, %v3280
      %v3282 = vrot.slane %v3180, %v3281
      %v3283 = vlaneseq
      %v3284 = vshrl.u32 %v3283, 7
      %v3285 = vsub.s32 0, %v3284
      %v3286 = vrot.slane %v3185, %v3285
      %v3287 = vlaneseq
      %v3288 = vshrl.u32 %v3287, 7
      %v3289 = vsub.s32 0, %v3288
      %v3290 = vrot.slane %v3186, %v3289
      %v3291 = vlaneseq
      %v3292 = vshrl.u32 %v3291, 7
      %v3293 = vsub.s32 0, %v3292
      %v3294 = vrot.slane %v3191, %v3293
      %v3295 = vlaneseq
      %v3296 = vshrl.u32 %v3295, 7
      %v3297 = vsub.s32 0, %v3296
      %v3298 = vrot.slane %v3192, %v3297
      %v3299 = vlaneseq
      %v3300 = vshrl.u32 %v3299, 7
      %v3301 = vsub.s32 0, %v3300
      %v3302 = vrot.slane %v3197, %v3301
      %v3303 = vlaneseq
      %v3304 = vshrl.u32 %v3303, 7
      %v3305 = vsub.s32 0, %v3304
      %v3306 = vrot.slane %v3198, %v3305
      %v3307 = vlaneseq
      %v3308 = vshrl.u32 %v3307, 7
      %v3309 = vsub.s32 0, %v3308
      %v3310 = vrot.slane %v3203, %v3309
      %v3311 = vlaneseq
      %v3312 = vshrl.u32 %v3311, 7
      %v3313 = vsub.s32 0, %v3312
      %v3314 = vrot.slane %v3204, %v3313
      %v3315 = vlaneseq
      %v3316 = vshrl.u32 %v3315, 7
      %v3317 = vsub.s32 0, %v3316
      %v3318 = vrot.slane %v3209, %v3317
      %v3319 = vlaneseq
      %v3320 = vshrl.u32 %v3319, 7
      %v3321 = vsub.s32 0, %v3320
      %v3322 = vrot.slane %v3210, %v3321
      %v3323 = vlaneseq
      %v3324 = vshrl.u32 %v3323, 7
      %v3325 = vsub.s32 0, %v3324
      %v3326 = vrot.slane %v3215, %v3325
      %v3327 = vlaneseq
      %v3328 = vshrl.u32 %v3327, 7
      %v3329 = vsub.s32 0, %v3328
      %v3330 = vrot.slane %v3216, %v3329
      %v3331 = vlaneseq
      %v3332 = vshrl.u32 %v3331, 7
      %v3333 = vsub.s32 0, %v3332
      %v3334 = vrot.slane %v3221, %v3333
      %v3335 = vlaneseq
      %v3336 = vshrl.u32 %v3335, 7
      %v3337 = vsub.s32 0, %v3336
      %v3338 = vrot.slane %v3222, %v3337
      %v3339 = vlaneseq
      %v3340 = vshrl.u32 %v3339, 7
      %v3341 = vsub.s32 0, %v3340
      %v3342 = vrot.slane %v3227, %v3341
      %v3343 = vlaneseq
      %v3344 = vshrl.u32 %v3343, 7
      %v3345 = vsub.s32 0, %v3344
      %v3346 = vrot.slane %v3228, %v3345
      %v3347 = vlaneseq
      %v3348 = vshrl.u32 %v3347, 7
      %v3349 = vsub.s32 0, %v3348
      %v3350 = vrot.slane %v3233, %v3349
      %v3351 = vlaneseq
      %v3352 = vshrl.u32 %v3351, 7
      %v3353 = vsub.s32 0, %v3352
      %v3354 = vrot.slane %v3234, %v3353
      %v3355 = vlaneseq
      %v3356 = vshrl.u32 %v3355, 7
      %v3357 = vsub.s32 0, %v3356
      %v3358 = vrot.slane %v3239, %v3357
      %v3359 = vlaneseq
      %v3360 = vshrl.u32 %v3359, 7
      %v3361 = vsub.s32 0, %v3360
      %v3362 = vrot.slane %v3240, %v3361
      %v3363 = vlaneseq
      %v3364 = vshrl.u32 %v3363, 7
      %v3365 = vsub.s32 0, %v3364
      %v3366 = vrot.slane %v3245, %v3365
      %v3367 = vlaneseq
      %v3368 = vshrl.u32 %v3367, 7
      %v3369 = vsub.s32 0, %v3368
      %v3370 = vrot.slane %v3246, %v3369
      %vm3371 = vcmask 1041409
      %v3372 = vsel %vm3371, %v3282, %v3278
      %v3373 = vsel %vm3371, %v3290, %v3286
      %v3374 = vsel %vm3371, %v3298, %v3294
      %v3375 = vsel %vm3371, %v3306, %v3302
      %v3376 = vsel %vm3371, %v3314, %v3310
      %v3377 = vsel %vm3371, %v3322, %v3318
      %v3378 = vsel %vm3371, %v3330, %v3326
      %v3379 = vsel %vm3371, %v3338, %v3334
      %v3380 = vsel %vm3371, %v3346, %v3342
      %v3381 = vsel %vm3371, %v3354, %v3350
      %v3382 = vsel %vm3371, %v3362, %v3358
      %v3383 = vsel %vm3371, %v3370, %v3366
      %v3408 = vlaneseq
      %v3409 = vshrl.u32 %v3408, 7
      %v3410 = vsub.s32 0, %v3409
      %v3411 = vrot.slane %v3181, %v3410
      %v3412 = vlaneseq
      %v3413 = vshrl.u32 %v3412, 7
      %v3414 = vsub.s32 0, %v3413
      %v3415 = vrot.slane %v3187, %v3414
      %v3416 = vlaneseq
      %v3417 = vshrl.u32 %v3416, 7
      %v3418 = vsub.s32 0, %v3417
      %v3419 = vrot.slane %v3193, %v3418
      %v3420 = vlaneseq
      %v3421 = vshrl.u32 %v3420, 7
      %v3422 = vsub.s32 0, %v3421
      %v3423 = vrot.slane %v3199, %v3422
      %v3424 = vlaneseq
      %v3425 = vshrl.u32 %v3424, 7
      %v3426 = vsub.s32 0, %v3425
      %v3427 = vrot.slane %v3205, %v3426
      %v3428 = vlaneseq
      %v3429 = vshrl.u32 %v3428, 7
      %v3430 = vsub.s32 0, %v3429
      %v3431 = vrot.slane %v3211, %v3430
      %v3432 = vlaneseq
      %v3433 = vshrl.u32 %v3432, 7
      %v3434 = vsub.s32 0, %v3433
      %v3435 = vrot.slane %v3217, %v3434
      %v3436 = vlaneseq
      %v3437 = vshrl.u32 %v3436, 7
      %v3438 = vsub.s32 0, %v3437
      %v3439 = vrot.slane %v3223, %v3438
      %v3440 = vlaneseq
      %v3441 = vshrl.u32 %v3440, 7
      %v3442 = vsub.s32 0, %v3441
      %v3443 = vrot.slane %v3229, %v3442
      %v3444 = vlaneseq
      %v3445 = vshrl.u32 %v3444, 7
      %v3446 = vsub.s32 0, %v3445
      %v3447 = vrot.slane %v3235, %v3446
      %v3448 = vlaneseq
      %v3449 = vshrl.u32 %v3448, 7
      %v3450 = vsub.s32 0, %v3449
      %v3451 = vrot.slane %v3241, %v3450
      %v3452 = vlaneseq
      %v3453 = vshrl.u32 %v3452, 7
      %v3454 = vsub.s32 0, %v3453
      %v3455 = vrot.slane %v3247, %v3454
      %v3456 = vsel %vm3371, %v3411, %v3282
      %v3457 = vsel %vm3371, %v3415, %v3290
      %v3458 = vsel %vm3371, %v3419, %v3298
      %v3459 = vsel %vm3371, %v3423, %v3306
      %v3460 = vsel %vm3371, %v3427, %v3314
      %v3461 = vsel %vm3371, %v3431, %v3322
      %v3462 = vsel %vm3371, %v3435, %v3330
      %v3463 = vsel %vm3371, %v3439, %v3338
      %v3464 = vsel %vm3371, %v3443, %v3346
      %v3465 = vsel %vm3371, %v3447, %v3354
      %v3466 = vsel %vm3371, %v3451, %v3362
      %v3467 = vsel %vm3371, %v3455, %v3370
      %3468 = vrot.lane.b32.xlu0 %v3456, 32
      %v3469 = vpop.permute.xlu0 %3468
      %3470 = vrot.lane.b32.xlu0 %v3457, 32
      %v3471 = vpop.permute.xlu0 %3470
      %3472 = vrot.lane.b32.xlu0 %v3458, 32
      %v3473 = vpop.permute.xlu0 %3472
      %3474 = vrot.lane.b32.xlu0 %v3459, 32
      %v3475 = vpop.permute.xlu0 %3474
      %3476 = vrot.lane.b32.xlu0 %v3460, 32
      %v3477 = vpop.permute.xlu0 %3476
      %3478 = vrot.lane.b32.xlu0 %v3461, 32
      %v3479 = vpop.permute.xlu0 %3478
      %3480 = vrot.lane.b32.xlu0 %v3462, 32
      %v3481 = vpop.permute.xlu0 %3480
      %3482 = vrot.lane.b32.xlu0 %v3463, 32
      %v3483 = vpop.permute.xlu0 %3482
      %3484 = vrot.lane.b32.xlu0 %v3464, 32
      %v3485 = vpop.permute.xlu0 %3484
      %3486 = vrot.lane.b32.xlu0 %v3465, 32
      %v3487 = vpop.permute.xlu0 %3486
      %3488 = vrot.lane.b32.xlu0 %v3466, 32
      %v3489 = vpop.permute.xlu0 %3488
      %3490 = vrot.lane.b32.xlu0 %v3467, 32
      %v3491 = vpop.permute.xlu0 %3490
      %v3516 = vlaneseq
      %v3517 = vshrl.u32 %v3516, 7
      %v3518 = vsub.s32 0, %v3517
      %v3519 = vrot.slane %v3182, %v3518
      %v3520 = vlaneseq
      %v3521 = vshrl.u32 %v3520, 7
      %v3522 = vsub.s32 0, %v3521
      %v3523 = vrot.slane %v3188, %v3522
      %v3524 = vlaneseq
      %v3525 = vshrl.u32 %v3524, 7
      %v3526 = vsub.s32 0, %v3525
      %v3527 = vrot.slane %v3194, %v3526
      %v3528 = vlaneseq
      %v3529 = vshrl.u32 %v3528, 7
      %v3530 = vsub.s32 0, %v3529
      %v3531 = vrot.slane %v3200, %v3530
      %v3532 = vlaneseq
      %v3533 = vshrl.u32 %v3532, 7
      %v3534 = vsub.s32 0, %v3533
      %v3535 = vrot.slane %v3206, %v3534
      %v3536 = vlaneseq
      %v3537 = vshrl.u32 %v3536, 7
      %v3538 = vsub.s32 0, %v3537
      %v3539 = vrot.slane %v3212, %v3538
      %v3540 = vlaneseq
      %v3541 = vshrl.u32 %v3540, 7
      %v3542 = vsub.s32 0, %v3541
      %v3543 = vrot.slane %v3218, %v3542
      %v3544 = vlaneseq
      %v3545 = vshrl.u32 %v3544, 7
      %v3546 = vsub.s32 0, %v3545
      %v3547 = vrot.slane %v3224, %v3546
      %v3548 = vlaneseq
      %v3549 = vshrl.u32 %v3548, 7
      %v3550 = vsub.s32 0, %v3549
      %v3551 = vrot.slane %v3230, %v3550
      %v3552 = vlaneseq
      %v3553 = vshrl.u32 %v3552, 7
      %v3554 = vsub.s32 0, %v3553
      %v3555 = vrot.slane %v3236, %v3554
      %v3556 = vlaneseq
      %v3557 = vshrl.u32 %v3556, 7
      %v3558 = vsub.s32 0, %v3557
      %v3559 = vrot.slane %v3242, %v3558
      %v3560 = vlaneseq
      %v3561 = vshrl.u32 %v3560, 7
      %v3562 = vsub.s32 0, %v3561
      %v3563 = vrot.slane %v3248, %v3562
      %v3564 = vsel %vm3371, %v3519, %v3411
      %v3565 = vsel %vm3371, %v3523, %v3415
      %v3566 = vsel %vm3371, %v3527, %v3419
      %v3567 = vsel %vm3371, %v3531, %v3423
      %v3568 = vsel %vm3371, %v3535, %v3427
      %v3569 = vsel %vm3371, %v3539, %v3431
      %v3570 = vsel %vm3371, %v3543, %v3435
      %v3571 = vsel %vm3371, %v3547, %v3439
      %v3572 = vsel %vm3371, %v3551, %v3443
      %v3573 = vsel %vm3371, %v3555, %v3447
      %v3574 = vsel %vm3371, %v3559, %v3451
      %v3575 = vsel %vm3371, %v3563, %v3455
      %3576 = vrot.lane.b32.xlu0 %v3564, 64
      %v3577 = vpop.permute.xlu0 %3576
      %3578 = vrot.lane.b32.xlu0 %v3565, 64
      %v3579 = vpop.permute.xlu0 %3578
      %3580 = vrot.lane.b32.xlu0 %v3566, 64
      %v3581 = vpop.permute.xlu0 %3580
      %3582 = vrot.lane.b32.xlu0 %v3567, 64
      %v3583 = vpop.permute.xlu0 %3582
      %3584 = vrot.lane.b32.xlu0 %v3568, 64
      %v3585 = vpop.permute.xlu0 %3584
      %3586 = vrot.lane.b32.xlu0 %v3569, 64
      %v3587 = vpop.permute.xlu0 %3586
      %3588 = vrot.lane.b32.xlu0 %v3570, 64
      %v3589 = vpop.permute.xlu0 %3588
      %3590 = vrot.lane.b32.xlu0 %v3571, 64
      %v3591 = vpop.permute.xlu0 %3590
      %3592 = vrot.lane.b32.xlu0 %v3572, 64
      %v3593 = vpop.permute.xlu0 %3592
      %3594 = vrot.lane.b32.xlu0 %v3573, 64
      %v3595 = vpop.permute.xlu0 %3594
      %3596 = vrot.lane.b32.xlu0 %v3574, 64
      %v3597 = vpop.permute.xlu0 %3596
      %3598 = vrot.lane.b32.xlu0 %v3575, 64
      %v3599 = vpop.permute.xlu0 %3598
      %v3624 = vlaneseq
      %v3625 = vshrl.u32 %v3624, 7
      %v3626 = vsub.s32 0, %v3625
      %v3627 = vrot.slane %v3183, %v3626
      %v3628 = vlaneseq
      %v3629 = vshrl.u32 %v3628, 7
      %v3630 = vsub.s32 0, %v3629
      %v3631 = vrot.slane %v3189, %v3630
      %v3632 = vlaneseq
      %v3633 = vshrl.u32 %v3632, 7
      %v3634 = vsub.s32 0, %v3633
      %v3635 = vrot.slane %v3195, %v3634
      %v3636 = vlaneseq
      %v3637 = vshrl.u32 %v3636, 7
      %v3638 = vsub.s32 0, %v3637
      %v3639 = vrot.slane %v3201, %v3638
      %v3640 = vlaneseq
      %v3641 = vshrl.u32 %v3640, 7
      %v3642 = vsub.s32 0, %v3641
      %v3643 = vrot.slane %v3207, %v3642
      %v3644 = vlaneseq
      %v3645 = vshrl.u32 %v3644, 7
      %v3646 = vsub.s32 0, %v3645
      %v3647 = vrot.slane %v3213, %v3646
      %v3648 = vlaneseq
      %v3649 = vshrl.u32 %v3648, 7
      %v3650 = vsub.s32 0, %v3649
      %v3651 = vrot.slane %v3219, %v3650
      %v3652 = vlaneseq
      %v3653 = vshrl.u32 %v3652, 7
      %v3654 = vsub.s32 0, %v3653
      %v3655 = vrot.slane %v3225, %v3654
      %v3656 = vlaneseq
      %v3657 = vshrl.u32 %v3656, 7
      %v3658 = vsub.s32 0, %v3657
      %v3659 = vrot.slane %v3231, %v3658
      %v3660 = vlaneseq
      %v3661 = vshrl.u32 %v3660, 7
      %v3662 = vsub.s32 0, %v3661
      %v3663 = vrot.slane %v3237, %v3662
      %v3664 = vlaneseq
      %v3665 = vshrl.u32 %v3664, 7
      %v3666 = vsub.s32 0, %v3665
      %v3667 = vrot.slane %v3243, %v3666
      %v3668 = vlaneseq
      %v3669 = vshrl.u32 %v3668, 7
      %v3670 = vsub.s32 0, %v3669
      %v3671 = vrot.slane %v3249, %v3670
      %v3672 = vsel %vm3371, %v3627, %v3519
      %v3673 = vsel %vm3371, %v3631, %v3523
      %v3674 = vsel %vm3371, %v3635, %v3527
      %v3675 = vsel %vm3371, %v3639, %v3531
      %v3676 = vsel %vm3371, %v3643, %v3535
      %v3677 = vsel %vm3371, %v3647, %v3539
      %v3678 = vsel %vm3371, %v3651, %v3543
      %v3679 = vsel %vm3371, %v3655, %v3547
      %v3680 = vsel %vm3371, %v3659, %v3551
      %v3681 = vsel %vm3371, %v3663, %v3555
      %v3682 = vsel %vm3371, %v3667, %v3559
      %v3683 = vsel %vm3371, %v3671, %v3563
      %3684 = vrot.lane.b32.xlu0 %v3672, 96
      %v3685 = vpop.permute.xlu0 %3684
      %3686 = vrot.lane.b32.xlu0 %v3673, 96
      %v3687 = vpop.permute.xlu0 %3686
      %3688 = vrot.lane.b32.xlu0 %v3674, 96
      %v3689 = vpop.permute.xlu0 %3688
      %3690 = vrot.lane.b32.xlu0 %v3675, 96
      %v3691 = vpop.permute.xlu0 %3690
      %3692 = vrot.lane.b32.xlu0 %v3676, 96
      %v3693 = vpop.permute.xlu0 %3692
      %3694 = vrot.lane.b32.xlu0 %v3677, 96
      %v3695 = vpop.permute.xlu0 %3694
      %3696 = vrot.lane.b32.xlu0 %v3678, 96
      %v3697 = vpop.permute.xlu0 %3696
      %3698 = vrot.lane.b32.xlu0 %v3679, 96
      %v3699 = vpop.permute.xlu0 %3698
      %3700 = vrot.lane.b32.xlu0 %v3680, 96
      %v3701 = vpop.permute.xlu0 %3700
      %3702 = vrot.lane.b32.xlu0 %v3681, 96
      %v3703 = vpop.permute.xlu0 %3702
      %3704 = vrot.lane.b32.xlu0 %v3682, 96
      %v3705 = vpop.permute.xlu0 %3704
      %3706 = vrot.lane.b32.xlu0 %v3683, 96
      %v3707 = vpop.permute.xlu0 %3706
      %v3732 = vlaneseq
      %v3733 = vshrl.u32 %v3732, 7
      %v3734 = vsub.s32 0, %v3733
      %v3735 = vrot.slane %v3184, %v3734
      %v3736 = vlaneseq
      %v3737 = vshrl.u32 %v3736, 7
      %v3738 = vsub.s32 0, %v3737
      %v3739 = vrot.slane %v3190, %v3738
      %v3740 = vlaneseq
      %v3741 = vshrl.u32 %v3740, 7
      %v3742 = vsub.s32 0, %v3741
      %v3743 = vrot.slane %v3196, %v3742
      %v3744 = vlaneseq
      %v3745 = vshrl.u32 %v3744, 7
      %v3746 = vsub.s32 0, %v3745
      %v3747 = vrot.slane %v3202, %v3746
      %v3748 = vlaneseq
      %v3749 = vshrl.u32 %v3748, 7
      %v3750 = vsub.s32 0, %v3749
      %v3751 = vrot.slane %v3208, %v3750
      %v3752 = vlaneseq
      %v3753 = vshrl.u32 %v3752, 7
      %v3754 = vsub.s32 0, %v3753
      %v3755 = vrot.slane %v3214, %v3754
      %v3756 = vlaneseq
      %v3757 = vshrl.u32 %v3756, 7
      %v3758 = vsub.s32 0, %v3757
      %v3759 = vrot.slane %v3220, %v3758
      %v3760 = vlaneseq
      %v3761 = vshrl.u32 %v3760, 7
      %v3762 = vsub.s32 0, %v3761
      %v3763 = vrot.slane %v3226, %v3762
      %v3764 = vlaneseq
      %v3765 = vshrl.u32 %v3764, 7
      %v3766 = vsub.s32 0, %v3765
      %v3767 = vrot.slane %v3232, %v3766
      %v3768 = vlaneseq
      %v3769 = vshrl.u32 %v3768, 7
      %v3770 = vsub.s32 0, %v3769
      %v3771 = vrot.slane %v3238, %v3770
      %v3772 = vlaneseq
      %v3773 = vshrl.u32 %v3772, 7
      %v3774 = vsub.s32 0, %v3773
      %v3775 = vrot.slane %v3244, %v3774
      %v3776 = vlaneseq
      %v3777 = vshrl.u32 %v3776, 7
      %v3778 = vsub.s32 0, %v3777
      %v3779 = vrot.slane %v3250, %v3778
      %v3780 = vsel %vm3371, %v3735, %v3627
      %v3781 = vsel %vm3371, %v3739, %v3631
      %v3782 = vsel %vm3371, %v3743, %v3635
      %v3783 = vsel %vm3371, %v3747, %v3639
      %v3784 = vsel %vm3371, %v3751, %v3643
      %v3785 = vsel %vm3371, %v3755, %v3647
      %v3786 = vsel %vm3371, %v3759, %v3651
      %v3787 = vsel %vm3371, %v3763, %v3655
      %v3788 = vsel %vm3371, %v3767, %v3659
      %v3789 = vsel %vm3371, %v3771, %v3663
      %v3790 = vsel %vm3371, %v3775, %v3667
      %v3791 = vsel %vm3371, %v3779, %v3671
      %v3792 = vsel %vm2216, %v3372, %v3469
      %v3793 = vsel %vm2216, %v3373, %v3471
      %v3794 = vsel %vm2216, %v3374, %v3473
      %v3795 = vsel %vm2216, %v3375, %v3475
      %v3796 = vsel %vm2216, %v3376, %v3477
      %v3797 = vsel %vm2216, %v3377, %v3479
      %v3798 = vsel %vm2216, %v3378, %v3481
      %v3799 = vsel %vm2216, %v3379, %v3483
      %v3800 = vsel %vm2216, %v3380, %v3485
      %v3801 = vsel %vm2216, %v3381, %v3487
      %v3802 = vsel %vm2216, %v3382, %v3489
      %v3803 = vsel %vm2216, %v3383, %v3491
      %v3804 = vsel %vm1021, %v3792, %v3577
      %v3805 = vsel %vm1021, %v3793, %v3579
      %v3806 = vsel %vm1021, %v3794, %v3581
      %v3807 = vsel %vm1021, %v3795, %v3583
      %v3808 = vsel %vm1021, %v3796, %v3585
      %v3809 = vsel %vm1021, %v3797, %v3587
      %v3810 = vsel %vm1021, %v3798, %v3589
      %v3811 = vsel %vm1021, %v3799, %v3591
      %v3812 = vsel %vm1021, %v3800, %v3593
      %v3813 = vsel %vm1021, %v3801, %v3595
      %v3814 = vsel %vm1021, %v3802, %v3597
      %v3815 = vsel %vm1021, %v3803, %v3599
      %vm3816 = vcmask 785408
      %v3817 = vsel %vm3816, %v3804, %v3685
      %v3818 = vsel %vm3816, %v3805, %v3687
      %v3819 = vsel %vm3816, %v3806, %v3689
      %v3820 = vsel %vm3816, %v3807, %v3691
      %v3821 = vsel %vm3816, %v3808, %v3693
      %v3822 = vsel %vm3816, %v3809, %v3695
      %v3823 = vsel %vm3816, %v3810, %v3697
      %v3824 = vsel %vm3816, %v3811, %v3699
      %v3825 = vsel %vm3816, %v3812, %v3701
      %v3826 = vsel %vm3816, %v3813, %v3703
      %v3827 = vsel %vm3816, %v3814, %v3705
      %v3828 = vsel %vm3816, %v3815, %v3707
      %v3841 = vcombine.low %v3817, %v3780
      %v3843 = vunpack.c.l.s4 1983009808
      %v3844 = vunpack.c.0.s8 %v3843
      %v3845 = vlaneseq
      %v3846 = vshrl.u32 %v3845, 7
      %v3847 = vsub.s32 %v3844, %v3846
      %v3848 = vrot.slane %v3841, %v3847
      %v3849 = vcombine.low %v3818, %v3781
      %v3851 = vunpack.c.l.s4 1983009808
      %v3852 = vunpack.c.0.s8 %v3851
      %v3853 = vlaneseq
      %v3854 = vshrl.u32 %v3853, 7
      %v3855 = vsub.s32 %v3852, %v3854
      %v3856 = vrot.slane %v3849, %v3855
      %v3857 = vcombine.low %v3819, %v3782
      %v3859 = vunpack.c.l.s4 1983009808
      %v3860 = vunpack.c.0.s8 %v3859
      %v3861 = vlaneseq
      %v3862 = vshrl.u32 %v3861, 7
      %v3863 = vsub.s32 %v3860, %v3862
      %v3864 = vrot.slane %v3857, %v3863
      %v3865 = vcombine.low %v3820, %v3783
      %v3867 = vunpack.c.l.s4 1983009808
      %v3868 = vunpack.c.0.s8 %v3867
      %v3869 = vlaneseq
      %v3870 = vshrl.u32 %v3869, 7
      %v3871 = vsub.s32 %v3868, %v3870
      %v3872 = vrot.slane %v3865, %v3871
      %v3873 = vcombine.low %v3821, %v3784
      %v3875 = vunpack.c.l.s4 1983009808
      %v3876 = vunpack.c.0.s8 %v3875
      %v3877 = vlaneseq
      %v3878 = vshrl.u32 %v3877, 7
      %v3879 = vsub.s32 %v3876, %v3878
      %v3880 = vrot.slane %v3873, %v3879
      %v3881 = vcombine.low %v3822, %v3785
      %v3883 = vunpack.c.l.s4 1983009808
      %v3884 = vunpack.c.0.s8 %v3883
      %v3885 = vlaneseq
      %v3886 = vshrl.u32 %v3885, 7
      %v3887 = vsub.s32 %v3884, %v3886
      %v3888 = vrot.slane %v3881, %v3887
      %v3889 = vcombine.low %v3823, %v3786
      %v3891 = vunpack.c.l.s4 1983009808
      %v3892 = vunpack.c.0.s8 %v3891
      %v3893 = vlaneseq
      %v3894 = vshrl.u32 %v3893, 7
      %v3895 = vsub.s32 %v3892, %v3894
      %v3896 = vrot.slane %v3889, %v3895
      %v3897 = vcombine.low %v3824, %v3787
      %v3899 = vunpack.c.l.s4 1983009808
      %v3900 = vunpack.c.0.s8 %v3899
      %v3901 = vlaneseq
      %v3902 = vshrl.u32 %v3901, 7
      %v3903 = vsub.s32 %v3900, %v3902
      %v3904 = vrot.slane %v3897, %v3903
      %v3905 = vcombine.low %v3825, %v3788
      %v3907 = vunpack.c.l.s4 1983009808
      %v3908 = vunpack.c.0.s8 %v3907
      %v3909 = vlaneseq
      %v3910 = vshrl.u32 %v3909, 7
      %v3911 = vsub.s32 %v3908, %v3910
      %v3912 = vrot.slane %v3905, %v3911
      %v3913 = vcombine.low %v3826, %v3789
      %v3915 = vunpack.c.l.s4 1983009808
      %v3916 = vunpack.c.0.s8 %v3915
      %v3917 = vlaneseq
      %v3918 = vshrl.u32 %v3917, 7
      %v3919 = vsub.s32 %v3916, %v3918
      %v3920 = vrot.slane %v3913, %v3919
      %v3921 = vcombine.low %v3827, %v3790
      %v3923 = vunpack.c.l.s4 1983009808
      %v3924 = vunpack.c.0.s8 %v3923
      %v3925 = vlaneseq
      %v3926 = vshrl.u32 %v3925, 7
      %v3927 = vsub.s32 %v3924, %v3926
      %v3928 = vrot.slane %v3921, %v3927
      %v3929 = vcombine.low %v3828, %v3791
      %v3931 = vunpack.c.l.s4 1983009808
      %v3932 = vunpack.c.0.s8 %v3931
      %v3933 = vlaneseq
      %v3934 = vshrl.u32 %v3933, 7
      %v3935 = vsub.s32 %v3932, %v3934
      %v3936 = vrot.slane %v3929, %v3935
      %v3937 = vld [vmem:[%s21] sm:$0xff]
      %v3938 = vld [vmem:[%s21 + $0x8] sm:$0xff]
      %v3939 = vld [vmem:[%s21 + $0x10] sm:$0xff]
      %v3940 = vld [vmem:[%s21 + $0x18] sm:$0xff]
      %v3941 = vld [vmem:[%s21 + $0x20] sm:$0xff]
      %v3942 = vld [vmem:[%s21 + $0x28] sm:$0xff]
      %v3943 = vld [vmem:[%s21 + $0x30] sm:$0xff]
      %v3944 = vld [vmem:[%s21 + $0x38] sm:$0xff]
      %v3945 = vld [vmem:[%s21 + $0x40] sm:$0xff]
      %v3946 = vld [vmem:[%s21 + $0x48] sm:$0xff]
      %v3947 = vld [vmem:[%s21 + $0x50] sm:$0xff]
      %v3948 = vld [vmem:[%s21 + $0x58] sm:$0xff]
      %v3949 = vld [vmem:[%s21 + $0x60] sm:$0xff]
      %v3950 = vld [vmem:[%s21 + $0x68] sm:$0xff]
      %v3951 = vld [vmem:[%s21 + $0x70] sm:$0xff]
      %v3952 = vld [vmem:[%s21 + $0x78] sm:$0xff]
      %v3953 = vld [vmem:[%s21 + $0x80] sm:$0xff]
      %v3954 = vld [vmem:[%s21 + $0x88] sm:$0xff]
      %v3955 = vld [vmem:[%s21 + $0x90] sm:$0xff]
      %v3956 = vld [vmem:[%s21 + $0x98] sm:$0xff]
      %v3957 = vld [vmem:[%s23] sm:$0x1]
      %v3959 = vlaneseq
      %v3960 = vshrl.u32 %v3959, 7
      %v3961 = vsub.s32 0, %v3960
      %v3962 = vrot.slane %v3957, %v3961
      %v3964 = vcombine.low %v3848, %v3856
      %v3965 = vcombine.low %v3864, %v3872
      %v3967 = vunpack.c.l.s4 1983009808
      %v3968 = vunpack.c.0.s8 %v3967
      %v3969 = vlaneseq
      %v3970 = vshrl.u32 %v3969, 7
      %v3971 = vsub.s32 %v3968, %v3970
      %v3972 = vrot.slane %v3964, %v3971
      %v3974 = vunpack.c.l.s4 1983009808
      %v3975 = vunpack.c.0.s8 %v3974
      %v3976 = vlaneseq
      %v3977 = vshrl.u32 %v3976, 7
      %v3978 = vsub.s32 %v3975, %v3977
      %v3979 = vrot.slane %v3965, %v3978
      %v3980 = vcombine.low %v3972, %v3979
      %v3981 = vcombine.high %v3972, %v3979
      %v3982 = vcombine.low %v3880, %v3888
      %v3983 = vcombine.low %v3896, %v3904
      %v3985 = vunpack.c.l.s4 1983009808
      %v3986 = vunpack.c.0.s8 %v3985
      %v3987 = vlaneseq
      %v3988 = vshrl.u32 %v3987, 7
      %v3989 = vsub.s32 %v3986, %v3988
      %v3990 = vrot.slane %v3982, %v3989
      %v3992 = vunpack.c.l.s4 1983009808
      %v3993 = vunpack.c.0.s8 %v3992
      %v3994 = vlaneseq
      %v3995 = vshrl.u32 %v3994, 7
      %v3996 = vsub.s32 %v3993, %v3995
      %v3997 = vrot.slane %v3983, %v3996
      %v3998 = vcombine.low %v3990, %v3997
      %v3999 = vcombine.high %v3990, %v3997
      %v4000 = vcombine.low %v3912, %v3920
      %v4001 = vcombine.low %v3928, %v3936
      %v4003 = vunpack.c.l.s4 1983009808
      %v4004 = vunpack.c.0.s8 %v4003
      %v4005 = vlaneseq
      %v4006 = vshrl.u32 %v4005, 7
      %v4007 = vsub.s32 %v4004, %v4006
      %v4008 = vrot.slane %v4000, %v4007
      %v4010 = vunpack.c.l.s4 1983009808
      %v4011 = vunpack.c.0.s8 %v4010
      %v4012 = vlaneseq
      %v4013 = vshrl.u32 %v4012, 7
      %v4014 = vsub.s32 %v4011, %v4013
      %v4015 = vrot.slane %v4001, %v4014
      %v4016 = vcombine.low %v4008, %v4015
      %v4017 = vcombine.high %v4008, %v4015
      %v4021 = vsel %vm2216, %v3981, 0
      %v4023 = vsel %vm2216, %v3999, 0
      %v4025 = vsel %vm2216, %v4017, 0
      %4027 = vmatprep.subr.mxu0 0.0
      %4028 = vmatpush1.msra.mxu0 %v3937
      %4029 = vmatprep.subr.mxu0 0.0
      %4030 = vmatpush1.msra.mxu0 %v3938
      %4031 = vmatprep.subr.mxu0 0.0
      %4032 = vmatpush1.msra.mxu0 %v3939
      %4033 = vmatprep.subr.mxu0 0.0
      %4034 = vmatpush1.msra.mxu0 %v3940
      %4035 = vmatprep.subr.mxu0 0.0
      %4036 = vmatpush1.msra.mxu0 %v3941
      %4037 = vmatprep.subr.mxu0 0.0
      %4038 = vmatpush1.msra.mxu0 %v3942
      %4039 = vmatprep.subr.mxu0 0.0
      %4040 = vmatpush1.msra.mxu0 %v3943
      %4041 = vmatprep.subr.mxu0 0.0
      %4042 = vmatpush1.msra.mxu0 %v3944
      %4043 = vmatprep.subr.mxu0 0.0
      %4044 = vmatpush1.msra.mxu0 %v3945
      %4045 = vmatprep.subr.mxu0 0.0
      %4046 = vmatpush1.msra.mxu0 %v3946
      %4047 = vmatprep.subr.mxu0 0.0
      %4048 = vmatpush1.msra.mxu0 %v3947
      %4049 = vmatprep.subr.mxu0 0.0
      %4050 = vmatpush1.msra.mxu0 %v3948
      %4051 = vmatprep.subr.mxu0 0.0
      %4052 = vmatpush1.msra.mxu0 %v3949
      %4053 = vmatprep.subr.mxu0 0.0
      %4054 = vmatpush1.msra.mxu0 %v3950
      %4055 = vmatprep.subr.mxu0 0.0
      %4056 = vmatpush1.msra.mxu0 %v3951
      %4057 = vmatprep.subr.mxu0 0.0
      %4058 = vmatpush1.msra.mxu0 %v3952
      %4059 = vmatprep.subr.mxu0 0.0
      %4060 = vmatpush1.msra.mxu0 %v3953
      %4061 = vmatprep.subr.mxu0 0.0
      %4062 = vmatpush1.msra.mxu0 %v3954
      %4063 = vmatprep.subr.mxu0 0.0
      %4064 = vmatpush1.msra.mxu0 %v3955
      %4065 = vmatprep.subr.mxu0 0.0
      %4066 = vmatpush1.msra.mxu0 %v3956
      %4067 = vmatprep.subr.mxu0 0.0
      %4068 = vmatpush1.msra.mxu0 0.0
      %4069 = vmatprep.subr.mxu0 0.0
      %4070 = vmatpush1.msra.mxu0 0.0
      %4071 = vmatprep.subr.mxu0 0.0
      %4072 = vmatpush1.msra.mxu0 0.0
      %4073 = vmatprep.subr.mxu0 0.0
      %4074 = vmatpush1.msra.mxu0 0.0
      %4075 = vmatprep.subr.mxu0 0.0
      %4076 = vmatpush1.msra.mxu0 0.0
      %4077 = vmatprep.subr.mxu0 0.0
      %4078 = vmatpush1.msra.mxu0 0.0
      %4079 = vmatprep.subr.mxu0 0.0
      %4080 = vmatpush1.msra.mxu0 0.0
      %4081 = vmatprep.subr.mxu0 0.0
      %4082 = vmatpush1.msra.mxu0 0.0
      %4083 = vmatprep.subr.mxu0 0.0
      %4084 = vmatpush1.msra.mxu0 0.0
      %4085 = vmatprep.subr.mxu0 0.0
      %4086 = vmatpush1.msra.mxu0 0.0
      %4087 = vmatprep.subr.mxu0 0.0
      %4088 = vmatpush1.msra.mxu0 0.0
      %4089 = vmatprep.subr.mxu0 0.0
      %4090 = vmatpush1.msra.mxu0 0.0
      %4091 = vmatprep.mubr.f32.mxu0 %v4021
      %4092 = vmatmul.mubr.f32.gmra.mrb[0].mxu0 %v3980
      %v4093 = vpop.f32.mrb[0].mxu0
      %v4094 = vadd.f32 %v3962, %v4093
      %v4095 = vpop.f32.mrb[0].mxu0
      %4096 = vmatprep.mubr.f32.mxu0 %v4023
      %4097 = vmatmul.mubr.f32.gmra.mrb[0].mxu0 %v3998
      %v4098 = vpop.f32.mrb[0].mxu0
      %v4099 = vadd.f32 %v3962, %v4098
      %v4100 = vpop.f32.mrb[0].mxu0
      %4101 = vmatprep.mubr.f32.mxu0 %v4025
      %4102 = vmatmul.mubr.f32.gmra.mrb[0].mxu0 %v4016
      %v4103 = vpop.f32.mrb[0].mxu0
      %v4104 = vadd.f32 %v3962, %v4103
      %v4105 = vpop.f32.mrb[0].mxu0
      %4106 = vdwg.mxu0
      %v4107 = vmax.f32 %v4094, 0.0
      %v4108 = vmax.f32 %v4099, 0.0
      %v4109 = vmax.f32 %v4104, 0.0
      %v4110 = vld [vmem:[%s25] sm:$0x1]
      %v4112 = vlaneseq
      %v4113 = vshrl.u32 %v4112, 7
      %v4114 = vsub.s32 0, %v4113
      %v4115 = vrot.slane %v4110, %v4114
      %v4117 = vmul.f32 %v4107, %v4115
      %v4118 = vmul.f32 %v4108, %v4115
      %v4119 = vmul.f32 %v4109, %v4115
      %v4120 = vld [vmem:[%s27] sm:$0x1]
      %v4122 = vlaneseq
      %v4123 = vshrl.u32 %v4122, 7
      %v4124 = vsub.s32 0, %v4123
      %v4125 = vrot.slane %v4120, %v4124
      %v4127 = vadd.f32 %v4117, %v4125
      %v4128 = vadd.f32 %v4118, %v4125
      %v4129 = vadd.f32 %v4119, %v4125
      %v4130 = vld [vmem:[%s29] sm:$0xff]
      %v4131 = vld [vmem:[%s29 + $0x8] sm:$0xff]
      %v4132 = vld [vmem:[%s29 + $0x10] sm:$0xff]
      %v4133 = vld [vmem:[%s29 + $0x18] sm:$0xff]
      %v4134 = vld [vmem:[%s31] sm:$0x1]
      %v4136 = vlaneseq
      %v4137 = vshrl.u32 %v4136, 7
      %v4138 = vsub.s32 0, %v4137
      %v4139 = vrot.slane %v4134, %v4138
      %v4142 = vsel %vm2216, %v4127, 0
      %v4145 = vsel %vm2216, %v4128, 0
      %v4148 = vsel %vm2216, %v4129, 0
      %4150 = vmatprep.subr.mxu0 0.0
      %4151 = vmatpush1.msra.mxu0 %v4130
      %4152 = vmatprep.subr.mxu0 0.0
      %4153 = vmatpush1.msra.mxu0 %v4131
      %4154 = vmatprep.subr.mxu0 0.0
      %4155 = vmatpush1.msra.mxu0 %v4132
      %4156 = vmatprep.subr.mxu0 0.0
      %4157 = vmatpush1.msra.mxu0 %v4133
      %4158 = vmatprep.subr.mxu0 0.0
      %4159 = vmatpush1.msra.mxu0 0.0
      %4160 = vmatprep.subr.mxu0 0.0
      %4161 = vmatpush1.msra.mxu0 0.0
      %4162 = vmatprep.subr.mxu0 0.0
      %4163 = vmatpush1.msra.mxu0 0.0
      %4164 = vmatprep.subr.mxu0 0.0
      %4165 = vmatpush1.msra.mxu0 0.0
      %4166 = vmatprep.subr.mxu0 0.0
      %4167 = vmatpush1.msra.mxu0 0.0
      %4168 = vmatprep.subr.mxu0 0.0
      %4169 = vmatpush1.msra.mxu0 0.0
      %4170 = vmatprep.subr.mxu0 0.0
      %4171 = vmatpush1.msra.mxu0 0.0
      %4172 = vmatprep.subr.mxu0 0.0
      %4173 = vmatpush1.msra.mxu0 0.0
      %4174 = vmatprep.subr.mxu0 0.0
      %4175 = vmatpush1.msra.mxu0 0.0
      %4176 = vmatprep.subr.mxu0 0.0
      %4177 = vmatpush1.msra.mxu0 0.0
      %4178 = vmatprep.subr.mxu0 0.0
      %4179 = vmatpush1.msra.mxu0 0.0
      %4180 = vmatprep.subr.mxu0 0.0
      %4181 = vmatpush1.msra.mxu0 0.0
      %4182 = vmatprep.subr.mxu0 0.0
      %4183 = vmatpush1.msra.mxu0 0.0
      %4184 = vmatprep.subr.mxu0 0.0
      %4185 = vmatpush1.msra.mxu0 0.0
      %4186 = vmatprep.subr.mxu0 0.0
      %4187 = vmatpush1.msra.mxu0 0.0
      %4188 = vmatprep.subr.mxu0 0.0
      %4189 = vmatpush1.msra.mxu0 0.0
      %4190 = vmatprep.subr.mxu0 0.0
      %4191 = vmatpush1.msra.mxu0 0.0
      %4192 = vmatprep.subr.mxu0 0.0
      %4193 = vmatpush1.msra.mxu0 0.0
      %4194 = vmatprep.subr.mxu0 0.0
      %4195 = vmatpush1.msra.mxu0 0.0
      %4196 = vmatprep.subr.mxu0 0.0
      %4197 = vmatpush1.msra.mxu0 0.0
      %4198 = vmatprep.subr.mxu0 0.0
      %4199 = vmatpush1.msra.mxu0 0.0
      %4200 = vmatprep.subr.mxu0 0.0
      %4201 = vmatpush1.msra.mxu0 0.0
      %4202 = vmatprep.subr.mxu0 0.0
      %4203 = vmatpush1.msra.mxu0 0.0
      %4204 = vmatprep.subr.mxu0 0.0
      %4205 = vmatpush1.msra.mxu0 0.0
      %4206 = vmatprep.subr.mxu0 0.0
      %4207 = vmatpush1.msra.mxu0 0.0
      %4208 = vmatprep.subr.mxu0 0.0
      %4209 = vmatpush1.msra.mxu0 0.0
      %4210 = vmatprep.subr.mxu0 0.0
      %4211 = vmatpush1.msra.mxu0 0.0
      %4212 = vmatprep.subr.mxu0 0.0
      %4213 = vmatpush1.msra.mxu0 0.0
      %4214 = vmatprep.mubr.f32.mxu0 0.0
      %4215 = vmatmul.mubr.f32.gmra.mrb[0].mxu0 %v4142
      %v4216 = vpop.f32.mrb[0].mxu0
      %v4217 = vadd.f32 %v4139, %v4216
      %v4218 = vpop.f32.mrb[0].mxu0
      %4219 = vmatprep.mubr.f32.mxu0 0.0
      %4220 = vmatmul.mubr.f32.gmra.mrb[0].mxu0 %v4145
      %v4221 = vpop.f32.mrb[0].mxu0
      %v4222 = vadd.f32 %v4139, %v4221
      %v4223 = vpop.f32.mrb[0].mxu0
      %4224 = vmatprep.mubr.f32.mxu0 0.0
      %4225 = vmatmul.mubr.f32.gmra.mrb[0].mxu0 %v4148
      %v4226 = vpop.f32.mrb[0].mxu0
      %v4227 = vadd.f32 %v4139, %v4226
      %v4228 = vpop.f32.mrb[0].mxu0
      %4229 = vdwg.mxu0
      %v4233 = vcombine.high %v4217, %v4217
      %v4235 = vunpack.c.l.s4 1983009808
      %v4236 = vunpack.c.0.s8 %v4235
      %v4237 = vlaneseq
      %v4238 = vshrl.u32 %v4237, 7
      %v4239 = vsub.s32 %v4236, %v4238
      %v4240 = vrot.slane %v4217, %v4239
      %v4242 = vunpack.c.l.s4 1983009808
      %v4243 = vunpack.c.0.s8 %v4242
      %v4244 = vlaneseq
      %v4245 = vshrl.u32 %v4244, 7
      %v4246 = vsub.s32 %v4243, %v4245
      %v4247 = vrot.slane %v4233, %v4246
      %v4248 = vcombine.high %v4240, %v4240
      %v4249 = vcombine.high %v4247, %v4247
      %v4250 = vcombine.high %v4222, %v4222
      %v4252 = vunpack.c.l.s4 1983009808
      %v4253 = vunpack.c.0.s8 %v4252
      %v4254 = vlaneseq
      %v4255 = vshrl.u32 %v4254, 7
      %v4256 = vsub.s32 %v4253, %v4255
      %v4257 = vrot.slane %v4222, %v4256
      %v4259 = vunpack.c.l.s4 1983009808
      %v4260 = vunpack.c.0.s8 %v4259
      %v4261 = vlaneseq
      %v4262 = vshrl.u32 %v4261, 7
      %v4263 = vsub.s32 %v4260, %v4262
      %v4264 = vrot.slane %v4250, %v4263
      %v4265 = vcombine.high %v4257, %v4257
      %v4266 = vcombine.high %v4264, %v4264
      %v4267 = vcombine.high %v4227, %v4227
      %v4269 = vunpack.c.l.s4 1983009808
      %v4270 = vunpack.c.0.s8 %v4269
      %v4271 = vlaneseq
      %v4272 = vshrl.u32 %v4271, 7
      %v4273 = vsub.s32 %v4270, %v4272
      %v4274 = vrot.slane %v4227, %v4273
      %v4276 = vunpack.c.l.s4 1983009808
      %v4277 = vunpack.c.0.s8 %v4276
      %v4278 = vlaneseq
      %v4279 = vshrl.u32 %v4278, 7
      %v4280 = vsub.s32 %v4277, %v4279
      %v4281 = vrot.slane %v4267, %v4280
      %v4282 = vcombine.high %v4274, %v4274
      %v4283 = vcombine.high %v4281, %v4281
      %v4296 = vld [vmem:[%s33] sm:$0xff]
      %v4297 = vld [vmem:[%s33 + $0x8] sm:$0xff]
      %v4298 = vld [vmem:[%s33 + $0x10] sm:$0xff]
      %v4299 = vld [vmem:[%s33 + $0x18] sm:$0xff]
      %v4300 = vld [vmem:[#allocation2] sm:$0x1]
      %v4302 = vlaneseq
      %v4303 = vshrl.u32 %v4302, 7
      %v4304 = vsub.s32 0, %v4303
      %v4305 = vrot.slane %v4300, %v4304
      %4307 = vmatprep.subr.mxu0 0.0
      %4308 = vmatpush1.msra.mxu0 %v4296
      %4309 = vmatprep.subr.mxu0 0.0
      %4310 = vmatpush1.msra.mxu0 %v4297
      %4311 = vmatprep.subr.mxu0 0.0
      %4312 = vmatpush1.msra.mxu0 %v4298
      %4313 = vmatprep.subr.mxu0 0.0
      %4314 = vmatpush1.msra.mxu0 %v4299
      %4315 = vmatprep.subr.mxu0 0.0
      %4316 = vmatpush1.msra.mxu0 0.0
      %4317 = vmatprep.subr.mxu0 0.0
      %4318 = vmatpush1.msra.mxu0 0.0
      %4319 = vmatprep.subr.mxu0 0.0
      %4320 = vmatpush1.msra.mxu0 0.0
      %4321 = vmatprep.subr.mxu0 0.0
      %4322 = vmatpush1.msra.mxu0 0.0
      %4323 = vmatprep.subr.mxu0 0.0
      %4324 = vmatpush1.msra.mxu0 0.0
      %4325 = vmatprep.subr.mxu0 0.0
      %4326 = vmatpush1.msra.mxu0 0.0
      %4327 = vmatprep.subr.mxu0 0.0
      %4328 = vmatpush1.msra.mxu0 0.0
      %4329 = vmatprep.subr.mxu0 0.0
      %4330 = vmatpush1.msra.mxu0 0.0
      %4331 = vmatprep.subr.mxu0 0.0
      %4332 = vmatpush1.msra.mxu0 0.0
      %4333 = vmatprep.subr.mxu0 0.0
      %4334 = vmatpush1.msra.mxu0 0.0
      %4335 = vmatprep.subr.mxu0 0.0
      %4336 = vmatpush1.msra.mxu0 0.0
      %4337 = vmatprep.subr.mxu0 0.0
      %4338 = vmatpush1.msra.mxu0 0.0
      %4339 = vmatprep.subr.mxu0 0.0
      %4340 = vmatpush1.msra.mxu0 0.0
      %4341 = vmatprep.subr.mxu0 0.0
      %4342 = vmatpush1.msra.mxu0 0.0
      %4343 = vmatprep.subr.mxu0 0.0
      %4344 = vmatpush1.msra.mxu0 0.0
      %4345 = vmatprep.subr.mxu0 0.0
      %4346 = vmatpush1.msra.mxu0 0.0
      %4347 = vmatprep.subr.mxu0 0.0
      %4348 = vmatpush1.msra.mxu0 0.0
      %4349 = vmatprep.subr.mxu0 0.0
      %4350 = vmatpush1.msra.mxu0 0.0
      %4351 = vmatprep.subr.mxu0 0.0
      %4352 = vmatpush1.msra.mxu0 0.0
      %4353 = vmatprep.subr.mxu0 0.0
      %4354 = vmatpush1.msra.mxu0 0.0
      %4355 = vmatprep.subr.mxu0 0.0
      %4356 = vmatpush1.msra.mxu0 0.0
      %4357 = vmatprep.subr.mxu0 0.0
      %4358 = vmatpush1.msra.mxu0 0.0
      %4359 = vmatprep.subr.mxu0 0.0
      %4360 = vmatpush1.msra.mxu0 0.0
      %4361 = vmatprep.subr.mxu0 0.0
      %4362 = vmatpush1.msra.mxu0 0.0
      %4363 = vmatprep.subr.mxu0 0.0
      %4364 = vmatpush1.msra.mxu0 0.0
      %4365 = vmatprep.subr.mxu0 0.0
      %4366 = vmatpush1.msra.mxu0 0.0
      %4367 = vmatprep.subr.mxu0 0.0
      %4368 = vmatpush1.msra.mxu0 0.0
      %4369 = vmatprep.subr.mxu0 0.0
      %4370 = vmatpush1.msra.mxu0 0.0
      %4371 = vmatprep.mubr.f32.mxu0 0.0
      %4372 = vmatmul.mubr.f32.gmra.mrb[0].mxu0 %v4142
      %v4373 = vpop.f32.mrb[0].mxu0
      %v4374 = vadd.f32 %v4305, %v4373
      %v4375 = vpop.f32.mrb[0].mxu0
      %4376 = vmatprep.mubr.f32.mxu0 0.0
      %4377 = vmatmul.mubr.f32.gmra.mrb[0].mxu0 %v4145
      %v4378 = vpop.f32.mrb[0].mxu0
      %v4379 = vadd.f32 %v4305, %v4378
      %v4380 = vpop.f32.mrb[0].mxu0
      %4381 = vmatprep.mubr.f32.mxu0 0.0
      %4382 = vmatmul.mubr.f32.gmra.mrb[0].mxu0 %v4148
      %v4383 = vpop.f32.mrb[0].mxu0
      %v4384 = vadd.f32 %v4305, %v4383
      %v4385 = vpop.f32.mrb[0].mxu0
      %4386 = vdwg.mxu0
      %v4390 = vcombine.high %v4374, %v4374
      %v4392 = vunpack.c.l.s4 1983009808
      %v4393 = vunpack.c.0.s8 %v4392
      %v4394 = vlaneseq
      %v4395 = vshrl.u32 %v4394, 7
      %v4396 = vsub.s32 %v4393, %v4395
      %v4397 = vrot.slane %v4374, %v4396
      %v4399 = vunpack.c.l.s4 1983009808
      %v4400 = vunpack.c.0.s8 %v4399
      %v4401 = vlaneseq
      %v4402 = vshrl.u32 %v4401, 7
      %v4403 = vsub.s32 %v4400, %v4402
      %v4404 = vrot.slane %v4390, %v4403
      %v4405 = vcombine.high %v4397, %v4397
      %v4406 = vcombine.high %v4404, %v4404
      %v4407 = vcombine.high %v4379, %v4379
      %v4409 = vunpack.c.l.s4 1983009808
      %v4410 = vunpack.c.0.s8 %v4409
      %v4411 = vlaneseq
      %v4412 = vshrl.u32 %v4411, 7
      %v4413 = vsub.s32 %v4410, %v4412
      %v4414 = vrot.slane %v4379, %v4413
      %v4416 = vunpack.c.l.s4 1983009808
      %v4417 = vunpack.c.0.s8 %v4416
      %v4418 = vlaneseq
      %v4419 = vshrl.u32 %v4418, 7
      %v4420 = vsub.s32 %v4417, %v4419
      %v4421 = vrot.slane %v4407, %v4420
      %v4422 = vcombine.high %v4414, %v4414
      %v4423 = vcombine.high %v4421, %v4421
      %v4424 = vcombine.high %v4384, %v4384
      %v4426 = vunpack.c.l.s4 1983009808
      %v4427 = vunpack.c.0.s8 %v4426
      %v4428 = vlaneseq
      %v4429 = vshrl.u32 %v4428, 7
      %v4430 = vsub.s32 %v4427, %v4429
      %v4431 = vrot.slane %v4384, %v4430
      %v4433 = vunpack.c.l.s4 1983009808
      %v4434 = vunpack.c.0.s8 %v4433
      %v4435 = vlaneseq
      %v4436 = vshrl.u32 %v4435, 7
      %v4437 = vsub.s32 %v4434, %v4436
      %v4438 = vrot.slane %v4424, %v4437
      %v4439 = vcombine.high %v4431, %v4431
      %v4440 = vcombine.high %v4438, %v4438
      %v4453 = vrot.slane %v4397, 7
      %v4454 = vrot.slane %v4453, 2
      %v4455 = vrot.slane %v4405, 7
      %v4456 = vrot.slane %v4455, 2
      %v4457 = vrot.slane %v4404, 7
      %v4458 = vrot.slane %v4457, 2
      %v4459 = vrot.slane %v4406, 7
      %v4460 = vrot.slane %v4459, 2
      %v4461 = vrot.slane %v4414, 7
      %v4462 = vrot.slane %v4461, 2
      %v4463 = vrot.slane %v4422, 7
      %v4464 = vrot.slane %v4463, 2
      %v4465 = vrot.slane %v4421, 7
      %v4466 = vrot.slane %v4465, 2
      %v4467 = vrot.slane %v4423, 7
      %v4468 = vrot.slane %v4467, 2
      %v4469 = vrot.slane %v4431, 7
      %v4470 = vrot.slane %v4469, 2
      %v4471 = vrot.slane %v4439, 7
      %v4472 = vrot.slane %v4471, 2
      %v4473 = vrot.slane %v4438, 7
      %v4474 = vrot.slane %v4473, 2
      %v4475 = vrot.slane %v4440, 7
      %v4476 = vrot.slane %v4475, 2
      %v4489 = vmax.f32 %v4397, %v4454
      %v4490 = vmax.f32 %v4405, %v4456
      %v4491 = vmax.f32 %v4404, %v4458
      %v4492 = vmax.f32 %v4406, %v4460
      %v4493 = vmax.f32 %v4414, %v4462
      %v4494 = vmax.f32 %v4422, %v4464
      %v4495 = vmax.f32 %v4421, %v4466
      %v4496 = vmax.f32 %v4423, %v4468
      %v4497 = vmax.f32 %v4431, %v4470
      %v4498 = vmax.f32 %v4439, %v4472
      %v4499 = vmax.f32 %v4438, %v4474
      %v4500 = vmax.f32 %v4440, %v4476
      %v4501 = vsub.f32 %v4397, %v4489
      %v4502 = vsub.f32 %v4405, %v4490
      %v4503 = vsub.f32 %v4404, %v4491
      %v4504 = vsub.f32 %v4406, %v4492
      %v4505 = vsub.f32 %v4414, %v4493
      %v4506 = vsub.f32 %v4422, %v4494
      %v4507 = vsub.f32 %v4421, %v4495
      %v4508 = vsub.f32 %v4423, %v4496
      %v4509 = vsub.f32 %v4431, %v4497
      %v4510 = vsub.f32 %v4439, %v4498
      %v4511 = vsub.f32 %v4438, %v4499
      %v4512 = vsub.f32 %v4440, %v4500
      %v4513 = vmul.f32 %v4501, 1.442695
      %v4514 = vpow.pop %v4513
      %v4515 = vmul.f32 %v4502, 1.442695
      %v4516 = vpow.pop %v4515
      %v4517 = vmul.f32 %v4503, 1.442695
      %v4518 = vpow.pop %v4517
      %v4519 = vmul.f32 %v4504, 1.442695
      %v4520 = vpow.pop %v4519
      %v4521 = vmul.f32 %v4505, 1.442695
      %v4522 = vpow.pop %v4521
      %v4523 = vmul.f32 %v4506, 1.442695
      %v4524 = vpow.pop %v4523
      %v4525 = vmul.f32 %v4507, 1.442695
      %v4526 = vpow.pop %v4525
      %v4527 = vmul.f32 %v4508, 1.442695
      %v4528 = vpow.pop %v4527
      %v4529 = vmul.f32 %v4509, 1.442695
      %v4530 = vpow.pop %v4529
      %v4531 = vmul.f32 %v4510, 1.442695
      %v4532 = vpow.pop %v4531
      %v4533 = vmul.f32 %v4511, 1.442695
      %v4534 = vpow.pop %v4533
      %v4535 = vmul.f32 %v4512, 1.442695
      %v4536 = vpow.pop %v4535
      %v4549 = vrot.slane %v4489, 7
      %v4550 = vrot.slane %v4490, 7
      %v4551 = vrot.slane %v4491, 7
      %v4552 = vrot.slane %v4492, 7
      %v4553 = vrot.slane %v4493, 7
      %v4554 = vrot.slane %v4494, 7
      %v4555 = vrot.slane %v4495, 7
      %v4556 = vrot.slane %v4496, 7
      %v4557 = vrot.slane %v4497, 7
      %v4558 = vrot.slane %v4498, 7
      %v4559 = vrot.slane %v4499, 7
      %v4560 = vrot.slane %v4500, 7
      %v4573 = vsub.f32 %v4397, %v4549
      %v4574 = vsub.f32 %v4405, %v4550
      %v4575 = vsub.f32 %v4404, %v4551
      %v4576 = vsub.f32 %v4406, %v4552
      %v4577 = vsub.f32 %v4414, %v4553
      %v4578 = vsub.f32 %v4422, %v4554
      %v4579 = vsub.f32 %v4421, %v4555
      %v4580 = vsub.f32 %v4423, %v4556
      %v4581 = vsub.f32 %v4431, %v4557
      %v4582 = vsub.f32 %v4439, %v4558
      %v4583 = vsub.f32 %v4438, %v4559
      %v4584 = vsub.f32 %v4440, %v4560
      %v4585 = vmul.f32 %v4573, 1.442695
      %v4586 = vpow.pop %v4585
      %v4587 = vmul.f32 %v4574, 1.442695
      %v4588 = vpow.pop %v4587
      %v4589 = vmul.f32 %v4575, 1.442695
      %v4590 = vpow.pop %v4589
      %v4591 = vmul.f32 %v4576, 1.442695
      %v4592 = vpow.pop %v4591
      %v4593 = vmul.f32 %v4577, 1.442695
      %v4594 = vpow.pop %v4593
      %v4595 = vmul.f32 %v4578, 1.442695
      %v4596 = vpow.pop %v4595
      %v4597 = vmul.f32 %v4579, 1.442695
      %v4598 = vpow.pop %v4597
      %v4599 = vmul.f32 %v4580, 1.442695
      %v4600 = vpow.pop %v4599
      %v4601 = vmul.f32 %v4581, 1.442695
      %v4602 = vpow.pop %v4601
      %v4603 = vmul.f32 %v4582, 1.442695
      %v4604 = vpow.pop %v4603
      %v4605 = vmul.f32 %v4583, 1.442695
      %v4606 = vpow.pop %v4605
      %v4607 = vmul.f32 %v4584, 1.442695
      %v4608 = vpow.pop %v4607
      %v4621 = vrot.slane %v4586, 7
      %v4622 = vrot.slane %v4621, 2
      %v4623 = vrot.slane %v4588, 7
      %v4624 = vrot.slane %v4623, 2
      %v4625 = vrot.slane %v4590, 7
      %v4626 = vrot.slane %v4625, 2
      %v4627 = vrot.slane %v4592, 7
      %v4628 = vrot.slane %v4627, 2
      %v4629 = vrot.slane %v4594, 7
      %v4630 = vrot.slane %v4629, 2
      %v4631 = vrot.slane %v4596, 7
      %v4632 = vrot.slane %v4631, 2
      %v4633 = vrot.slane %v4598, 7
      %v4634 = vrot.slane %v4633, 2
      %v4635 = vrot.slane %v4600, 7
      %v4636 = vrot.slane %v4635, 2
      %v4637 = vrot.slane %v4602, 7
      %v4638 = vrot.slane %v4637, 2
      %v4639 = vrot.slane %v4604, 7
      %v4640 = vrot.slane %v4639, 2
      %v4641 = vrot.slane %v4606, 7
      %v4642 = vrot.slane %v4641, 2
      %v4643 = vrot.slane %v4608, 7
      %v4644 = vrot.slane %v4643, 2
      %v4657 = vadd.f32 %v4514, %v4622
      %v4658 = vadd.f32 %v4516, %v4624
      %v4659 = vadd.f32 %v4518, %v4626
      %v4660 = vadd.f32 %v4520, %v4628
      %v4661 = vadd.f32 %v4522, %v4630
      %v4662 = vadd.f32 %v4524, %v4632
      %v4663 = vadd.f32 %v4526, %v4634
      %v4664 = vadd.f32 %v4528, %v4636
      %v4665 = vadd.f32 %v4530, %v4638
      %v4666 = vadd.f32 %v4532, %v4640
      %v4667 = vadd.f32 %v4534, %v4642
      %v4668 = vadd.f32 %v4536, %v4644
      %v4669 = vrcp.pop %v4657
      %v4670 = vrcp.pop %v4658
      %v4671 = vrcp.pop %v4659
      %v4672 = vrcp.pop %v4660
      %v4673 = vrcp.pop %v4661
      %v4674 = vrcp.pop %v4662
      %v4675 = vrcp.pop %v4663
      %v4676 = vrcp.pop %v4664
      %v4677 = vrcp.pop %v4665
      %v4678 = vrcp.pop %v4666
      %v4679 = vrcp.pop %v4667
      %v4680 = vrcp.pop %v4668
      %v4681 = vmul.f32 %v4514, %v4669
      %v4682 = vmul.f32 %v4516, %v4670
      %v4683 = vmul.f32 %v4518, %v4671
      %v4684 = vmul.f32 %v4520, %v4672
      %v4685 = vmul.f32 %v4522, %v4673
      %v4686 = vmul.f32 %v4524, %v4674
      %v4687 = vmul.f32 %v4526, %v4675
      %v4688 = vmul.f32 %v4528, %v4676
      %v4689 = vmul.f32 %v4530, %v4677
      %v4690 = vmul.f32 %v4532, %v4678
      %v4691 = vmul.f32 %v4534, %v4679
      %v4692 = vmul.f32 %v4536, %v4680
      %4694 = vset.pattern.permute.xlu0 0
      %4695 = vperm.xlu0 %4694, %v4681
      %v4696 = vpop.permute.xlu0 %4695
      %v4699 = vunpack.c.l.s4 269488144
      %v4700 = vunpack.c.0.s8 %v4699
      %v4701 = vlaneseq
      %v4702 = vshrl.u32 %v4701, 7
      %v4703 = vsub.s32 %v4700, %v4702
      %v4704 = vrot.slane %v4696, %v4703
      %4706 = vset.pattern.permute.xlu0 0
      %4707 = vperm.xlu0 %4706, %v4682
      %v4708 = vpop.permute.xlu0 %4707
      %v4711 = vunpack.c.l.s4 269488144
      %v4712 = vunpack.c.0.s8 %v4711
      %v4713 = vlaneseq
      %v4714 = vshrl.u32 %v4713, 7
      %v4715 = vsub.s32 %v4712, %v4714
      %v4716 = vrot.slane %v4708, %v4715
      %4718 = vset.pattern.permute.xlu0 0
      %4719 = vperm.xlu0 %4718, %v4683
      %v4720 = vpop.permute.xlu0 %4719
      %v4723 = vunpack.c.l.s4 269488144
      %v4724 = vunpack.c.0.s8 %v4723
      %v4725 = vlaneseq
      %v4726 = vshrl.u32 %v4725, 7
      %v4727 = vsub.s32 %v4724, %v4726
      %v4728 = vrot.slane %v4720, %v4727
      %4730 = vset.pattern.permute.xlu0 0
      %4731 = vperm.xlu0 %4730, %v4684
      %v4732 = vpop.permute.xlu0 %4731
      %v4735 = vunpack.c.l.s4 269488144
      %v4736 = vunpack.c.0.s8 %v4735
      %v4737 = vlaneseq
      %v4738 = vshrl.u32 %v4737, 7
      %v4739 = vsub.s32 %v4736, %v4738
      %v4740 = vrot.slane %v4732, %v4739
      %4742 = vset.pattern.permute.xlu0 0
      %4743 = vperm.xlu0 %4742, %v4685
      %v4744 = vpop.permute.xlu0 %4743
      %v4747 = vunpack.c.l.s4 269488144
      %v4748 = vunpack.c.0.s8 %v4747
      %v4749 = vlaneseq
      %v4750 = vshrl.u32 %v4749, 7
      %v4751 = vsub.s32 %v4748, %v4750
      %v4752 = vrot.slane %v4744, %v4751
      %4754 = vset.pattern.permute.xlu0 0
      %4755 = vperm.xlu0 %4754, %v4686
      %v4756 = vpop.permute.xlu0 %4755
      %v4759 = vunpack.c.l.s4 269488144
      %v4760 = vunpack.c.0.s8 %v4759
      %v4761 = vlaneseq
      %v4762 = vshrl.u32 %v4761, 7
      %v4763 = vsub.s32 %v4760, %v4762
      %v4764 = vrot.slane %v4756, %v4763
      %4766 = vset.pattern.permute.xlu0 0
      %4767 = vperm.xlu0 %4766, %v4687
      %v4768 = vpop.permute.xlu0 %4767
      %v4771 = vunpack.c.l.s4 269488144
      %v4772 = vunpack.c.0.s8 %v4771
      %v4773 = vlaneseq
      %v4774 = vshrl.u32 %v4773, 7
      %v4775 = vsub.s32 %v4772, %v4774
      %v4776 = vrot.slane %v4768, %v4775
      %4778 = vset.pattern.permute.xlu0 0
      %4779 = vperm.xlu0 %4778, %v4688
      %v4780 = vpop.permute.xlu0 %4779
      %v4783 = vunpack.c.l.s4 269488144
      %v4784 = vunpack.c.0.s8 %v4783
      %v4785 = vlaneseq
      %v4786 = vshrl.u32 %v4785, 7
      %v4787 = vsub.s32 %v4784, %v4786
      %v4788 = vrot.slane %v4780, %v4787
      %4790 = vset.pattern.permute.xlu0 0
      %4791 = vperm.xlu0 %4790, %v4689
      %v4792 = vpop.permute.xlu0 %4791
      %v4795 = vunpack.c.l.s4 269488144
      %v4796 = vunpack.c.0.s8 %v4795
      %v4797 = vlaneseq
      %v4798 = vshrl.u32 %v4797, 7
      %v4799 = vsub.s32 %v4796, %v4798
      %v4800 = vrot.slane %v4792, %v4799
      %4802 = vset.pattern.permute.xlu0 0
      %4803 = vperm.xlu0 %4802, %v4690
      %v4804 = vpop.permute.xlu0 %4803
      %v4807 = vunpack.c.l.s4 269488144
      %v4808 = vunpack.c.0.s8 %v4807
      %v4809 = vlaneseq
      %v4810 = vshrl.u32 %v4809, 7
      %v4811 = vsub.s32 %v4808, %v4810
      %v4812 = vrot.slane %v4804, %v4811
      %4814 = vset.pattern.permute.xlu0 0
      %4815 = vperm.xlu0 %4814, %v4691
      %v4816 = vpop.permute.xlu0 %4815
      %v4819 = vunpack.c.l.s4 269488144
      %v4820 = vunpack.c.0.s8 %v4819
      %v4821 = vlaneseq
      %v4822 = vshrl.u32 %v4821, 7
      %v4823 = vsub.s32 %v4820, %v4822
      %v4824 = vrot.slane %v4816, %v4823
      %4826 = vset.pattern.permute.xlu0 0
      %4827 = vperm.xlu0 %4826, %v4692
      %v4828 = vpop.permute.xlu0 %4827
      %v4831 = vunpack.c.l.s4 269488144
      %v4832 = vunpack.c.0.s8 %v4831
      %v4833 = vlaneseq
      %v4834 = vshrl.u32 %v4833, 7
      %v4835 = vsub.s32 %v4832, %v4834
      %v4836 = vrot.slane %v4828, %v4835
      %v4837 = vmul.f32 %v4240, %v4704
      %v4838 = vmul.f32 %v4248, %v4716
      %v4839 = vmul.f32 %v4247, %v4728
      %v4840 = vmul.f32 %v4249, %v4740
      %v4841 = vmul.f32 %v4257, %v4752
      %v4842 = vmul.f32 %v4265, %v4764
      %v4843 = vmul.f32 %v4264, %v4776
      %v4844 = vmul.f32 %v4266, %v4788
      %v4845 = vmul.f32 %v4274, %v4800
      %v4846 = vmul.f32 %v4282, %v4812
      %v4847 = vmul.f32 %v4281, %v4824
      %v4848 = vmul.f32 %v4283, %v4836
      %v4861 = vrot.slane %v4669, 7
      %v4862 = vrot.slane %v4670, 7
      %v4863 = vrot.slane %v4671, 7
      %v4864 = vrot.slane %v4672, 7
      %v4865 = vrot.slane %v4673, 7
      %v4866 = vrot.slane %v4674, 7
      %v4867 = vrot.slane %v4675, 7
      %v4868 = vrot.slane %v4676, 7
      %v4869 = vrot.slane %v4677, 7
      %v4870 = vrot.slane %v4678, 7
      %v4871 = vrot.slane %v4679, 7
      %v4872 = vrot.slane %v4680, 7
      %v4885 = vmul.f32 %v4586, %v4861
      %v4886 = vmul.f32 %v4588, %v4862
      %v4887 = vmul.f32 %v4590, %v4863
      %v4888 = vmul.f32 %v4592, %v4864
      %v4889 = vmul.f32 %v4594, %v4865
      %v4890 = vmul.f32 %v4596, %v4866
      %v4891 = vmul.f32 %v4598, %v4867
      %v4892 = vmul.f32 %v4600, %v4868
      %v4893 = vmul.f32 %v4602, %v4869
      %v4894 = vmul.f32 %v4604, %v4870
      %v4895 = vmul.f32 %v4606, %v4871
      %v4896 = vmul.f32 %v4608, %v4872
      %4898 = vset.pattern.permute.xlu0 0
      %4899 = vperm.xlu0 %4898, %v4885
      %v4900 = vpop.permute.xlu0 %4899
      %v4903 = vunpack.c.l.s4 269488144
      %v4904 = vunpack.c.0.s8 %v4903
      %v4905 = vlaneseq
      %v4906 = vshrl.u32 %v4905, 7
      %v4907 = vsub.s32 %v4904, %v4906
      %v4908 = vrot.slane %v4900, %v4907
      %4910 = vset.pattern.permute.xlu0 0
      %4911 = vperm.xlu0 %4910, %v4886
      %v4912 = vpop.permute.xlu0 %4911
      %v4915 = vunpack.c.l.s4 269488144
      %v4916 = vunpack.c.0.s8 %v4915
      %v4917 = vlaneseq
      %v4918 = vshrl.u32 %v4917, 7
      %v4919 = vsub.s32 %v4916, %v4918
      %v4920 = vrot.slane %v4912, %v4919
      %4922 = vset.pattern.permute.xlu0 0
      %4923 = vperm.xlu0 %4922, %v4887
      %v4924 = vpop.permute.xlu0 %4923
      %v4927 = vunpack.c.l.s4 269488144
      %v4928 = vunpack.c.0.s8 %v4927
      %v4929 = vlaneseq
      %v4930 = vshrl.u32 %v4929, 7
      %v4931 = vsub.s32 %v4928, %v4930
      %v4932 = vrot.slane %v4924, %v4931
      %4934 = vset.pattern.permute.xlu0 0
      %4935 = vperm.xlu0 %4934, %v4888
      %v4936 = vpop.permute.xlu0 %4935
      %v4939 = vunpack.c.l.s4 269488144
      %v4940 = vunpack.c.0.s8 %v4939
      %v4941 = vlaneseq
      %v4942 = vshrl.u32 %v4941, 7
      %v4943 = vsub.s32 %v4940, %v4942
      %v4944 = vrot.slane %v4936, %v4943
      %4946 = vset.pattern.permute.xlu0 0
      %4947 = vperm.xlu0 %4946, %v4889
      %v4948 = vpop.permute.xlu0 %4947
      %v4951 = vunpack.c.l.s4 269488144
      %v4952 = vunpack.c.0.s8 %v4951
      %v4953 = vlaneseq
      %v4954 = vshrl.u32 %v4953, 7
      %v4955 = vsub.s32 %v4952, %v4954
      %v4956 = vrot.slane %v4948, %v4955
      %4958 = vset.pattern.permute.xlu0 0
      %4959 = vperm.xlu0 %4958, %v4890
      %v4960 = vpop.permute.xlu0 %4959
      %v4963 = vunpack.c.l.s4 269488144
      %v4964 = vunpack.c.0.s8 %v4963
      %v4965 = vlaneseq
      %v4966 = vshrl.u32 %v4965, 7
      %v4967 = vsub.s32 %v4964, %v4966
      %v4968 = vrot.slane %v4960, %v4967
      %4970 = vset.pattern.permute.xlu0 0
      %4971 = vperm.xlu0 %4970, %v4891
      %v4972 = vpop.permute.xlu0 %4971
      %v4975 = vunpack.c.l.s4 269488144
      %v4976 = vunpack.c.0.s8 %v4975
      %v4977 = vlaneseq
      %v4978 = vshrl.u32 %v4977, 7
      %v4979 = vsub.s32 %v4976, %v4978
      %v4980 = vrot.slane %v4972, %v4979
      %4982 = vset.pattern.permute.xlu0 0
      %4983 = vperm.xlu0 %4982, %v4892
      %v4984 = vpop.permute.xlu0 %4983
      %v4987 = vunpack.c.l.s4 269488144
      %v4988 = vunpack.c.0.s8 %v4987
      %v4989 = vlaneseq
      %v4990 = vshrl.u32 %v4989, 7
      %v4991 = vsub.s32 %v4988, %v4990
      %v4992 = vrot.slane %v4984, %v4991
      %4994 = vset.pattern.permute.xlu0 0
      %4995 = vperm.xlu0 %4994, %v4893
      %v4996 = vpop.permute.xlu0 %4995
      %v4999 = vunpack.c.l.s4 269488144
      %v5000 = vunpack.c.0.s8 %v4999
      %v5001 = vlaneseq
      %v5002 = vshrl.u32 %v5001, 7
      %v5003 = vsub.s32 %v5000, %v5002
      %v5004 = vrot.slane %v4996, %v5003
      %5006 = vset.pattern.permute.xlu0 0
      %5007 = vperm.xlu0 %5006, %v4894
      %v5008 = vpop.permute.xlu0 %5007
      %v5011 = vunpack.c.l.s4 269488144
      %v5012 = vunpack.c.0.s8 %v5011
      %v5013 = vlaneseq
      %v5014 = vshrl.u32 %v5013, 7
      %v5015 = vsub.s32 %v5012, %v5014
      %v5016 = vrot.slane %v5008, %v5015
      %5018 = vset.pattern.permute.xlu0 0
      %5019 = vperm.xlu0 %5018, %v4895
      %v5020 = vpop.permute.xlu0 %5019
      %v5023 = vunpack.c.l.s4 269488144
      %v5024 = vunpack.c.0.s8 %v5023
      %v5025 = vlaneseq
      %v5026 = vshrl.u32 %v5025, 7
      %v5027 = vsub.s32 %v5024, %v5026
      %v5028 = vrot.slane %v5020, %v5027
      %5030 = vset.pattern.permute.xlu0 0
      %5031 = vperm.xlu0 %5030, %v4896
      %v5032 = vpop.permute.xlu0 %5031
      %v5035 = vunpack.c.l.s4 269488144
      %v5036 = vunpack.c.0.s8 %v5035
      %v5037 = vlaneseq
      %v5038 = vshrl.u32 %v5037, 7
      %v5039 = vsub.s32 %v5036, %v5038
      %v5040 = vrot.slane %v5032, %v5039
      %v5041 = vmul.f32 %v4240, %v4908
      %v5042 = vmul.f32 %v4248, %v4920
      %v5043 = vmul.f32 %v4247, %v4932
      %v5044 = vmul.f32 %v4249, %v4944
      %v5045 = vmul.f32 %v4257, %v4956
      %v5046 = vmul.f32 %v4265, %v4968
      %v5047 = vmul.f32 %v4264, %v4980
      %v5048 = vmul.f32 %v4266, %v4992
      %v5049 = vmul.f32 %v4274, %v5004
      %v5050 = vmul.f32 %v4282, %v5016
      %v5051 = vmul.f32 %v4281, %v5028
      %v5052 = vmul.f32 %v4283, %v5040
      %v5065 = vrot.slane %v5041, 7
      %v5066 = vrot.slane %v5065, 2
      %v5067 = vrot.slane %v5042, 7
      %v5068 = vrot.slane %v5067, 2
      %v5069 = vrot.slane %v5043, 7
      %v5070 = vrot.slane %v5069, 2
      %v5071 = vrot.slane %v5044, 7
      %v5072 = vrot.slane %v5071, 2
      %v5073 = vrot.slane %v5045, 7
      %v5074 = vrot.slane %v5073, 2
      %v5075 = vrot.slane %v5046, 7
      %v5076 = vrot.slane %v5075, 2
      %v5077 = vrot.slane %v5047, 7
      %v5078 = vrot.slane %v5077, 2
      %v5079 = vrot.slane %v5048, 7
      %v5080 = vrot.slane %v5079, 2
      %v5081 = vrot.slane %v5049, 7
      %v5082 = vrot.slane %v5081, 2
      %v5083 = vrot.slane %v5050, 7
      %v5084 = vrot.slane %v5083, 2
      %v5085 = vrot.slane %v5051, 7
      %v5086 = vrot.slane %v5085, 2
      %v5087 = vrot.slane %v5052, 7
      %v5088 = vrot.slane %v5087, 2
      %v5101 = vadd.f32 %v4837, %v5066
      %v5102 = vadd.f32 %v4838, %v5068
      %v5103 = vadd.f32 %v4839, %v5070
      %v5104 = vadd.f32 %v4840, %v5072
      %v5105 = vadd.f32 %v4841, %v5074
      %v5106 = vadd.f32 %v4842, %v5076
      %v5107 = vadd.f32 %v4843, %v5078
      %v5108 = vadd.f32 %v4844, %v5080
      %v5109 = vadd.f32 %v4845, %v5082
      %v5110 = vadd.f32 %v4846, %v5084
      %v5111 = vadd.f32 %v4847, %v5086
      %v5112 = vadd.f32 %v4848, %v5088
      %v5113 = vmul.f32 %v5101, 0.5
      %v5114 = vmul.f32 %v5102, 0.5
      %v5115 = vmul.f32 %v5103, 0.5
      %v5116 = vmul.f32 %v5104, 0.5
      %v5117 = vmul.f32 %v5105, 0.5
      %v5118 = vmul.f32 %v5106, 0.5
      %v5119 = vmul.f32 %v5107, 0.5
      %v5120 = vmul.f32 %v5108, 0.5
      %v5121 = vmul.f32 %v5109, 0.5
      %v5122 = vmul.f32 %v5110, 0.5
      %v5123 = vmul.f32 %v5111, 0.5
      %v5124 = vmul.f32 %v5112, 0.5
      %v5125 = vld [vmem:[%s37] sm:$0xff]
      %v5126 = vld [vmem:[%s37 + $0x8] sm:$0xff]
      %v5127 = vld [vmem:[%s37 + $0x10] sm:$0xff]
      %v5128 = vld [vmem:[%s37 + $0x18] sm:$0xff]
      %v5129 = vld [vmem:[%s39] sm:$0x1]
      %v5131 = vlaneseq
      %v5132 = vshrl.u32 %v5131, 7
      %v5133 = vsub.s32 0, %v5132
      %v5134 = vrot.slane %v5129, %v5133
      %v5148 = vlaneseq
      %v5149 = vshrl.u32 %v5148, 7
      %v5150 = vsub.s32 0, %v5149
      %v5151 = vrot.slane %v5113, %v5150
      %v5152 = vlaneseq
      %v5153 = vshrl.u32 %v5152, 7
      %v5154 = vsub.s32 0, %v5153
      %v5155 = vrot.slane %v5114, %v5154
      %v5156 = vlaneseq
      %v5157 = vshrl.u32 %v5156, 7
      %v5158 = vsub.s32 0, %v5157
      %v5159 = vrot.slane %v5115, %v5158
      %v5160 = vlaneseq
      %v5161 = vshrl.u32 %v5160, 7
      %v5162 = vsub.s32 0, %v5161
      %v5163 = vrot.slane %v5116, %v5162
      %v5164 = vlaneseq
      %v5165 = vshrl.u32 %v5164, 7
      %v5166 = vsub.s32 0, %v5165
      %v5167 = vrot.slane %v5117, %v5166
      %v5168 = vlaneseq
      %v5169 = vshrl.u32 %v5168, 7
      %v5170 = vsub.s32 0, %v5169
      %v5171 = vrot.slane %v5118, %v5170
      %v5172 = vlaneseq
      %v5173 = vshrl.u32 %v5172, 7
      %v5174 = vsub.s32 0, %v5173
      %v5175 = vrot.slane %v5119, %v5174
      %v5176 = vlaneseq
      %v5177 = vshrl.u32 %v5176, 7
      %v5178 = vsub.s32 0, %v5177
      %v5179 = vrot.slane %v5120, %v5178
      %v5180 = vlaneseq
      %v5181 = vshrl.u32 %v5180, 7
      %v5182 = vsub.s32 0, %v5181
      %v5183 = vrot.slane %v5121, %v5182
      %v5184 = vlaneseq
      %v5185 = vshrl.u32 %v5184, 7
      %v5186 = vsub.s32 0, %v5185
      %v5187 = vrot.slane %v5122, %v5186
      %v5188 = vlaneseq
      %v5189 = vshrl.u32 %v5188, 7
      %v5190 = vsub.s32 0, %v5189
      %v5191 = vrot.slane %v5123, %v5190
      %v5192 = vlaneseq
      %v5193 = vshrl.u32 %v5192, 7
      %v5194 = vsub.s32 0, %v5193
      %v5195 = vrot.slane %v5124, %v5194
      %v5196 = vsel %vm3371, %v5155, %v5151
      %vm5197 = vcmask 1042434
      %v5198 = vsel %vm5197, %v5159, %v5196
      %vm5199 = vcmask 1043459
      %v5200 = vsel %vm5199, %v5163, %v5198
      %vm5201 = vcmask 1044484
      %v5202 = vsel %vm5201, %v5167, %v5200
      %vm5203 = vcmask 1045509
      %v5204 = vsel %vm5203, %v5171, %v5202
      %vm5205 = vcmask 1046534
      %v5206 = vsel %vm5205, %v5175, %v5204
      %vm5207 = vcmask 1047559
      %v5208 = vsel %vm5207, %v5179, %v5206
      %v5209 = vsel %vm3371, %v5187, %v5183
      %v5210 = vsel %vm5197, %v5191, %v5209
      %v5211 = vsel %vm5199, %v5195, %v5210
      %v5212 = vsel %vm2216, %v5208, 0
      %v5214 = vsel %vm2216, %v5211, 0
      %5216 = vmatprep.subr.mxu0 0.0
      %5217 = vmatpush1.msra.mxu0 %v5125
      %5218 = vmatprep.subr.mxu0 0.0
      %5219 = vmatpush1.msra.mxu0 %v5126
      %5220 = vmatprep.subr.mxu0 0.0
      %5221 = vmatpush1.msra.mxu0 %v5127
      %5222 = vmatprep.subr.mxu0 0.0
      %5223 = vmatpush1.msra.mxu0 %v5128
      %5224 = vmatprep.subr.mxu0 0.0
      %5225 = vmatpush1.msra.mxu0 0.0
      %5226 = vmatprep.subr.mxu0 0.0
      %5227 = vmatpush1.msra.mxu0 0.0
      %5228 = vmatprep.subr.mxu0 0.0
      %5229 = vmatpush1.msra.mxu0 0.0
      %5230 = vmatprep.subr.mxu0 0.0
      %5231 = vmatpush1.msra.mxu0 0.0
      %5232 = vmatprep.subr.mxu0 0.0
      %5233 = vmatpush1.msra.mxu0 0.0
      %5234 = vmatprep.subr.mxu0 0.0
      %5235 = vmatpush1.msra.mxu0 0.0
      %5236 = vmatprep.subr.mxu0 0.0
      %5237 = vmatpush1.msra.mxu0 0.0
      %5238 = vmatprep.subr.mxu0 0.0
      %5239 = vmatpush1.msra.mxu0 0.0
      %5240 = vmatprep.subr.mxu0 0.0
      %5241 = vmatpush1.msra.mxu0 0.0
      %5242 = vmatprep.subr.mxu0 0.0
      %5243 = vmatpush1.msra.mxu0 0.0
      %5244 = vmatprep.subr.mxu0 0.0
      %5245 = vmatpush1.msra.mxu0 0.0
      %5246 = vmatprep.subr.mxu0 0.0
      %5247 = vmatpush1.msra.mxu0 0.0
      %5248 = vmatprep.subr.mxu0 0.0
      %5249 = vmatpush1.msra.mxu0 0.0
      %5250 = vmatprep.subr.mxu0 0.0
      %5251 = vmatpush1.msra.mxu0 0.0
      %5252 = vmatprep.subr.mxu0 0.0
      %5253 = vmatpush1.msra.mxu0 0.0
      %5254 = vmatprep.subr.mxu0 0.0
      %5255 = vmatpush1.msra.mxu0 0.0
      %5256 = vmatprep.subr.mxu0 0.0
      %5257 = vmatpush1.msra.mxu0 0.0
      %5258 = vmatprep.subr.mxu0 0.0
      %5259 = vmatpush1.msra.mxu0 0.0
      %5260 = vmatprep.subr.mxu0 0.0
      %5261 = vmatpush1.msra.mxu0 0.0
      %5262 = vmatprep.subr.mxu0 0.0
      %5263 = vmatpush1.msra.mxu0 0.0
      %5264 = vmatprep.subr.mxu0 0.0
      %5265 = vmatpush1.msra.mxu0 0.0
      %5266 = vmatprep.subr.mxu0 0.0
      %5267 = vmatpush1.msra.mxu0 0.0
      %5268 = vmatprep.subr.mxu0 0.0
      %5269 = vmatpush1.msra.mxu0 0.0
      %5270 = vmatprep.subr.mxu0 0.0
      %5271 = vmatpush1.msra.mxu0 0.0
      %5272 = vmatprep.subr.mxu0 0.0
      %5273 = vmatpush1.msra.mxu0 0.0
      %5274 = vmatprep.subr.mxu0 0.0
      %5275 = vmatpush1.msra.mxu0 0.0
      %5276 = vmatprep.subr.mxu0 0.0
      %5277 = vmatpush1.msra.mxu0 0.0
      %5278 = vmatprep.subr.mxu0 0.0
      %5279 = vmatpush1.msra.mxu0 0.0
      %5280 = vmatprep.mubr.f32.mxu0 0.0
      %5281 = vmatmul.mubr.f32.gmra.mrb[0].mxu0 %v5212
      %v5282 = vpop.f32.mrb[0].mxu0
      %v5283 = vadd.f32 %v5134, %v5282
      %v5284 = vpop.f32.mrb[0].mxu0
      %5285 = vmatprep.mubr.f32.mxu0 0.0
      %5286 = vmatmul.mubr.f32.gmra.mrb[0].mxu0 %v5214
      %v5287 = vpop.f32.mrb[0].mxu0
      %v5288 = vadd.f32 %v5134, %v5287
      %v5289 = vpop.f32.mrb[0].mxu0
      %5290 = vdwg.mxu0
      %vm5291 = vcmp.gt.f32.partialorder %v5283, 0.0
      %vm5292 = vcmp.gt.f32.partialorder %v5288, 0.0
      %v5293 = vmin.f32 %v5283, 0.0
      %v5294 = vmin.f32 %v5288, 0.0
      %v5295 = vmul.f32 %v5293, 1.442695
      %v5296 = vpow.pop %v5295
      %v5297 = vmul.f32 %v5294, 1.442695
      %v5298 = vpow.pop %v5297
      %v5299 = vsub.f32 %v5296, 1.0
      %v5300 = vsub.f32 %v5298, 1.0
      %v5301 = vsel %vm5291, %v5283, %v5299
      %v5302 = vsel %vm5292, %v5288, %v5300
      %v5303 = vld [vmem:[%s41] sm:$0xff]
      %v5304 = vld [vmem:[%s41 + $0x8] sm:$0xff]
      %v5305 = vld [vmem:[%s41 + $0x10] sm:$0xff]
      %v5306 = vld [vmem:[%s41 + $0x18] sm:$0xff]
      %v5307 = vld [vmem:[%s43] sm:$0x1]
      %v5309 = vlaneseq
      %v5310 = vshrl.u32 %v5309, 7
      %v5311 = vsub.s32 0, %v5310
      %v5312 = vrot.slane %v5307, %v5311
      %v5315 = vsel %vm2216, %v5301, 0
      %v5318 = vsel %vm2216, %v5302, 0
      %5320 = vmatprep.subr.mxu0 0.0
      %5321 = vmatpush1.msra.mxu0 %v5303
      %5322 = vmatprep.subr.mxu0 0.0
      %5323 = vmatpush1.msra.mxu0 %v5304
      %5324 = vmatprep.subr.mxu0 0.0
      %5325 = vmatpush1.msra.mxu0 %v5305
      %5326 = vmatprep.subr.mxu0 0.0
      %5327 = vmatpush1.msra.mxu0 %v5306
      %5328 = vmatprep.subr.mxu0 0.0
      %5329 = vmatpush1.msra.mxu0 0.0
      %5330 = vmatprep.subr.mxu0 0.0
      %5331 = vmatpush1.msra.mxu0 0.0
      %5332 = vmatprep.subr.mxu0 0.0
      %5333 = vmatpush1.msra.mxu0 0.0
      %5334 = vmatprep.subr.mxu0 0.0
      %5335 = vmatpush1.msra.mxu0 0.0
      %5336 = vmatprep.subr.mxu0 0.0
      %5337 = vmatpush1.msra.mxu0 0.0
      %5338 = vmatprep.subr.mxu0 0.0
      %5339 = vmatpush1.msra.mxu0 0.0
      %5340 = vmatprep.subr.mxu0 0.0
      %5341 = vmatpush1.msra.mxu0 0.0
      %5342 = vmatprep.subr.mxu0 0.0
      %5343 = vmatpush1.msra.mxu0 0.0
      %5344 = vmatprep.subr.mxu0 0.0
      %5345 = vmatpush1.msra.mxu0 0.0
      %5346 = vmatprep.subr.mxu0 0.0
      %5347 = vmatpush1.msra.mxu0 0.0
      %5348 = vmatprep.subr.mxu0 0.0
      %5349 = vmatpush1.msra.mxu0 0.0
      %5350 = vmatprep.subr.mxu0 0.0
      %5351 = vmatpush1.msra.mxu0 0.0
      %5352 = vmatprep.subr.mxu0 0.0
      %5353 = vmatpush1.msra.mxu0 0.0
      %5354 = vmatprep.subr.mxu0 0.0
      %5355 = vmatpush1.msra.mxu0 0.0
      %5356 = vmatprep.subr.mxu0 0.0
      %5357 = vmatpush1.msra.mxu0 0.0
      %5358 = vmatprep.subr.mxu0 0.0
      %5359 = vmatpush1.msra.mxu0 0.0
      %5360 = vmatprep.subr.mxu0 0.0
      %5361 = vmatpush1.msra.mxu0 0.0
      %5362 = vmatprep.subr.mxu0 0.0
      %5363 = vmatpush1.msra.mxu0 0.0
      %5364 = vmatprep.subr.mxu0 0.0
      %5365 = vmatpush1.msra.mxu0 0.0
      %5366 = vmatprep.subr.mxu0 0.0
      %5367 = vmatpush1.msra.mxu0 0.0
      %5368 = vmatprep.subr.mxu0 0.0
      %5369 = vmatpush1.msra.mxu0 0.0
      %5370 = vmatprep.subr.mxu0 0.0
      %5371 = vmatpush1.msra.mxu0 0.0
      %5372 = vmatprep.subr.mxu0 0.0
      %5373 = vmatpush1.msra.mxu0 0.0
      %5374 = vmatprep.subr.mxu0 0.0
      %5375 = vmatpush1.msra.mxu0 0.0
      %5376 = vmatprep.subr.mxu0 0.0
      %5377 = vmatpush1.msra.mxu0 0.0
      %5378 = vmatprep.subr.mxu0 0.0
      %5379 = vmatpush1.msra.mxu0 0.0
      %5380 = vmatprep.subr.mxu0 0.0
      %5381 = vmatpush1.msra.mxu0 0.0
      %5382 = vmatprep.subr.mxu0 0.0
      %5383 = vmatpush1.msra.mxu0 0.0
      %5384 = vmatprep.mubr.f32.mxu0 0.0
      %5385 = vmatmul.mubr.f32.gmra.mrb[0].mxu0 %v5315
      %v5386 = vpop.f32.mrb[0].mxu0
      %v5387 = vadd.f32 %v5312, %v5386
      %v5388 = vpop.f32.mrb[0].mxu0
      %5389 = vmatprep.mubr.f32.mxu0 0.0
      %5390 = vmatmul.mubr.f32.gmra.mrb[0].mxu0 %v5318
      %v5391 = vpop.f32.mrb[0].mxu0
      %v5392 = vadd.f32 %v5312, %v5391
      %v5393 = vpop.f32.mrb[0].mxu0
      %5394 = vdwg.mxu0
      %vm5395 = vcmp.gt.f32.partialorder %v5387, 0.0
      %vm5396 = vcmp.gt.f32.partialorder %v5392, 0.0
      %v5397 = vmin.f32 %v5387, 0.0
      %v5398 = vmin.f32 %v5392, 0.0
      %v5399 = vmul.f32 %v5397, 1.442695
      %v5400 = vpow.pop %v5399
      %v5401 = vmul.f32 %v5398, 1.442695
      %v5402 = vpow.pop %v5401
      %v5403 = vsub.f32 %v5400, 1.0
      %v5404 = vsub.f32 %v5402, 1.0
      %v5405 = vsel %vm5395, %v5387, %v5403
      %v5406 = vsel %vm5396, %v5392, %v5404
      %v5407 = vld [vmem:[%s11] sm:$0xf]
      %vm5408 = vcmask 97280
      %v5410 = vsel %vm5408, %v5407, 0
      %v5413 = vsel %vm2032, %v5406, 0
      %5415 = vmatprep.subr.mxu0 0.0
      %5416 = vmatpush1.msra.mxu0 %v5405
      %5417 = vmatprep.subr.mxu0 0.0
      %5418 = vmatpush1.msra.mxu0 %v5413
      %5419 = vmatprep.subr.mxu0 0.0
      %5420 = vmatpush1.msra.mxu0 0.0
      %5421 = vmatprep.subr.mxu0 0.0
      %5422 = vmatpush1.msra.mxu0 0.0
      %5423 = vmatprep.subr.mxu0 0.0
      %5424 = vmatpush1.msra.mxu0 0.0
      %5425 = vmatprep.subr.mxu0 0.0
      %5426 = vmatpush1.msra.mxu0 0.0
      %5427 = vmatprep.subr.mxu0 0.0
      %5428 = vmatpush1.msra.mxu0 0.0
      %5429 = vmatprep.subr.mxu0 0.0
      %5430 = vmatpush1.msra.mxu0 0.0
      %5431 = vmatprep.subr.mxu0 0.0
      %5432 = vmatpush1.msra.mxu0 0.0
      %5433 = vmatprep.subr.mxu0 0.0
      %5434 = vmatpush1.msra.mxu0 0.0
      %5435 = vmatprep.subr.mxu0 0.0
      %5436 = vmatpush1.msra.mxu0 0.0
      %5437 = vmatprep.subr.mxu0 0.0
      %5438 = vmatpush1.msra.mxu0 0.0
      %5439 = vmatprep.subr.mxu0 0.0
      %5440 = vmatpush1.msra.mxu0 0.0
      %5441 = vmatprep.subr.mxu0 0.0
      %5442 = vmatpush1.msra.mxu0 0.0
      %5443 = vmatprep.subr.mxu0 0.0
      %5444 = vmatpush1.msra.mxu0 0.0
      %5445 = vmatprep.subr.mxu0 0.0
      %5446 = vmatpush1.msra.mxu0 0.0
      %5447 = vmatprep.subr.mxu0 0.0
      %5448 = vmatpush1.msra.mxu0 0.0
      %5449 = vmatprep.subr.mxu0 0.0
      %5450 = vmatpush1.msra.mxu0 0.0
      %5451 = vmatprep.subr.mxu0 0.0
      %5452 = vmatpush1.msra.mxu0 0.0
      %5453 = vmatprep.subr.mxu0 0.0
      %5454 = vmatpush1.msra.mxu0 0.0
      %5455 = vmatprep.subr.mxu0 0.0
      %5456 = vmatpush1.msra.mxu0 0.0
      %5457 = vmatprep.subr.mxu0 0.0
      %5458 = vmatpush1.msra.mxu0 0.0
      %5459 = vmatprep.subr.mxu0 0.0
      %5460 = vmatpush1.msra.mxu0 0.0
      %5461 = vmatprep.subr.mxu0 0.0
      %5462 = vmatpush1.msra.mxu0 0.0
      %5463 = vmatprep.subr.mxu0 0.0
      %5464 = vmatpush1.msra.mxu0 0.0
      %5465 = vmatprep.subr.mxu0 0.0
      %5466 = vmatpush1.msra.mxu0 0.0
      %5467 = vmatprep.subr.mxu0 0.0
      %5468 = vmatpush1.msra.mxu0 0.0
      %5469 = vmatprep.subr.mxu0 0.0
      %5470 = vmatpush1.msra.mxu0 0.0
      %5471 = vmatprep.subr.mxu0 0.0
      %5472 = vmatpush1.msra.mxu0 0.0
      %5473 = vmatprep.subr.mxu0 0.0
      %5474 = vmatpush1.msra.mxu0 0.0
      %5475 = vmatprep.subr.mxu0 0.0
      %5476 = vmatpush1.msra.mxu0 0.0
      %5477 = vmatprep.subr.mxu0 0.0
      %5478 = vmatpush1.msra.mxu0 0.0
      %5479 = vmatprep.mubr.f32.mxu0 0.0
      %5480 = vmatmul.mubr.f32.gmra.mrb[0].mxu0 %v5410
      %v5481 = vpop.f32.mrb[0].mxu0
      %v5482 = vadd.f32 0.0, %v5481
      %v5483 = vpop.f32.mrb[0].mxu0
      %5484 = vdwg.mxu0
      %v5485 = vmul.f32 %v5482, 0.25
      %v5486 = vld [vmem:[%s45] sm:$0xff]
      %v5487 = vld [vmem:[%s45 + $0x8] sm:$0xff]
      %v5488 = vld [vmem:[%s45 + $0x10] sm:$0xff]
      %v5489 = vld [vmem:[%s45 + $0x18] sm:$0xff]
      %v5490 = vld [vmem:[%s47] sm:$0x1]
      %v5492 = vlaneseq
      %v5493 = vshrl.u32 %v5492, 7
      %v5494 = vsub.s32 0, %v5493
      %v5495 = vrot.slane %v5490, %v5494
      %v5498 = vsel %vm2216, %v5485, 0
      %5500 = vmatprep.subr.mxu0 0.0
      %5501 = vmatpush1.msra.mxu0 %v5486
      %5502 = vmatprep.subr.mxu0 0.0
      %5503 = vmatpush1.msra.mxu0 %v5487
      %5504 = vmatprep.subr.mxu0 0.0
      %5505 = vmatpush1.msra.mxu0 %v5488
      %5506 = vmatprep.subr.mxu0 0.0
      %5507 = vmatpush1.msra.mxu0 %v5489
      %5508 = vmatprep.subr.mxu0 0.0
      %5509 = vmatpush1.msra.mxu0 0.0
      %5510 = vmatprep.subr.mxu0 0.0
      %5511 = vmatpush1.msra.mxu0 0.0
      %5512 = vmatprep.subr.mxu0 0.0
      %5513 = vmatpush1.msra.mxu0 0.0
      %5514 = vmatprep.subr.mxu0 0.0
      %5515 = vmatpush1.msra.mxu0 0.0
      %5516 = vmatprep.subr.mxu0 0.0
      %5517 = vmatpush1.msra.mxu0 0.0
      %5518 = vmatprep.subr.mxu0 0.0
      %5519 = vmatpush1.msra.mxu0 0.0
      %5520 = vmatprep.subr.mxu0 0.0
      %5521 = vmatpush1.msra.mxu0 0.0
      %5522 = vmatprep.subr.mxu0 0.0
      %5523 = vmatpush1.msra.mxu0 0.0
      %5524 = vmatprep.subr.mxu0 0.0
      %5525 = vmatpush1.msra.mxu0 0.0
      %5526 = vmatprep.subr.mxu0 0.0
      %5527 = vmatpush1.msra.mxu0 0.0
      %5528 = vmatprep.subr.mxu0 0.0
      %5529 = vmatpush1.msra.mxu0 0.0
      %5530 = vmatprep.subr.mxu0 0.0
      %5531 = vmatpush1.msra.mxu0 0.0
      %5532 = vmatprep.subr.mxu0 0.0
      %5533 = vmatpush1.msra.mxu0 0.0
      %5534 = vmatprep.subr.mxu0 0.0
      %5535 = vmatpush1.msra.mxu0 0.0
      %5536 = vmatprep.subr.mxu0 0.0
      %5537 = vmatpush1.msra.mxu0 0.0
      %5538 = vmatprep.subr.mxu0 0.0
      %5539 = vmatpush1.msra.mxu0 0.0
      %5540 = vmatprep.subr.mxu0 0.0
      %5541 = vmatpush1.msra.mxu0 0.0
      %5542 = vmatprep.subr.mxu0 0.0
      %5543 = vmatpush1.msra.mxu0 0.0
      %5544 = vmatprep.subr.mxu0 0.0
      %5545 = vmatpush1.msra.mxu0 0.0
      %5546 = vmatprep.subr.mxu0 0.0
      %5547 = vmatpush1.msra.mxu0 0.0
      %5548 = vmatprep.subr.mxu0 0.0
      %5549 = vmatpush1.msra.mxu0 0.0
      %5550 = vmatprep.subr.mxu0 0.0
      %5551 = vmatpush1.msra.mxu0 0.0
      %5552 = vmatprep.subr.mxu0 0.0
      %5553 = vmatpush1.msra.mxu0 0.0
      %5554 = vmatprep.subr.mxu0 0.0
      %5555 = vmatpush1.msra.mxu0 0.0
      %5556 = vmatprep.subr.mxu0 0.0
      %5557 = vmatpush1.msra.mxu0 0.0
      %5558 = vmatprep.subr.mxu0 0.0
      %5559 = vmatpush1.msra.mxu0 0.0
      %5560 = vmatprep.subr.mxu0 0.0
      %5561 = vmatpush1.msra.mxu0 0.0
      %5562 = vmatprep.subr.mxu0 0.0
      %5563 = vmatpush1.msra.mxu0 0.0
      %5564 = vmatprep.mubr.f32.mxu0 0.0
      %5565 = vmatmul.mubr.f32.gmra.mrb[0].mxu0 %v5498
      %v5566 = vpop.f32.mrb[0].mxu0
      %v5567 = vadd.f32 %v5495, %v5566
      %v5568 = vpop.f32.mrb[0].mxu0
      %5569 = vdwg.mxu0
      %vm5570 = vcmp.gt.f32.partialorder %v5567, 0.0
      %v5571 = vmin.f32 %v5567, 0.0
      %v5572 = vmul.f32 %v5571, 1.442695
      %v5573 = vpow.pop %v5572
      %v5574 = vsub.f32 %v5573, 1.0
      %v5575 = vsel %vm5570, %v5567, %v5574
      %v5576 = vld [vmem:[%s49] sm:$0xff]
      %v5577 = vld [vmem:[%s49 + $0x8] sm:$0xff]
      %v5578 = vld [vmem:[%s49 + $0x10] sm:$0xff]
      %v5579 = vld [vmem:[%s49 + $0x18] sm:$0xff]
      %v5580 = vld [vmem:[%s51] sm:$0x1]
      %v5582 = vlaneseq
      %v5583 = vshrl.u32 %v5582, 7
      %v5584 = vsub.s32 0, %v5583
      %v5585 = vrot.slane %v5580, %v5584
      %v5588 = vsel %vm2216, %v5575, 0
      %5590 = vmatprep.subr.mxu0 0.0
      %5591 = vmatpush1.msra.mxu0 %v5576
      %5592 = vmatprep.subr.mxu0 0.0
      %5593 = vmatpush1.msra.mxu0 %v5577
      %5594 = vmatprep.subr.mxu0 0.0
      %5595 = vmatpush1.msra.mxu0 %v5578
      %5596 = vmatprep.subr.mxu0 0.0
      %5597 = vmatpush1.msra.mxu0 %v5579
      %5598 = vmatprep.subr.mxu0 0.0
      %5599 = vmatpush1.msra.mxu0 0.0
      %5600 = vmatprep.subr.mxu0 0.0
      %5601 = vmatpush1.msra.mxu0 0.0
      %5602 = vmatprep.subr.mxu0 0.0
      %5603 = vmatpush1.msra.mxu0 0.0
      %5604 = vmatprep.subr.mxu0 0.0
      %5605 = vmatpush1.msra.mxu0 0.0
      %5606 = vmatprep.subr.mxu0 0.0
      %5607 = vmatpush1.msra.mxu0 0.0
      %5608 = vmatprep.subr.mxu0 0.0
      %5609 = vmatpush1.msra.mxu0 0.0
      %5610 = vmatprep.subr.mxu0 0.0
      %5611 = vmatpush1.msra.mxu0 0.0
      %5612 = vmatprep.subr.mxu0 0.0
      %5613 = vmatpush1.msra.mxu0 0.0
      %5614 = vmatprep.subr.mxu0 0.0
      %5615 = vmatpush1.msra.mxu0 0.0
      %5616 = vmatprep.subr.mxu0 0.0
      %5617 = vmatpush1.msra.mxu0 0.0
      %5618 = vmatprep.subr.mxu0 0.0
      %5619 = vmatpush1.msra.mxu0 0.0
      %5620 = vmatprep.subr.mxu0 0.0
      %5621 = vmatpush1.msra.mxu0 0.0
      %5622 = vmatprep.subr.mxu0 0.0
      %5623 = vmatpush1.msra.mxu0 0.0
      %5624 = vmatprep.subr.mxu0 0.0
      %5625 = vmatpush1.msra.mxu0 0.0
      %5626 = vmatprep.subr.mxu0 0.0
      %5627 = vmatpush1.msra.mxu0 0.0
      %5628 = vmatprep.subr.mxu0 0.0
      %5629 = vmatpush1.msra.mxu0 0.0
      %5630 = vmatprep.subr.mxu0 0.0
      %5631 = vmatpush1.msra.mxu0 0.0
      %5632 = vmatprep.subr.mxu0 0.0
      %5633 = vmatpush1.msra.mxu0 0.0
      %5634 = vmatprep.subr.mxu0 0.0
      %5635 = vmatpush1.msra.mxu0 0.0
      %5636 = vmatprep.subr.mxu0 0.0
      %5637 = vmatpush1.msra.mxu0 0.0
      %5638 = vmatprep.subr.mxu0 0.0
      %5639 = vmatpush1.msra.mxu0 0.0
      %5640 = vmatprep.subr.mxu0 0.0
      %5641 = vmatpush1.msra.mxu0 0.0
      %5642 = vmatprep.subr.mxu0 0.0
      %5643 = vmatpush1.msra.mxu0 0.0
      %5644 = vmatprep.subr.mxu0 0.0
      %5645 = vmatpush1.msra.mxu0 0.0
      %5646 = vmatprep.subr.mxu0 0.0
      %5647 = vmatpush1.msra.mxu0 0.0
      %5648 = vmatprep.subr.mxu0 0.0
      %5649 = vmatpush1.msra.mxu0 0.0
      %5650 = vmatprep.subr.mxu0 0.0
      %5651 = vmatpush1.msra.mxu0 0.0
      %5652 = vmatprep.subr.mxu0 0.0
      %5653 = vmatpush1.msra.mxu0 0.0
      %5654 = vmatprep.mubr.f32.mxu0 0.0
      %5655 = vmatmul.mubr.f32.gmra.mrb[0].mxu0 %v5588
      %v5656 = vpop.f32.mrb[0].mxu0
      %v5657 = vadd.f32 %v5585, %v5656
      %v5658 = vpop.f32.mrb[0].mxu0
      %5659 = vdwg.mxu0
      %vm5660 = vcmp.gt.f32.partialorder %v5657, 0.0
      %v5661 = vmin.f32 %v5657, 0.0
      %v5662 = vmul.f32 %v5661, 1.442695
      %v5663 = vpow.pop %v5662
      %v5664 = vsub.f32 %v5663, 1.0
      %v5665 = vsel %vm5660, %v5657, %v5664
      %v5666 = vld [vmem:[%s9] sm:$0xff]
      %v5667 = vld [vmem:[%s9 + $0x8] sm:$0xf]
      %v5669 = vsel %vm1656, %v5666, 0
      %v5672 = vsel %vm1656, %v5667, 0
      %v5675 = vsel %vm2032, %v5665, 0
      %5677 = vmatprep.subr.mxu0 0.0
      %5678 = vmatpush1.msra.mxu0 %v5675
      %5679 = vmatprep.subr.mxu0 0.0
      %5680 = vmatpush1.msra.mxu0 0.0
      %5681 = vmatprep.subr.mxu0 0.0
      %5682 = vmatpush1.msra.mxu0 0.0
      %5683 = vmatprep.subr.mxu0 0.0
      %5684 = vmatpush1.msra.mxu0 0.0
      %5685 = vmatprep.subr.mxu0 0.0
      %5686 = vmatpush1.msra.mxu0 0.0
      %5687 = vmatprep.subr.mxu0 0.0
      %5688 = vmatpush1.msra.mxu0 0.0
      %5689 = vmatprep.subr.mxu0 0.0
      %5690 = vmatpush1.msra.mxu0 0.0
      %5691 = vmatprep.subr.mxu0 0.0
      %5692 = vmatpush1.msra.mxu0 0.0
      %5693 = vmatprep.subr.mxu0 0.0
      %5694 = vmatpush1.msra.mxu0 0.0
      %5695 = vmatprep.subr.mxu0 0.0
      %5696 = vmatpush1.msra.mxu0 0.0
      %5697 = vmatprep.subr.mxu0 0.0
      %5698 = vmatpush1.msra.mxu0 0.0
      %5699 = vmatprep.subr.mxu0 0.0
      %5700 = vmatpush1.msra.mxu0 0.0
      %5701 = vmatprep.subr.mxu0 0.0
      %5702 = vmatpush1.msra.mxu0 0.0
      %5703 = vmatprep.subr.mxu0 0.0
      %5704 = vmatpush1.msra.mxu0 0.0
      %5705 = vmatprep.subr.mxu0 0.0
      %5706 = vmatpush1.msra.mxu0 0.0
      %5707 = vmatprep.subr.mxu0 0.0
      %5708 = vmatpush1.msra.mxu0 0.0
      %5709 = vmatprep.subr.mxu0 0.0
      %5710 = vmatpush1.msra.mxu0 0.0
      %5711 = vmatprep.subr.mxu0 0.0
      %5712 = vmatpush1.msra.mxu0 0.0
      %5713 = vmatprep.subr.mxu0 0.0
      %5714 = vmatpush1.msra.mxu0 0.0
      %5715 = vmatprep.subr.mxu0 0.0
      %5716 = vmatpush1.msra.mxu0 0.0
      %5717 = vmatprep.subr.mxu0 0.0
      %5718 = vmatpush1.msra.mxu0 0.0
      %5719 = vmatprep.subr.mxu0 0.0
      %5720 = vmatpush1.msra.mxu0 0.0
      %5721 = vmatprep.subr.mxu0 0.0
      %5722 = vmatpush1.msra.mxu0 0.0
      %5723 = vmatprep.subr.mxu0 0.0
      %5724 = vmatpush1.msra.mxu0 0.0
      %5725 = vmatprep.subr.mxu0 0.0
      %5726 = vmatpush1.msra.mxu0 0.0
      %5727 = vmatprep.subr.mxu0 0.0
      %5728 = vmatpush1.msra.mxu0 0.0
      %5729 = vmatprep.subr.mxu0 0.0
      %5730 = vmatpush1.msra.mxu0 0.0
      %5731 = vmatprep.subr.mxu0 0.0
      %5732 = vmatpush1.msra.mxu0 0.0
      %5733 = vmatprep.subr.mxu0 0.0
      %5734 = vmatpush1.msra.mxu0 0.0
      %5735 = vmatprep.subr.mxu0 0.0
      %5736 = vmatpush1.msra.mxu0 0.0
      %5737 = vmatprep.subr.mxu0 0.0
      %5738 = vmatpush1.msra.mxu0 0.0
      %5739 = vmatprep.subr.mxu0 0.0
      %5740 = vmatpush1.msra.mxu0 0.0
      %5741 = vmatprep.mubr.f32.mxu0 0.0
      %5742 = vmatmul.mubr.f32.gmra.mrb[0].mxu0 %v5669
      %v5743 = vpop.f32.mrb[0].mxu0
      %v5744 = vadd.f32 0.0, %v5743
      %v5745 = vpop.f32.mrb[0].mxu0
      %5746 = vmatprep.mubr.f32.mxu0 0.0
      %5747 = vmatmul.mubr.f32.gmra.mrb[0].mxu0 %v5672
      %v5748 = vpop.f32.mrb[0].mxu0
      %v5749 = vadd.f32 0.0, %v5748
      %v5750 = vpop.f32.mrb[0].mxu0
      %5751 = vdwg.mxu0
      %v5752 = vld [vmem:[%s7] sm:$0xff]
      %v5753 = vld [vmem:[%s7 + $0x8] sm:$0xf]
      %v5755 = vsel %vm1656, %v5752, 0
      %v5758 = vsel %vm1656, %v5753, 0
      %5760 = vmatprep.subr.mxu0 0.0
      %5761 = vmatpush1.msra.mxu0 %v5675
      %5762 = vmatprep.subr.mxu0 0.0
      %5763 = vmatpush1.msra.mxu0 0.0
      %5764 = vmatprep.subr.mxu0 0.0
      %5765 = vmatpush1.msra.mxu0 0.0
      %5766 = vmatprep.subr.mxu0 0.0
      %5767 = vmatpush1.msra.mxu0 0.0
      %5768 = vmatprep.subr.mxu0 0.0
      %5769 = vmatpush1.msra.mxu0 0.0
      %5770 = vmatprep.subr.mxu0 0.0
      %5771 = vmatpush1.msra.mxu0 0.0
      %5772 = vmatprep.subr.mxu0 0.0
      %5773 = vmatpush1.msra.mxu0 0.0
      %5774 = vmatprep.subr.mxu0 0.0
      %5775 = vmatpush1.msra.mxu0 0.0
      %5776 = vmatprep.subr.mxu0 0.0
      %5777 = vmatpush1.msra.mxu0 0.0
      %5778 = vmatprep.subr.mxu0 0.0
      %5779 = vmatpush1.msra.mxu0 0.0
      %5780 = vmatprep.subr.mxu0 0.0
      %5781 = vmatpush1.msra.mxu0 0.0
      %5782 = vmatprep.subr.mxu0 0.0
      %5783 = vmatpush1.msra.mxu0 0.0
      %5784 = vmatprep.subr.mxu0 0.0
      %5785 = vmatpush1.msra.mxu0 0.0
      %5786 = vmatprep.subr.mxu0 0.0
      %5787 = vmatpush1.msra.mxu0 0.0
      %5788 = vmatprep.subr.mxu0 0.0
      %5789 = vmatpush1.msra.mxu0 0.0
      %5790 = vmatprep.subr.mxu0 0.0
      %5791 = vmatpush1.msra.mxu0 0.0
      %5792 = vmatprep.subr.mxu0 0.0
      %5793 = vmatpush1.msra.mxu0 0.0
      %5794 = vmatprep.subr.mxu0 0.0
      %5795 = vmatpush1.msra.mxu0 0.0
      %5796 = vmatprep.subr.mxu0 0.0
      %5797 = vmatpush1.msra.mxu0 0.0
      %5798 = vmatprep.subr.mxu0 0.0
      %5799 = vmatpush1.msra.mxu0 0.0
      %5800 = vmatprep.subr.mxu0 0.0
      %5801 = vmatpush1.msra.mxu0 0.0
      %5802 = vmatprep.subr.mxu0 0.0
      %5803 = vmatpush1.msra.mxu0 0.0
      %5804 = vmatprep.subr.mxu0 0.0
      %5805 = vmatpush1.msra.mxu0 0.0
      %5806 = vmatprep.subr.mxu0 0.0
      %5807 = vmatpush1.msra.mxu0 0.0
      %5808 = vmatprep.subr.mxu0 0.0
      %5809 = vmatpush1.msra.mxu0 0.0
      %5810 = vmatprep.subr.mxu0 0.0
      %5811 = vmatpush1.msra.mxu0 0.0
      %5812 = vmatprep.subr.mxu0 0.0
      %5813 = vmatpush1.msra.mxu0 0.0
      %5814 = vmatprep.subr.mxu0 0.0
      %5815 = vmatpush1.msra.mxu0 0.0
      %5816 = vmatprep.subr.mxu0 0.0
      %5817 = vmatpush1.msra.mxu0 0.0
      %5818 = vmatprep.subr.mxu0 0.0
      %5819 = vmatpush1.msra.mxu0 0.0
      %5820 = vmatprep.subr.mxu0 0.0
      %5821 = vmatpush1.msra.mxu0 0.0
      %5822 = vmatprep.subr.mxu0 0.0
      %5823 = vmatpush1.msra.mxu0 0.0
      %5824 = vmatprep.mubr.f32.mxu0 0.0
      %5825 = vmatmul.mubr.f32.gmra.mrb[0].mxu0 %v5755
      %v5826 = vpop.f32.mrb[0].mxu0
      %v5827 = vadd.f32 0.0, %v5826
      %v5828 = vpop.f32.mrb[0].mxu0
      %5829 = vmatprep.mubr.f32.mxu0 0.0
      %5830 = vmatmul.mubr.f32.gmra.mrb[0].mxu0 %v5758
      %v5831 = vpop.f32.mrb[0].mxu0
      %v5832 = vadd.f32 0.0, %v5831
      %v5833 = vpop.f32.mrb[0].mxu0
      %5834 = vdwg.mxu0
      %5837 = vrot.lane.b32.xlu0 %v5827, 32
      %v5838 = vpop.permute.xlu0 %5837
      %5839 = vrot.lane.b32.xlu0 %v5832, 32
      %v5840 = vpop.permute.xlu0 %5839
      %5844 = vrot.lane.b32.xlu0 %v5405, 64
      %v5845 = vpop.permute.xlu0 %5844
      %5846 = vrot.lane.b32.xlu0 %v5406, 64
      %v5847 = vpop.permute.xlu0 %5846
      %v5850 = vsel %vm2216, %v5744, %v5838
      %v5851 = vsel %vm2216, %v5749, %v5840
      %v5852 = vsel %vm1021, %v5850, %v5845
      %v5853 = vsel %vm1021, %v5851, %v5847
      %v5854 = vld [vmem:[%s53] sm:$0xff]
      %v5855 = vld [vmem:[%s53 + $0x8] sm:$0xff]
      %v5856 = vld [vmem:[%s53 + $0x10] sm:$0xff]
      %v5857 = vld [vmem:[%s53 + $0x18] sm:$0xff]
      %v5858 = vld [vmem:[%s53 + $0x20] sm:$0xff]
      %v5859 = vld [vmem:[%s53 + $0x28] sm:$0xff]
      %v5860 = vld [vmem:[%s53 + $0x30] sm:$0xff]
      %v5861 = vld [vmem:[%s53 + $0x38] sm:$0xff]
      %v5862 = vld [vmem:[%s53 + $0x40] sm:$0xff]
      %v5863 = vld [vmem:[%s53 + $0x48] sm:$0xff]
      %v5864 = vld [vmem:[%s53 + $0x50] sm:$0xff]
      %v5865 = vld [vmem:[%s53 + $0x58] sm:$0xff]
      %v5866 = vld [vmem:[%s55] sm:$0x1]
      %v5868 = vlaneseq
      %v5869 = vshrl.u32 %v5868, 7
      %v5870 = vsub.s32 0, %v5869
      %v5871 = vrot.slane %v5866, %v5870
      %v5874 = vsel %vm3816, %v5852, 0
      %v5877 = vsel %vm3816, %v5853, 0
      %5879 = vmatprep.subr.mxu0 0.0
      %5880 = vmatpush1.msra.mxu0 %v5854
      %5881 = vmatprep.subr.mxu0 0.0
      %5882 = vmatpush1.msra.mxu0 %v5855
      %5883 = vmatprep.subr.mxu0 0.0
      %5884 = vmatpush1.msra.mxu0 %v5856
      %5885 = vmatprep.subr.mxu0 0.0
      %5886 = vmatpush1.msra.mxu0 %v5857
      %5887 = vmatprep.subr.mxu0 0.0
      %5888 = vmatpush1.msra.mxu0 %v5858
      %5889 = vmatprep.subr.mxu0 0.0
      %5890 = vmatpush1.msra.mxu0 %v5859
      %5891 = vmatprep.subr.mxu0 0.0
      %5892 = vmatpush1.msra.mxu0 %v5860
      %5893 = vmatprep.subr.mxu0 0.0
      %5894 = vmatpush1.msra.mxu0 %v5861
      %5895 = vmatprep.subr.mxu0 0.0
      %5896 = vmatpush1.msra.mxu0 %v5862
      %5897 = vmatprep.subr.mxu0 0.0
      %5898 = vmatpush1.msra.mxu0 %v5863
      %5899 = vmatprep.subr.mxu0 0.0
      %5900 = vmatpush1.msra.mxu0 %v5864
      %5901 = vmatprep.subr.mxu0 0.0
      %5902 = vmatpush1.msra.mxu0 %v5865
      %5903 = vmatprep.subr.mxu0 0.0
      %5904 = vmatpush1.msra.mxu0 0.0
      %5905 = vmatprep.subr.mxu0 0.0
      %5906 = vmatpush1.msra.mxu0 0.0
      %5907 = vmatprep.subr.mxu0 0.0
      %5908 = vmatpush1.msra.mxu0 0.0
      %5909 = vmatprep.subr.mxu0 0.0
      %5910 = vmatpush1.msra.mxu0 0.0
      %5911 = vmatprep.subr.mxu0 0.0
      %5912 = vmatpush1.msra.mxu0 0.0
      %5913 = vmatprep.subr.mxu0 0.0
      %5914 = vmatpush1.msra.mxu0 0.0
      %5915 = vmatprep.subr.mxu0 0.0
      %5916 = vmatpush1.msra.mxu0 0.0
      %5917 = vmatprep.subr.mxu0 0.0
      %5918 = vmatpush1.msra.mxu0 0.0
      %5919 = vmatprep.subr.mxu0 0.0
      %5920 = vmatpush1.msra.mxu0 0.0
      %5921 = vmatprep.subr.mxu0 0.0
      %5922 = vmatpush1.msra.mxu0 0.0
      %5923 = vmatprep.subr.mxu0 0.0
      %5924 = vmatpush1.msra.mxu0 0.0
      %5925 = vmatprep.subr.mxu0 0.0
      %5926 = vmatpush1.msra.mxu0 0.0
      %5927 = vmatprep.subr.mxu0 0.0
      %5928 = vmatpush1.msra.mxu0 0.0
      %5929 = vmatprep.subr.mxu0 0.0
      %5930 = vmatpush1.msra.mxu0 0.0
      %5931 = vmatprep.subr.mxu0 0.0
      %5932 = vmatpush1.msra.mxu0 0.0
      %5933 = vmatprep.subr.mxu0 0.0
      %5934 = vmatpush1.msra.mxu0 0.0
      %5935 = vmatprep.subr.mxu0 0.0
      %5936 = vmatpush1.msra.mxu0 0.0
      %5937 = vmatprep.subr.mxu0 0.0
      %5938 = vmatpush1.msra.mxu0 0.0
      %5939 = vmatprep.subr.mxu0 0.0
      %5940 = vmatpush1.msra.mxu0 0.0
      %5941 = vmatprep.subr.mxu0 0.0
      %5942 = vmatpush1.msra.mxu0 0.0
      %5943 = vmatprep.mubr.f32.mxu0 0.0
      %5944 = vmatmul.mubr.f32.gmra.mrb[0].mxu0 %v5874
      %v5945 = vpop.f32.mrb[0].mxu0
      %v5946 = vadd.f32 %v5871, %v5945
      %v5947 = vpop.f32.mrb[0].mxu0
      %5948 = vmatprep.mubr.f32.mxu0 0.0
      %5949 = vmatmul.mubr.f32.gmra.mrb[0].mxu0 %v5877
      %v5950 = vpop.f32.mrb[0].mxu0
      %v5951 = vadd.f32 %v5871, %v5950
      %v5952 = vpop.f32.mrb[0].mxu0
      %5953 = vdwg.mxu0
      %vm5954 = vcmp.gt.f32.partialorder %v5946, 0.0
      %vm5955 = vcmp.gt.f32.partialorder %v5951, 0.0
      %v5956 = vmin.f32 %v5946, 0.0
      %v5957 = vmin.f32 %v5951, 0.0
      %v5958 = vmul.f32 %v5956, 1.442695
      %v5959 = vpow.pop %v5958
      %v5960 = vmul.f32 %v5957, 1.442695
      %v5961 = vpow.pop %v5960
      %v5962 = vsub.f32 %v5959, 1.0
      %v5963 = vsub.f32 %v5961, 1.0
      %v5964 = vsel %vm5954, %v5946, %v5962
      %v5965 = vsel %vm5955, %v5951, %v5963
      %v5966 = vld [vmem:[%s57] sm:$0xff]
      %v5967 = vld [vmem:[%s57 + $0x8] sm:$0xff]
      %v5968 = vld [vmem:[%s57 + $0x10] sm:$0xff]
      %v5969 = vld [vmem:[%s57 + $0x18] sm:$0xff]
      %v5970 = vld [vmem:[%s59] sm:$0x1]
      %v5972 = vlaneseq
      %v5973 = vshrl.u32 %v5972, 7
      %v5974 = vsub.s32 0, %v5973
      %v5975 = vrot.slane %v5970, %v5974
      %v5978 = vsel %vm2216, %v5964, 0
      %v5981 = vsel %vm2216, %v5965, 0
      %5983 = vmatprep.subr.mxu0 0.0
      %5984 = vmatpush1.msra.mxu0 %v5966
      %5985 = vmatprep.subr.mxu0 0.0
      %5986 = vmatpush1.msra.mxu0 %v5967
      %5987 = vmatprep.subr.mxu0 0.0
      %5988 = vmatpush1.msra.mxu0 %v5968
      %5989 = vmatprep.subr.mxu0 0.0
      %5990 = vmatpush1.msra.mxu0 %v5969
      %5991 = vmatprep.subr.mxu0 0.0
      %5992 = vmatpush1.msra.mxu0 0.0
      %5993 = vmatprep.subr.mxu0 0.0
      %5994 = vmatpush1.msra.mxu0 0.0
      %5995 = vmatprep.subr.mxu0 0.0
      %5996 = vmatpush1.msra.mxu0 0.0
      %5997 = vmatprep.subr.mxu0 0.0
      %5998 = vmatpush1.msra.mxu0 0.0
      %5999 = vmatprep.subr.mxu0 0.0
      %6000 = vmatpush1.msra.mxu0 0.0
      %6001 = vmatprep.subr.mxu0 0.0
      %6002 = vmatpush1.msra.mxu0 0.0
      %6003 = vmatprep.subr.mxu0 0.0
      %6004 = vmatpush1.msra.mxu0 0.0
      %6005 = vmatprep.subr.mxu0 0.0
      %6006 = vmatpush1.msra.mxu0 0.0
      %6007 = vmatprep.subr.mxu0 0.0
      %6008 = vmatpush1.msra.mxu0 0.0
      %6009 = vmatprep.subr.mxu0 0.0
      %6010 = vmatpush1.msra.mxu0 0.0
      %6011 = vmatprep.subr.mxu0 0.0
      %6012 = vmatpush1.msra.mxu0 0.0
      %6013 = vmatprep.subr.mxu0 0.0
      %6014 = vmatpush1.msra.mxu0 0.0
      %6015 = vmatprep.subr.mxu0 0.0
      %6016 = vmatpush1.msra.mxu0 0.0
      %6017 = vmatprep.subr.mxu0 0.0
      %6018 = vmatpush1.msra.mxu0 0.0
      %6019 = vmatprep.subr.mxu0 0.0
      %6020 = vmatpush1.msra.mxu0 0.0
      %6021 = vmatprep.subr.mxu0 0.0
      %6022 = vmatpush1.msra.mxu0 0.0
      %6023 = vmatprep.subr.mxu0 0.0
      %6024 = vmatpush1.msra.mxu0 0.0
      %6025 = vmatprep.subr.mxu0 0.0
      %6026 = vmatpush1.msra.mxu0 0.0
      %6027 = vmatprep.subr.mxu0 0.0
      %6028 = vmatpush1.msra.mxu0 0.0
      %6029 = vmatprep.subr.mxu0 0.0
      %6030 = vmatpush1.msra.mxu0 0.0
      %6031 = vmatprep.subr.mxu0 0.0
      %6032 = vmatpush1.msra.mxu0 0.0
      %6033 = vmatprep.subr.mxu0 0.0
      %6034 = vmatpush1.msra.mxu0 0.0
      %6035 = vmatprep.subr.mxu0 0.0
      %6036 = vmatpush1.msra.mxu0 0.0
      %6037 = vmatprep.subr.mxu0 0.0
      %6038 = vmatpush1.msra.mxu0 0.0
      %6039 = vmatprep.subr.mxu0 0.0
      %6040 = vmatpush1.msra.mxu0 0.0
      %6041 = vmatprep.subr.mxu0 0.0
      %6042 = vmatpush1.msra.mxu0 0.0
      %6043 = vmatprep.subr.mxu0 0.0
      %6044 = vmatpush1.msra.mxu0 0.0
      %6045 = vmatprep.subr.mxu0 0.0
      %6046 = vmatpush1.msra.mxu0 0.0
      %6047 = vmatprep.mubr.f32.mxu0 0.0
      %6048 = vmatmul.mubr.f32.gmra.mrb[0].mxu0 %v5978
      %v6049 = vpop.f32.mrb[0].mxu0
      %v6050 = vadd.f32 %v5975, %v6049
      %v6051 = vpop.f32.mrb[0].mxu0
      %6052 = vmatprep.mubr.f32.mxu0 0.0
      %6053 = vmatmul.mubr.f32.gmra.mrb[0].mxu0 %v5981
      %v6054 = vpop.f32.mrb[0].mxu0
      %v6055 = vadd.f32 %v5975, %v6054
      %v6056 = vpop.f32.mrb[0].mxu0
      %6057 = vdwg.mxu0
      %vm6058 = vcmp.gt.f32.partialorder %v6050, 0.0
      %vm6059 = vcmp.gt.f32.partialorder %v6055, 0.0
      %v6060 = vmin.f32 %v6050, 0.0
      %v6061 = vmin.f32 %v6055, 0.0
      %v6062 = vmul.f32 %v6060, 1.442695
      %v6063 = vpow.pop %v6062
      %v6064 = vmul.f32 %v6061, 1.442695
      %v6065 = vpow.pop %v6064
      %v6066 = vsub.f32 %v6063, 1.0
      %v6067 = vsub.f32 %v6065, 1.0
      %v6068 = vsel %vm6058, %v6050, %v6066
      %v6069 = vsel %vm6059, %v6055, %v6067
      %v6070 = vld [vmem:[%s61] sm:$0xff]
      %v6071 = vld [vmem:[%s61 + $0x8] sm:$0xff]
      %v6072 = vld [vmem:[%s61 + $0x10] sm:$0xff]
      %v6073 = vld [vmem:[%s61 + $0x18] sm:$0xff]
      %v6074 = vld [vmem:[%s63] sm:$0x1]
      %v6076 = vlaneseq
      %v6077 = vshrl.u32 %v6076, 7
      %v6078 = vsub.s32 0, %v6077
      %v6079 = vrot.slane %v6074, %v6078
      %v6082 = vsel %vm2216, %v6068, 0
      %v6085 = vsel %vm2216, %v6069, 0
      %6087 = vmatprep.subr.mxu0 0.0
      %6088 = vmatpush1.msra.mxu0 %v6070
      %6089 = vmatprep.subr.mxu0 0.0
      %6090 = vmatpush1.msra.mxu0 %v6071
      %6091 = vmatprep.subr.mxu0 0.0
      %6092 = vmatpush1.msra.mxu0 %v6072
      %6093 = vmatprep.subr.mxu0 0.0
      %6094 = vmatpush1.msra.mxu0 %v6073
      %6095 = vmatprep.subr.mxu0 0.0
      %6096 = vmatpush1.msra.mxu0 0.0
      %6097 = vmatprep.subr.mxu0 0.0
      %6098 = vmatpush1.msra.mxu0 0.0
      %6099 = vmatprep.subr.mxu0 0.0
      %6100 = vmatpush1.msra.mxu0 0.0
      %6101 = vmatprep.subr.mxu0 0.0
      %6102 = vmatpush1.msra.mxu0 0.0
      %6103 = vmatprep.subr.mxu0 0.0
      %6104 = vmatpush1.msra.mxu0 0.0
      %6105 = vmatprep.subr.mxu0 0.0
      %6106 = vmatpush1.msra.mxu0 0.0
      %6107 = vmatprep.subr.mxu0 0.0
      %6108 = vmatpush1.msra.mxu0 0.0
      %6109 = vmatprep.subr.mxu0 0.0
      %6110 = vmatpush1.msra.mxu0 0.0
      %6111 = vmatprep.subr.mxu0 0.0
      %6112 = vmatpush1.msra.mxu0 0.0
      %6113 = vmatprep.subr.mxu0 0.0
      %6114 = vmatpush1.msra.mxu0 0.0
      %6115 = vmatprep.subr.mxu0 0.0
      %6116 = vmatpush1.msra.mxu0 0.0
      %6117 = vmatprep.subr.mxu0 0.0
      %6118 = vmatpush1.msra.mxu0 0.0
      %6119 = vmatprep.subr.mxu0 0.0
      %6120 = vmatpush1.msra.mxu0 0.0
      %6121 = vmatprep.subr.mxu0 0.0
      %6122 = vmatpush1.msra.mxu0 0.0
      %6123 = vmatprep.subr.mxu0 0.0
      %6124 = vmatpush1.msra.mxu0 0.0
      %6125 = vmatprep.subr.mxu0 0.0
      %6126 = vmatpush1.msra.mxu0 0.0
      %6127 = vmatprep.subr.mxu0 0.0
      %6128 = vmatpush1.msra.mxu0 0.0
      %6129 = vmatprep.subr.mxu0 0.0
      %6130 = vmatpush1.msra.mxu0 0.0
      %6131 = vmatprep.subr.mxu0 0.0
      %6132 = vmatpush1.msra.mxu0 0.0
      %6133 = vmatprep.subr.mxu0 0.0
      %6134 = vmatpush1.msra.mxu0 0.0
      %6135 = vmatprep.subr.mxu0 0.0
      %6136 = vmatpush1.msra.mxu0 0.0
      %6137 = vmatprep.subr.mxu0 0.0
      %6138 = vmatpush1.msra.mxu0 0.0
      %6139 = vmatprep.subr.mxu0 0.0
      %6140 = vmatpush1.msra.mxu0 0.0
      %6141 = vmatprep.subr.mxu0 0.0
      %6142 = vmatpush1.msra.mxu0 0.0
      %6143 = vmatprep.subr.mxu0 0.0
      %6144 = vmatpush1.msra.mxu0 0.0
      %6145 = vmatprep.subr.mxu0 0.0
      %6146 = vmatpush1.msra.mxu0 0.0
      %6147 = vmatprep.subr.mxu0 0.0
      %6148 = vmatpush1.msra.mxu0 0.0
      %6149 = vmatprep.subr.mxu0 0.0
      %6150 = vmatpush1.msra.mxu0 0.0
      %6151 = vmatprep.mubr.f32.mxu0 0.0
      %6152 = vmatmul.mubr.f32.gmra.mrb[0].mxu0 %v6082
      %v6153 = vpop.f32.mrb[0].mxu0
      %v6154 = vadd.f32 %v6079, %v6153
      %v6155 = vpop.f32.mrb[0].mxu0
      %6156 = vmatprep.mubr.f32.mxu0 0.0
      %6157 = vmatmul.mubr.f32.gmra.mrb[0].mxu0 %v6085
      %v6158 = vpop.f32.mrb[0].mxu0
      %v6159 = vadd.f32 %v6079, %v6158
      %v6160 = vpop.f32.mrb[0].mxu0
      %6161 = vdwg.mxu0
      %6162 = vst [vmem:[%s988] sm:$0xff] %v6154
      %6163 = vst [vmem:[%s988 + $0x8] sm:$0xf] %v6159
      %p6164 = scmp.lt.s32.totalorder %s78, 1
      %s6165 = scalar_select %p6164, %s78, 1
      %s6166 = smul.addr %s6165, 2
      %s6167 = smul.addr %s6166, 8
      %s6168 = scalar_lea.vmem %s65, %s6167
      // Predicated region
      $region149: #{cnn_encoder_forward.1} parent=147 // pred_check
        %p6169 = pneg %p773
      $region150: #{cnn_encoder_forward.1} parent=147 // pred_check_branch
        %6171 = sbr.rel (%p6169) target = $region152
      $region151: #{cnn_encoder_forward.1} parent=147 // pred_region
        _
      $region152: #{cnn_encoder_forward.1} parent=147 // pred_fallthru
        _
    $region148: #{cnn_encoder_forward.1} parent=5 // pred_fallthru
      _
    %p6172 = scmp.le.s32.totalorder 2, %s73
    // Predicated region
    $region153: #{cnn_encoder_forward.1} parent=5 // pred_check
      %p6173 = pneg %p6172
    $region154: #{cnn_encoder_forward.1} parent=5 // pred_check_branch
      %6175 = sbr.rel (%p6173) target = $region156
    $region155: #{cnn_encoder_forward.1} parent=5 // pred_region
      %s6176 = ssub.s32 %s73, 2
      // Predicated region
      $region157: #{cnn_encoder_forward.1} parent=155 // pred_check
        %p6177 = pneg %p779
      $region158: #{cnn_encoder_forward.1} parent=155 // pred_check_branch
        %6179 = sbr.rel (%p6177) target = $region160
      $region159: #{cnn_encoder_forward.1} parent=155 // pred_region
        %p6180 = scmp.lt.s32.totalorder %s79, 1
        %s6181 = scalar_select %p6180, %s79, 1
        %s6182 = smul.addr %s6181, 2
        %s6183 = smul.addr %s6182, 8
        %s6184 = scalar_lea.vmem %s65, %s6183
      $region160: #{cnn_encoder_forward.1} parent=155 // pred_fallthru
        _
    $region156: #{cnn_encoder_forward.1} parent=5 // pred_fallthru
      _
  $region6: #{cnn_encoder_forward.1} parent=0 // loop_footer
    %s77 = sadd.s32 1, %s73
  $region7: #{cnn_encoder_forward.1} parent=0 // loop_footer_branch
    %72 = sbr.rel target = $region3
  $region8: #{cnn_encoder_forward.1} parent=0 // loop_exit
    _

</llo_original>
